<compile_context>
chip_gen: v6e
topology: v6e:2x2x1
jax: 0.10.0
libtpu: 0.0.40
codegen_flags: <defaults>
</compile_context>

<pallas_src>
import numpy as np
import jax
import jax.numpy as jnp
from jax.experimental import pallas as pl
from jax.experimental.pallas import tpu as pltpu

# MXU operand dtype.  jnp.float32 (default) keeps the allclose check tight on
# every generation; jnp.bfloat16 is the recommended setting on v6e/v7x (and is
# MXU-only: all elementwise math below stays f32, so it is also v5e-safe).
WEIGHT_DTYPE = jnp.float32

_CONV_TILE_CAP = 32    # samples per conv-stack block (32-64 per perf review)
_HEAD_TILE_CAP = 256   # samples per head block
_VMEM_LIMIT = 32 * 1024 * 1024


# ----------------------------- Pallas kernels ------------------------------ #

def _conv_stack_kernel(p1_ref, w1_ref, b1_ref, w2_ref, b2_ref, o_ref,
                       h1_scr, h1s_scr):
    """conv1 (im2col matmul) + ReLU + conv2 (single K=64 matmul) + ReLU.

    p1_ref  : (R, 243)   R = TB*49 conv1 im2col patches, rows ordered (b,oy,ox)
    w1_ref  : (243, 16), b1_ref : (1, 16)
    w2_ref  : (64, 32)   conv2 weight with the four kernel offsets stacked on K
    b2_ref  : (1, 32)
    o_ref   : (R, 32)    conv2 output on the 7x7 grid; rows with oy==6 / ox==6
                         are junk-but-finite and are nulled downstream by the
                         zero rows folded into W_lin1.
    h1_scr  : (R, 16)    conv1 activation, kept in VMEM (never HBM).
    h1s_scr : (R-8, 64)  the four row-shifted copies of h1, lanes = 4x16.
    """
    R = o_ref.shape[0]
    Rv = R - 8  # rows for which all four shifted reads stay inside the block

    # conv1: relu(p1 @ W1 + b1), accumulated in f32, stored in VMEM scratch.
    h1_scr[...] = jnp.maximum(
        jnp.dot(p1_ref[...], w1_ref[...], preferred_element_type=jnp.float32)
        + b1_ref[...],
        0.0,
    ).astype(h1_scr.dtype)

    # conv2 (k=2, stride=1): output row r on the 7x7 grid needs conv1 rows
    # r + {0, 1, 7, 8}.  Stack the four shifts along K and run ONE matmul
    # (4x fewer MXU weight pushes than four K=16 matmuls).
    h1s_scr[:, 0:16] = h1_scr[0:Rv, :]
    h1s_scr[:, 16:32] = h1_scr[1:Rv + 1, :]
    h1s_scr[:, 32:48] = h1_scr[7:Rv + 7, :]
    h1s_scr[:, 48:64] = h1_scr[8:Rv + 8, :]
    h2 = jnp.maximum(
        jnp.dot(h1s_scr[...], w2_ref[...], preferred_element_type=jnp.float32)
        + b2_ref[...],
        0.0,
    )
    o_ref[0:Rv, :] = h2.astype(o_ref.dtype)
    # Keep the 8 tail rows finite (they belong to dropped 7x7 positions of the
    # last sample in the block and meet zero weight rows in the head).
    o_ref[Rv:R, :] = jnp.zeros((8, o_ref.shape[1]), o_ref.dtype)


def _head_kernel(h_ref, a_ref, w3_ref, w4_ref, b34_ref, w5_ref, b5_ref, o_ref):
    """Merged head: relu(flat @ W3f + a @ W4 + b3 + b4), then the critic.

    h_ref : (TB, 1568)  conv output flattened per sample (49 positions x 32 ch);
                        invalid 7x7 positions hit zero rows of w3_ref.
    a_ref : (TB, 640)   action features zero-padded to a lane-aligned K.
    The 256->1 critic projection is a VPU multiply + lane-axis sum (an N=1 MXU
    matmul would waste the result columns).
    """
    acc = jnp.dot(h_ref[...], w3_ref[...], preferred_element_type=jnp.float32)
    acc = acc + jnp.dot(a_ref[...], w4_ref[...],
                        preferred_element_type=jnp.float32)
    c = jnp.maximum(acc + b34_ref[...], 0.0)
    o_ref[...] = jnp.sum(c * w5_ref[...], axis=-1, keepdims=True) + b5_ref[...]


# ------------------------------ call wrappers ------------------------------ #

def _batch_tile(b, cap):
    """Largest multiple-of-8 divisor of b that is <= cap, preferring a tile
    that leaves >= 2 grid steps (v7x has 2 TensorCores; a 1-step grid idles
    one of them).  `b` is always a multiple of 8 (the wrapper pads)."""
    def largest_div(c):
        t = 8
        for cand in range(8, min(b, c) + 1, 8):
            if b % cand == 0:
                t = cand
        return t
    t = largest_div(cap)
    if t == b and b >= 16:     # 1-step grid although the batch could split
        t = largest_div(b // 2)
    return t


def conv_stack(p1, w1, b1, w2s, b2, batch):
    rows = p1.shape[0]                      # batch * 49
    tb = _batch_tile(batch, _CONV_TILE_CAP)
    blk = tb * 49
    return pl.pallas_call(
        _conv_stack_kernel,
        out_shape=jax.ShapeDtypeStruct((rows, 32), p1.dtype),
        grid=(batch // tb,),
        in_specs=[
            pl.BlockSpec((blk, p1.shape[1]), lambda i: (i, 0)),
            pl.BlockSpec(w1.shape, lambda i: (0, 0)),
            pl.BlockSpec(b1.shape, lambda i: (0, 0)),
            pl.BlockSpec(w2s.shape, lambda i: (0, 0)),
            pl.BlockSpec(b2.shape, lambda i: (0, 0)),
        ],
        out_specs=pl.BlockSpec((blk, 32), lambda i: (i, 0)),
        scratch_shapes=[pltpu.VMEM((blk, 16), p1.dtype),
                        pltpu.VMEM((blk - 8, 64), p1.dtype)],
        compiler_params=pltpu.CompilerParams(
            dimension_semantics=("parallel",),
            vmem_limit_bytes=_VMEM_LIMIT),
    )(p1, w1, b1, w2s, b2)


def head(hflat, a_pad, w3f, w4, b34, w5, b5):
    Bp = hflat.shape[0]
    tb = _batch_tile(Bp, _HEAD_TILE_CAP)
    return pl.pallas_call(
        _head_kernel,
        out_shape=jax.ShapeDtypeStruct((Bp, 1), jnp.float32),
        grid=(Bp // tb,),
        in_specs=[
            pl.BlockSpec((tb, hflat.shape[1]), lambda i: (i, 0)),
            pl.BlockSpec((tb, a_pad.shape[1]), lambda i: (i, 0)),
            pl.BlockSpec(w3f.shape, lambda i: (0, 0)),
            pl.BlockSpec(w4.shape, lambda i: (0, 0)),
            pl.BlockSpec(b34.shape, lambda i: (0, 0)),
            pl.BlockSpec(w5.shape, lambda i: (0, 0)),
            pl.BlockSpec(b5.shape, lambda i: (0, 0)),
        ],
        out_specs=pl.BlockSpec((tb, 1), lambda i: (i, 0)),
        compiler_params=pltpu.CompilerParams(
            dimension_semantics=("parallel",),
            vmem_limit_bytes=_VMEM_LIMIT),
    )(hflat, a_pad, w3f, w4, b34, w5, b5)


# ------------------------------ JAX-side glue ------------------------------- #

def im2col_conv1(x):
    """x: (B,16,16,27) NHWC -> (B*49, 243) patches for k=3, stride=2.

    Patch column order is (kh, kw, cin), matching the weight prep below.
    """
    B = x.shape[0]
    cols = []
    for i in range(3):
        for j in range(3):
            cols.append(x[:, i:i + 14:2, j:j + 14:2, :])       # (B,7,7,27)
    p = jnp.stack(cols, axis=3)                                # (B,7,7,9,27)
    return p.reshape(B * 49, 9 * 27)


def init_params(key):
    """Deterministic synthetic parameters in torch layouts (O,I,KH,KW)/(out,in)."""
    ks = jax.random.split(key, 5)

    def w(k, shape, std):
        fan_in = int(np.prod(shape[1:]))
        # TODO(synk): torch uses orthogonal_ init; deterministic scaled-normal here.
        return (std / np.sqrt(fan_in)) * jax.random.normal(k, shape, jnp.float32)

    s2 = float(np.sqrt(2.0))
    return dict(
        w_conv1=w(ks[0], (16, 27, 3, 3), s2),
        b_conv1=jnp.zeros((16,), jnp.float32),
        w_conv2=w(ks[1], (32, 16, 2, 2), s2),
        b_conv2=jnp.zeros((32,), jnp.float32),
        w_lin1=w(ks[2], (256, 32 * 6 * 6), s2),
        b_lin1=jnp.zeros((256,), jnp.float32),
        w_lin2=w(ks[3], (256, 541), s2),
        b_lin2=jnp.zeros((256,), jnp.float32),
        w_critic=w(ks[4], (1, 256), 1.0),
        b_critic=jnp.zeros((1,), jnp.float32),
    )


def prepare_params(p):
    """One-time (init) conversion of torch-layout params to kernel layout."""
    wd = WEIGHT_DTYPE
    # conv1: (O,I,KH,KW) -> (KH*KW*I, O) matching the im2col patch column order.
    w1 = p["w_conv1"].transpose(2, 3, 1, 0).reshape(243, 16)
    # conv2: the four kernel offsets (0,0),(0,1),(1,0),(1,1) stacked along K so
    # the kernel runs ONE (R,64)@(64,32) matmul instead of four K=16 matmuls.
    w2s = p["w_conv2"].transpose(2, 3, 1, 0).reshape(64, 32)
    # lin1: fold (a) the NCHW-flatten permutation and (b) the 7x7 -> 6x6 valid-
    # position selection into the weight (zero rows for oy==6 / ox==6), so the
    # head consumes the conv kernel's (B, 49*32) output with no slice / reshape
    # / concat glue in between.
    w3 = p["w_lin1"].reshape(256, 32, 6, 6).transpose(2, 3, 1, 0)  # (6,6,32,256)
    w3f = jnp.zeros((7, 7, 32, 256), jnp.float32).at[:6, :6].set(w3)
    w3f = w3f.reshape(49 * 32, 256)                                # (1568, 256)
    # lin2 transposed and K-padded 541 -> 640 (multiple of 128), zero rows.
    w4 = jnp.zeros((640, 256), jnp.float32).at[:541].set(p["w_lin2"].T)
    return dict(
        w1=w1.astype(wd), b1=p["b_conv1"].reshape(1, 16),
        w2s=w2s.astype(wd), b2=p["b_conv2"].reshape(1, 32),
        w3f=w3f.astype(wd), w4=w4.astype(wd),
        b34=(p["b_lin1"] + p["b_lin2"]).reshape(1, 256),
        w5=p["w_critic"].reshape(1, 256),
        b5=p["b_critic"].reshape(1, 1),
    )


@jax.jit
def critic_net_forward(kp, x, a):
    B = x.shape[0]
    Bp = -(-B // 8) * 8                      # pad batch to a multiple of 8
    if Bp != B:
        x = jnp.pad(x, ((0, Bp - B), (0, 0), (0, 0), (0, 0)))
        a = jnp.pad(a, ((0, Bp - B), (0, 0)))
    # conv1 im2col on the raw input (cheap XLA slicing), emitted directly in the
    # MXU operand dtype; the conv stack runs as one fused Pallas kernel with the
    # conv1 activation staying in VMEM.
    p1 = im2col_conv1(x).astype(WEIGHT_DTYPE)                   # (Bp*49, 243)
    h2 = conv_stack(p1, kp["w1"], kp["b1"], kp["w2s"], kp["b2"], Bp)  # (Bp*49,32)
    # Free contiguous reshape: per-sample 49 positions x 32 channels along lanes.
    hflat = h2.reshape(Bp, 49 * 32)                             # (Bp, 1568)
    a_pad = jnp.pad(a, ((0, 0), (0, 640 - a.shape[1]))).astype(WEIGHT_DTYPE)
    out = head(hflat, a_pad, kp["w3f"], kp["w4"], kp["b34"], kp["w5"], kp["b5"])
    return out[:B]


def reference_forward(params, x, a):
    """Pure-JAX reference mirroring the PyTorch graph (for sanity check)."""
    xn = jnp.transpose(x, (0, 3, 1, 2))
    h = jax.lax.conv_general_dilated(
        xn, params["w_conv1"], (2, 2), "VALID",
        dimension_numbers=("NCHW", "OIHW", "NCHW"))
    h = jax.nn.relu(h + params["b_conv1"][None, :, None, None])
    h = jax.lax.conv_general_dilated(
        h, params["w_conv2"], (1, 1), "VALID",
        dimension_numbers=("NCHW", "OIHW", "NCHW"))
    h = jax.nn.relu(h + params["b_conv2"][None, :, None, None])
    flat = h.reshape(h.shape[0], -1)
    xf = flat @ params["w_lin1"].T + params["b_lin1"]
    y = a @ params["w_lin2"].T + params["b_lin2"]
    c = jax.nn.relu(xf + y)
    return c @ params["w_critic"].T + params["b_critic"]


if __name__ == "__main__":
    key = jax.random.PRNGKey(0)
    kpar, kx, ka = jax.random.split(key, 3)
    params = init_params(kpar)
    kparams = prepare_params(params)     # one-time weight layout prep

    B = 2
    x = jax.random.normal(kx, (B, 16, 16, 27), jnp.float32)  # NHWC, as torch gets
    a = jax.random.normal(ka, (B, 541), jnp.float32)

    out = jax.block_until_ready(critic_net_forward(kparams, x, a))
    assert out.shape == (B, 1) and out.dtype == jnp.float32

    ref = jax.block_until_ready(reference_forward(params, x, a))
    tol = 1e-3 if WEIGHT_DTYPE == jnp.float32 else 5e-2
    assert np.allclose(np.asarray(out), np.asarray(ref), rtol=tol, atol=tol)

    print("KERNEL_OK")
</pallas_src>

<mosaic_0001>
module attributes {stable_mosaic.version = 11 : i64} {
  func.func @_conv_stack_kernel(%arg0: i32, %arg1: memref<392x243xf32, #tpu.memory_space<vmem>>, %arg2: memref<243x16xf32, #tpu.memory_space<vmem>>, %arg3: memref<1x16xf32, #tpu.memory_space<vmem>>, %arg4: memref<64x32xf32, #tpu.memory_space<vmem>>, %arg5: memref<1x32xf32, #tpu.memory_space<vmem>>, %arg6: memref<392x32xf32, #tpu.memory_space<vmem>>, %arg7: memref<392x16xf32, #tpu.memory_space<vmem>>, %arg8: memref<384x64xf32, #tpu.memory_space<vmem>>) attributes {dimension_semantics = [#tpu.dimension_semantics<parallel>], iteration_bounds = array<i64: 1>, scalar_prefetch = 0 : i64, scratch_operands = 2 : i64, tpu.core_type = #tpu.core_type<tc>, window_params = [{transform_indices = @transform_0, window_bounds = array<i64: 392, 243>}, {pipeline_mode = #tpu.pipeline_mode<synchronous>, transform_indices = @transform_1, window_bounds = array<i64: 243, 16>}, {pipeline_mode = #tpu.pipeline_mode<synchronous>, transform_indices = @transform_2, window_bounds = array<i64: 1, 16>}, {pipeline_mode = #tpu.pipeline_mode<synchronous>, transform_indices = @transform_3, window_bounds = array<i64: 64, 32>}, {pipeline_mode = #tpu.pipeline_mode<synchronous>, transform_indices = @transform_4, window_bounds = array<i64: 1, 32>}, {transform_indices = @transform_5, window_bounds = array<i64: 392, 32>}]} {
    %c0 = arith.constant 0 : index
    %c0_0 = arith.constant 0 : index
    %0 = vector.load %arg1[%c0, %c0_0] : memref<392x243xf32, #tpu.memory_space<vmem>>, vector<392x243xf32>
    %c0_1 = arith.constant 0 : index
    %c0_2 = arith.constant 0 : index
    %1 = vector.load %arg2[%c0_1, %c0_2] : memref<243x16xf32, #tpu.memory_space<vmem>>, vector<243x16xf32>
    %cst = arith.constant dense<0.000000e+00> : vector<392x16xf32>
    %2 = tpu.matmul %0, %1, %cst {dimension_numbers = #tpu.dot_dimension_numbers<[1], [0], [0], [1], [0, 0, 1, 1], [], []>} : vector<392x243xf32>, vector<243x16xf32>, vector<392x16xf32> -> vector<392x16xf32>
    %c0_3 = arith.constant 0 : index
    %c0_4 = arith.constant 0 : index
    %3 = vector.load %arg3[%c0_3, %c0_4] : memref<1x16xf32, #tpu.memory_space<vmem>>, vector<1x16xf32>
    %4 = vector.broadcast %3 : vector<1x16xf32> to vector<392x16xf32>
    %5 = arith.addf %2, %4 : vector<392x16xf32>
    %cst_5 = arith.constant 0.000000e+00 : f32
    %6 = vector.broadcast %cst_5 : f32 to vector<392x16xf32>
    %7 = arith.maximumf %5, %6 : vector<392x16xf32>
    %c0_6 = arith.constant 0 : index
    %c0_7 = arith.constant 0 : index
    %8 = vector.load %arg7[%c0_6, %c0_7] : memref<392x16xf32, #tpu.memory_space<vmem>>, vector<392x16xf32>
    tpu.vector_store %arg7[%c0_6, %c0_7], %7 {strides = array<i32>} : memref<392x16xf32, #tpu.memory_space<vmem>>, vector<392x16xf32>,
    %c0_8 = arith.constant 0 : index
    %c0_9 = arith.constant 0 : index
    %9 = vector.load %arg7[%c0_8, %c0_9] : memref<392x16xf32, #tpu.memory_space<vmem>>, vector<384x16xf32>
    %c0_10 = arith.constant 0 : index
    %c0_11 = arith.constant 0 : index
    %10 = vector.load %arg8[%c0_10, %c0_11] : memref<384x64xf32, #tpu.memory_space<vmem>>, vector<384x16xf32>
    tpu.vector_store %arg8[%c0_10, %c0_11], %9 {strides = array<i32>} : memref<384x64xf32, #tpu.memory_space<vmem>>, vector<384x16xf32>,
    %c1 = arith.constant 1 : index
    %c0_12 = arith.constant 0 : index
    %11 = vector.load %arg7[%c1, %c0_12] : memref<392x16xf32, #tpu.memory_space<vmem>>, vector<384x16xf32>
    %c0_13 = arith.constant 0 : index
    %c16 = arith.constant 16 : index
    %12 = vector.load %arg8[%c0_13, %c16] : memref<384x64xf32, #tpu.memory_space<vmem>>, vector<384x16xf32>
    tpu.vector_store %arg8[%c0_13, %c16], %11 {strides = array<i32>} : memref<384x64xf32, #tpu.memory_space<vmem>>, vector<384x16xf32>,
    %c7 = arith.constant 7 : index
    %c0_14 = arith.constant 0 : index
    %13 = vector.load %arg7[%c7, %c0_14] : memref<392x16xf32, #tpu.memory_space<vmem>>, vector<384x16xf32>
    %c0_15 = arith.constant 0 : index
    %c32 = arith.constant 32 : index
    %14 = vector.load %arg8[%c0_15, %c32] : memref<384x64xf32, #tpu.memory_space<vmem>>, vector<384x16xf32>
    tpu.vector_store %arg8[%c0_15, %c32], %13 {strides = array<i32>} : memref<384x64xf32, #tpu.memory_space<vmem>>, vector<384x16xf32>,
    %c8 = arith.constant 8 : index
    %c0_16 = arith.constant 0 : index
    %15 = vector.load %arg7[%c8, %c0_16] : memref<392x16xf32, #tpu.memory_space<vmem>>, vector<384x16xf32>
    %c0_17 = arith.constant 0 : index
    %c48 = arith.constant 48 : index
    %16 = vector.load %arg8[%c0_17, %c48] : memref<384x64xf32, #tpu.memory_space<vmem>>, vector<384x16xf32>
    tpu.vector_store %arg8[%c0_17, %c48], %15 {strides = array<i32>} : memref<384x64xf32, #tpu.memory_space<vmem>>, vector<384x16xf32>,
    %c0_18 = arith.constant 0 : index
    %c0_19 = arith.constant 0 : index
    %17 = vector.load %arg8[%c0_18, %c0_19] : memref<384x64xf32, #tpu.memory_space<vmem>>, vector<384x64xf32>
    %c0_20 = arith.constant 0 : index
    %c0_21 = arith.constant 0 : index
    %18 = vector.load %arg4[%c0_20, %c0_21] : memref<64x32xf32, #tpu.memory_space<vmem>>, vector<64x32xf32>
    %cst_22 = arith.constant dense<0.000000e+00> : vector<384x32xf32>
    %19 = tpu.matmul %17, %18, %cst_22 {dimension_numbers = #tpu.dot_dimension_numbers<[1], [0], [0], [1], [0, 0, 1, 1], [], []>} : vector<384x64xf32>, vector<64x32xf32>, vector<384x32xf32> -> vector<384x32xf32>
    %c0_23 = arith.constant 0 : index
    %c0_24 = arith.constant 0 : index
    %20 = vector.load %arg5[%c0_23, %c0_24] : memref<1x32xf32, #tpu.memory_space<vmem>>, vector<1x32xf32>
    %21 = vector.broadcast %20 : vector<1x32xf32> to vector<384x32xf32>
    %22 = arith.addf %19, %21 : vector<384x32xf32>
    %cst_25 = arith.constant 0.000000e+00 : f32
    %23 = vector.broadcast %cst_25 : f32 to vector<384x32xf32>
    %24 = arith.maximumf %22, %23 : vector<384x32xf32>
    %c0_26 = arith.constant 0 : index
    %c0_27 = arith.constant 0 : index
    %25 = vector.load %arg6[%c0_26, %c0_27] : memref<392x32xf32, #tpu.memory_space<vmem>>, vector<384x32xf32>
    tpu.vector_store %arg6[%c0_26, %c0_27], %24 {strides = array<i32>} : memref<392x32xf32, #tpu.memory_space<vmem>>, vector<384x32xf32>,
    %cst_28 = arith.constant 0.000000e+00 : f32
    %26 = vector.broadcast %cst_28 : f32 to vector<8x32xf32>
    %c384 = arith.constant 384 : index
    %c0_29 = arith.constant 0 : index
    %27 = vector.load %arg6[%c384, %c0_29] : memref<392x32xf32, #tpu.memory_space<vmem>>, vector<8x32xf32>
    tpu.vector_store %arg6[%c384, %c0_29], %26 {strides = array<i32>} : memref<392x32xf32, #tpu.memory_space<vmem>>, vector<8x32xf32>,
    return
  }
  func.func @transform_0(%arg0: i32) -> (i32, i32) {
    %c0_i32 = arith.constant 0 : i32
    %c0_i32_0 = arith.constant 0 : i32
    return %arg0, %c0_i32 : i32, i32
  }
  func.func @transform_1(%arg0: i32) -> (i32, i32) {
    %c0_i32 = arith.constant 0 : i32
    %c0_i32_0 = arith.constant 0 : i32
    %c0_i32_1 = arith.constant 0 : i32
    return %c0_i32, %c0_i32_0 : i32, i32
  }
  func.func @transform_2(%arg0: i32) -> (i32, i32) {
    %c0_i32 = arith.constant 0 : i32
    %c0_i32_0 = arith.constant 0 : i32
    %c0_i32_1 = arith.constant 0 : i32
    return %c0_i32, %c0_i32_0 : i32, i32
  }
  func.func @transform_3(%arg0: i32) -> (i32, i32) {
    %c0_i32 = arith.constant 0 : i32
    %c0_i32_0 = arith.constant 0 : i32
    %c0_i32_1 = arith.constant 0 : i32
    return %c0_i32, %c0_i32_0 : i32, i32
  }
  func.func @transform_4(%arg0: i32) -> (i32, i32) {
    %c0_i32 = arith.constant 0 : i32
    %c0_i32_0 = arith.constant 0 : i32
    %c0_i32_1 = arith.constant 0 : i32
    return %c0_i32, %c0_i32_0 : i32, i32
  }
  func.func @transform_5(%arg0: i32) -> (i32, i32) {
    %c0_i32 = arith.constant 0 : i32
    %c0_i32_0 = arith.constant 0 : i32
    return %arg0, %c0_i32 : i32, i32
  }
}

module attributes {stable_mosaic.version = 11 : i64} {
  func.func @_head_kernel(%arg0: i32, %arg1: memref<8x1568xf32, #tpu.memory_space<vmem>>, %arg2: memref<8x640xf32, #tpu.memory_space<vmem>>, %arg3: memref<1568x256xf32, #tpu.memory_space<vmem>>, %arg4: memref<640x256xf32, #tpu.memory_space<vmem>>, %arg5: memref<1x256xf32, #tpu.memory_space<vmem>>, %arg6: memref<1x256xf32, #tpu.memory_space<vmem>>, %arg7: memref<1x1xf32, #tpu.memory_space<vmem>>, %arg8: memref<8x1xf32, #tpu.memory_space<vmem>>) attributes {dimension_semantics = [#tpu.dimension_semantics<parallel>], iteration_bounds = array<i64: 1>, scalar_prefetch = 0 : i64, scratch_operands = 0 : i64, tpu.core_type = #tpu.core_type<tc>, window_params = [{transform_indices = @transform_0, window_bounds = array<i64: 8, 1568>}, {transform_indices = @transform_1, window_bounds = array<i64: 8, 640>}, {pipeline_mode = #tpu.pipeline_mode<synchronous>, transform_indices = @transform_2, window_bounds = array<i64: 1568, 256>}, {pipeline_mode = #tpu.pipeline_mode<synchronous>, transform_indices = @transform_3, window_bounds = array<i64: 640, 256>}, {pipeline_mode = #tpu.pipeline_mode<synchronous>, transform_indices = @transform_4, window_bounds = array<i64: 1, 256>}, {pipeline_mode = #tpu.pipeline_mode<synchronous>, transform_indices = @transform_5, window_bounds = array<i64: 1, 256>}, {pipeline_mode = #tpu.pipeline_mode<synchronous>, transform_indices = @transform_6, window_bounds = array<i64: 1, 1>}, {transform_indices = @transform_7, window_bounds = array<i64: 8, 1>}]} {
    %c0 = arith.constant 0 : index
    %c0_0 = arith.constant 0 : index
    %0 = vector.load %arg1[%c0, %c0_0] : memref<8x1568xf32, #tpu.memory_space<vmem>>, vector<8x1568xf32>
    %c0_1 = arith.constant 0 : index
    %c0_2 = arith.constant 0 : index
    %1 = vector.load %arg3[%c0_1, %c0_2] : memref<1568x256xf32, #tpu.memory_space<vmem>>, vector<1568x256xf32>
    %cst = arith.constant dense<0.000000e+00> : vector<8x256xf32>
    %2 = tpu.matmul %0, %1, %cst {dimension_numbers = #tpu.dot_dimension_numbers<[1], [0], [0], [1], [0, 0, 1, 1], [], []>} : vector<8x1568xf32>, vector<1568x256xf32>, vector<8x256xf32> -> vector<8x256xf32>
    %c0_3 = arith.constant 0 : index
    %c0_4 = arith.constant 0 : index
    %3 = vector.load %arg2[%c0_3, %c0_4] : memref<8x640xf32, #tpu.memory_space<vmem>>, vector<8x640xf32>
    %c0_5 = arith.constant 0 : index
    %c0_6 = arith.constant 0 : index
    %4 = vector.load %arg4[%c0_5, %c0_6] : memref<640x256xf32, #tpu.memory_space<vmem>>, vector<640x256xf32>
    %cst_7 = arith.constant dense<0.000000e+00> : vector<8x256xf32>
    %5 = tpu.matmul %3, %4, %cst_7 {dimension_numbers = #tpu.dot_dimension_numbers<[1], [0], [0], [1], [0, 0, 1, 1], [], []>} : vector<8x640xf32>, vector<640x256xf32>, vector<8x256xf32> -> vector<8x256xf32>
    %6 = arith.addf %2, %5 : vector<8x256xf32>
    %c0_8 = arith.constant 0 : index
    %c0_9 = arith.constant 0 : index
    %7 = vector.load %arg5[%c0_8, %c0_9] : memref<1x256xf32, #tpu.memory_space<vmem>>, vector<1x256xf32>
    %8 = vector.broadcast %7 : vector<1x256xf32> to vector<8x256xf32>
    %9 = arith.addf %6, %8 : vector<8x256xf32>
    %cst_10 = arith.constant 0.000000e+00 : f32
    %10 = vector.broadcast %cst_10 : f32 to vector<8x256xf32>
    %11 = arith.maximumf %9, %10 : vector<8x256xf32>
    %c0_11 = arith.constant 0 : index
    %c0_12 = arith.constant 0 : index
    %12 = vector.load %arg6[%c0_11, %c0_12] : memref<1x256xf32, #tpu.memory_space<vmem>>, vector<1x256xf32>
    %13 = vector.broadcast %12 : vector<1x256xf32> to vector<8x256xf32>
    %14 = arith.mulf %11, %13 : vector<8x256xf32>
    %cst_13 = arith.constant dense<0.000000e+00> : vector<8xf32>
    %15 = vector.multi_reduction <add>, %14, %cst_13 [1] : vector<8x256xf32> to vector<8xf32>
    %16 = vector.shape_cast %15 : vector<8xf32> to vector<8x1xf32>
    %c0_14 = arith.constant 0 : index
    %c0_15 = arith.constant 0 : index
    %17 = vector.load %arg7[%c0_14, %c0_15] : memref<1x1xf32, #tpu.memory_space<vmem>>, vector<1x1xf32>
    %18 = vector.broadcast %17 : vector<1x1xf32> to vector<8x1xf32>
    %19 = arith.addf %16, %18 : vector<8x1xf32>
    %c0_16 = arith.constant 0 : index
    %c0_17 = arith.constant 0 : index
    %20 = vector.load %arg8[%c0_16, %c0_17] : memref<8x1xf32, #tpu.memory_space<vmem>>, vector<8x1xf32>
    tpu.vector_store %arg8[%c0_16, %c0_17], %19 {strides = array<i32>} : memref<8x1xf32, #tpu.memory_space<vmem>>, vector<8x1xf32>,
    return
  }
  func.func @transform_0(%arg0: i32) -> (i32, i32) {
    %c0_i32 = arith.constant 0 : i32
    %c0_i32_0 = arith.constant 0 : i32
    return %arg0, %c0_i32 : i32, i32
  }
  func.func @transform_1(%arg0: i32) -> (i32, i32) {
    %c0_i32 = arith.constant 0 : i32
    %c0_i32_0 = arith.constant 0 : i32
    return %arg0, %c0_i32 : i32, i32
  }
  func.func @transform_2(%arg0: i32) -> (i32, i32) {
    %c0_i32 = arith.constant 0 : i32
    %c0_i32_0 = arith.constant 0 : i32
    %c0_i32_1 = arith.constant 0 : i32
    return %c0_i32, %c0_i32_0 : i32, i32
  }
  func.func @transform_3(%arg0: i32) -> (i32, i32) {
    %c0_i32 = arith.constant 0 : i32
    %c0_i32_0 = arith.constant 0 : i32
    %c0_i32_1 = arith.constant 0 : i32
    return %c0_i32, %c0_i32_0 : i32, i32
  }
  func.func @transform_4(%arg0: i32) -> (i32, i32) {
    %c0_i32 = arith.constant 0 : i32
    %c0_i32_0 = arith.constant 0 : i32
    %c0_i32_1 = arith.constant 0 : i32
    return %c0_i32, %c0_i32_0 : i32, i32
  }
  func.func @transform_5(%arg0: i32) -> (i32, i32) {
    %c0_i32 = arith.constant 0 : i32
    %c0_i32_0 = arith.constant 0 : i32
    %c0_i32_1 = arith.constant 0 : i32
    return %c0_i32, %c0_i32_0 : i32, i32
  }
  func.func @transform_6(%arg0: i32) -> (i32, i32) {
    %c0_i32 = arith.constant 0 : i32
    %c0_i32_0 = arith.constant 0 : i32
    %c0_i32_1 = arith.constant 0 : i32
    return %c0_i32, %c0_i32_0 : i32, i32
  }
  func.func @transform_7(%arg0: i32) -> (i32, i32) {
    %c0_i32 = arith.constant 0 : i32
    %c0_i32_0 = arith.constant 0 : i32
    return %arg0, %c0_i32 : i32, i32
  }
}

</mosaic_0001>

<llo_original>
// kernel: critic_net_forward.3
$region0: #{critic_net_forward.3}
  #allocation0 [shape = 'u32[]', space=smem, size = 0x4, offset = 0x4, fixed_abs, tag = 'smem constant byte address 0x4 - core index']
  #allocation1 [shape = 'u32[144,128]{1,0:T(1,128)}', space=vmem, size = 0x12000, scoped, tag = 'internal scratch']
  #allocation2 [shape = 'f32[1,1]{1,0:T(1,128)S(1)}', space=vmem, size = 0x200, scoped, tag = 'scoped memory for critic_net_forward.3']
  %s0 = inlined_call_operand.vmem [shape: f32[8,1568], index: 0, kind: input, shape index: {}]
  %s1 = inlined_call_operand.vmem [shape: f32[8,640], index: 1, kind: input, shape index: {}]
  %s2 = inlined_call_operand.vmem [shape: f32[1568,256], index: 2, kind: input, shape index: {}]
  %s3 = inlined_call_operand.vmem [shape: f32[640,256], index: 3, kind: input, shape index: {}]
  %s4 = inlined_call_operand.vmem [shape: f32[1,256], index: 4, kind: input, shape index: {}]
  %s5 = inlined_call_operand.vmem [shape: f32[1,256], index: 5, kind: input, shape index: {}]
  %s6 = inlined_call_operand.<no memory space> [shape: f32[1,1], index: 6, kind: input, shape index: {}]
  %s7 = inlined_call_operand.vmem [shape: f32[8,1], index: 7, kind: output, shape index: {}]
  %s8 = sld [smem:[#allocation0]]
  $region38: #{critic_net_forward.3} parent=0
    _
  %s10 = ssub.s32 1, %s8
  %s11 = scalar_select 0, %s10, %s8
  %v12 = vstv %s6
  %13 = vst [vmem:[#allocation2] sm:$0x1] %v12
  // Predicated region
  $region2: #{critic_net_forward.3} parent=0 // pred_check
    _
  $region3: #{critic_net_forward.3} parent=0 // pred_check_branch
    %15 = sbr.rel (0) target = $region5
  $region4: #{critic_net_forward.3} parent=0 // pred_region
    _
  $region5: #{critic_net_forward.3} parent=0 // pred_fallthru
    _
  // Predicated region
  $region6: #{critic_net_forward.3} parent=0 // pred_check
    _
  $region7: #{critic_net_forward.3} parent=0 // pred_check_branch
    %17 = sbr.rel (0) target = $region9
  $region8: #{critic_net_forward.3} parent=0 // pred_region
    _
  $region9: #{critic_net_forward.3} parent=0 // pred_fallthru
    _
  // Predicated region
  $region10: #{critic_net_forward.3} parent=0 // pred_check
    _
  $region11: #{critic_net_forward.3} parent=0 // pred_check_branch
    %19 = sbr.rel (0) target = $region13
  $region12: #{critic_net_forward.3} parent=0 // pred_region
    _
  $region13: #{critic_net_forward.3} parent=0 // pred_fallthru
    _
  // Predicated region
  $region14: #{critic_net_forward.3} parent=0 // pred_check
    _
  $region15: #{critic_net_forward.3} parent=0 // pred_check_branch
    %21 = sbr.rel (0) target = $region17
  $region16: #{critic_net_forward.3} parent=0 // pred_region
    _
  $region17: #{critic_net_forward.3} parent=0 // pred_fallthru
    _
  // Predicated region
  $region18: #{critic_net_forward.3} parent=0 // pred_check
    _
  $region19: #{critic_net_forward.3} parent=0 // pred_check_branch
    %23 = sbr.rel (0) target = $region21
  $region20: #{critic_net_forward.3} parent=0 // pred_region
    _
  $region21: #{critic_net_forward.3} parent=0 // pred_fallthru
    _
  // Predicated region
  $region22: #{critic_net_forward.3} parent=0 // pred_check
    _
  $region23: #{critic_net_forward.3} parent=0 // pred_check_branch
    %25 = sbr.rel (0) target = $region25
  $region24: #{critic_net_forward.3} parent=0 // pred_region
    _
  $region25: #{critic_net_forward.3} parent=0 // pred_fallthru
    _
  // Predicated region
  $region26: #{critic_net_forward.3} parent=0 // pred_check
    _
  $region27: #{critic_net_forward.3} parent=0 // pred_check_branch
    %27 = sbr.rel (0) target = $region29
  $region28: #{critic_net_forward.3} parent=0 // pred_region
    _
  $region29: #{critic_net_forward.3} parent=0 // pred_fallthru
    _
  %v28 = vld [vmem:[%s0] sm:$0xff]
  %v29 = vld [vmem:[%s0 + $0x8] sm:$0xff]
  %v30 = vld [vmem:[%s0 + $0x10] sm:$0xff]
  %v31 = vld [vmem:[%s0 + $0x18] sm:$0xff]
  %v32 = vld [vmem:[%s0 + $0x20] sm:$0xff]
  %v33 = vld [vmem:[%s0 + $0x28] sm:$0xff]
  %v34 = vld [vmem:[%s0 + $0x30] sm:$0xff]
  %v35 = vld [vmem:[%s0 + $0x38] sm:$0xff]
  %v36 = vld [vmem:[%s0 + $0x40] sm:$0xff]
  %v37 = vld [vmem:[%s0 + $0x48] sm:$0xff]
  %v38 = vld [vmem:[%s0 + $0x50] sm:$0xff]
  %v39 = vld [vmem:[%s0 + $0x58] sm:$0xff]
  %v40 = vld [vmem:[%s0 + $0x60] sm:$0xff]
  %v41 = vld [vmem:[%s2] sm:$0xff]
  %v42 = vld [vmem:[%s2 + $0x8] sm:$0xff]
  %v43 = vld [vmem:[%s2 + $0x10] sm:$0xff]
  %v44 = vld [vmem:[%s2 + $0x18] sm:$0xff]
  %v45 = vld [vmem:[%s2 + $0x20] sm:$0xff]
  %v46 = vld [vmem:[%s2 + $0x28] sm:$0xff]
  %v47 = vld [vmem:[%s2 + $0x30] sm:$0xff]
  %v48 = vld [vmem:[%s2 + $0x38] sm:$0xff]
  %v49 = vld [vmem:[%s2 + $0x40] sm:$0xff]
  %v50 = vld [vmem:[%s2 + $0x48] sm:$0xff]
  %v51 = vld [vmem:[%s2 + $0x50] sm:$0xff]
  %v52 = vld [vmem:[%s2 + $0x58] sm:$0xff]
  %v53 = vld [vmem:[%s2 + $0x60] sm:$0xff]
  %v54 = vld [vmem:[%s2 + $0x68] sm:$0xff]
  %v55 = vld [vmem:[%s2 + $0x70] sm:$0xff]
  %v56 = vld [vmem:[%s2 + $0x78] sm:$0xff]
  %v57 = vld [vmem:[%s2 + $0x80] sm:$0xff]
  %v58 = vld [vmem:[%s2 + $0x88] sm:$0xff]
  %v59 = vld [vmem:[%s2 + $0x90] sm:$0xff]
  %v60 = vld [vmem:[%s2 + $0x98] sm:$0xff]
  %v61 = vld [vmem:[%s2 + $0xa0] sm:$0xff]
  %v62 = vld [vmem:[%s2 + $0xa8] sm:$0xff]
  %v63 = vld [vmem:[%s2 + $0xb0] sm:$0xff]
  %v64 = vld [vmem:[%s2 + $0xb8] sm:$0xff]
  %v65 = vld [vmem:[%s2 + $0xc0] sm:$0xff]
  %v66 = vld [vmem:[%s2 + $0xc8] sm:$0xff]
  %v67 = vld [vmem:[%s2 + $0xd0] sm:$0xff]
  %v68 = vld [vmem:[%s2 + $0xd8] sm:$0xff]
  %v69 = vld [vmem:[%s2 + $0xe0] sm:$0xff]
  %v70 = vld [vmem:[%s2 + $0xe8] sm:$0xff]
  %v71 = vld [vmem:[%s2 + $0xf0] sm:$0xff]
  %v72 = vld [vmem:[%s2 + $0xf8] sm:$0xff]
  %v73 = vld [vmem:[%s2 + $0x100] sm:$0xff]
  %v74 = vld [vmem:[%s2 + $0x108] sm:$0xff]
  %v75 = vld [vmem:[%s2 + $0x110] sm:$0xff]
  %v76 = vld [vmem:[%s2 + $0x118] sm:$0xff]
  %v77 = vld [vmem:[%s2 + $0x120] sm:$0xff]
  %v78 = vld [vmem:[%s2 + $0x128] sm:$0xff]
  %v79 = vld [vmem:[%s2 + $0x130] sm:$0xff]
  %v80 = vld [vmem:[%s2 + $0x138] sm:$0xff]
  %v81 = vld [vmem:[%s2 + $0x140] sm:$0xff]
  %v82 = vld [vmem:[%s2 + $0x148] sm:$0xff]
  %v83 = vld [vmem:[%s2 + $0x150] sm:$0xff]
  %v84 = vld [vmem:[%s2 + $0x158] sm:$0xff]
  %v85 = vld [vmem:[%s2 + $0x160] sm:$0xff]
  %v86 = vld [vmem:[%s2 + $0x168] sm:$0xff]
  %v87 = vld [vmem:[%s2 + $0x170] sm:$0xff]
  %v88 = vld [vmem:[%s2 + $0x178] sm:$0xff]
  %v89 = vld [vmem:[%s2 + $0x180] sm:$0xff]
  %v90 = vld [vmem:[%s2 + $0x188] sm:$0xff]
  %v91 = vld [vmem:[%s2 + $0x190] sm:$0xff]
  %v92 = vld [vmem:[%s2 + $0x198] sm:$0xff]
  %v93 = vld [vmem:[%s2 + $0x1a0] sm:$0xff]
  %v94 = vld [vmem:[%s2 + $0x1a8] sm:$0xff]
  %v95 = vld [vmem:[%s2 + $0x1b0] sm:$0xff]
  %v96 = vld [vmem:[%s2 + $0x1b8] sm:$0xff]
  %v97 = vld [vmem:[%s2 + $0x1c0] sm:$0xff]
  %v98 = vld [vmem:[%s2 + $0x1c8] sm:$0xff]
  %v99 = vld [vmem:[%s2 + $0x1d0] sm:$0xff]
  %v100 = vld [vmem:[%s2 + $0x1d8] sm:$0xff]
  %v101 = vld [vmem:[%s2 + $0x1e0] sm:$0xff]
  %v102 = vld [vmem:[%s2 + $0x1e8] sm:$0xff]
  %v103 = vld [vmem:[%s2 + $0x1f0] sm:$0xff]
  %v104 = vld [vmem:[%s2 + $0x1f8] sm:$0xff]
  %v105 = vld [vmem:[%s2 + $0x200] sm:$0xff]
  %v106 = vld [vmem:[%s2 + $0x208] sm:$0xff]
  %v107 = vld [vmem:[%s2 + $0x210] sm:$0xff]
  %v108 = vld [vmem:[%s2 + $0x218] sm:$0xff]
  %v109 = vld [vmem:[%s2 + $0x220] sm:$0xff]
  %v110 = vld [vmem:[%s2 + $0x228] sm:$0xff]
  %v111 = vld [vmem:[%s2 + $0x230] sm:$0xff]
  %v112 = vld [vmem:[%s2 + $0x238] sm:$0xff]
  %v113 = vld [vmem:[%s2 + $0x240] sm:$0xff]
  %v114 = vld [vmem:[%s2 + $0x248] sm:$0xff]
  %v115 = vld [vmem:[%s2 + $0x250] sm:$0xff]
  %v116 = vld [vmem:[%s2 + $0x258] sm:$0xff]
  %v117 = vld [vmem:[%s2 + $0x260] sm:$0xff]
  %v118 = vld [vmem:[%s2 + $0x268] sm:$0xff]
  %v119 = vld [vmem:[%s2 + $0x270] sm:$0xff]
  %v120 = vld [vmem:[%s2 + $0x278] sm:$0xff]
  %v121 = vld [vmem:[%s2 + $0x280] sm:$0xff]
  %v122 = vld [vmem:[%s2 + $0x288] sm:$0xff]
  %v123 = vld [vmem:[%s2 + $0x290] sm:$0xff]
  %v124 = vld [vmem:[%s2 + $0x298] sm:$0xff]
  %v125 = vld [vmem:[%s2 + $0x2a0] sm:$0xff]
  %v126 = vld [vmem:[%s2 + $0x2a8] sm:$0xff]
  %v127 = vld [vmem:[%s2 + $0x2b0] sm:$0xff]
  %v128 = vld [vmem:[%s2 + $0x2b8] sm:$0xff]
  %v129 = vld [vmem:[%s2 + $0x2c0] sm:$0xff]
  %v130 = vld [vmem:[%s2 + $0x2c8] sm:$0xff]
  %v131 = vld [vmem:[%s2 + $0x2d0] sm:$0xff]
  %v132 = vld [vmem:[%s2 + $0x2d8] sm:$0xff]
  %v133 = vld [vmem:[%s2 + $0x2e0] sm:$0xff]
  %v134 = vld [vmem:[%s2 + $0x2e8] sm:$0xff]
  %v135 = vld [vmem:[%s2 + $0x2f0] sm:$0xff]
  %v136 = vld [vmem:[%s2 + $0x2f8] sm:$0xff]
  %v137 = vld [vmem:[%s2 + $0x300] sm:$0xff]
  %v138 = vld [vmem:[%s2 + $0x308] sm:$0xff]
  %v139 = vld [vmem:[%s2 + $0x310] sm:$0xff]
  %v140 = vld [vmem:[%s2 + $0x318] sm:$0xff]
  %v141 = vld [vmem:[%s2 + $0x320] sm:$0xff]
  %v142 = vld [vmem:[%s2 + $0x328] sm:$0xff]
  %v143 = vld [vmem:[%s2 + $0x330] sm:$0xff]
  %v144 = vld [vmem:[%s2 + $0x338] sm:$0xff]
  %v145 = vld [vmem:[%s2 + $0x340] sm:$0xff]
  %v146 = vld [vmem:[%s2 + $0x348] sm:$0xff]
  %v147 = vld [vmem:[%s2 + $0x350] sm:$0xff]
  %v148 = vld [vmem:[%s2 + $0x358] sm:$0xff]
  %v149 = vld [vmem:[%s2 + $0x360] sm:$0xff]
  %v150 = vld [vmem:[%s2 + $0x368] sm:$0xff]
  %v151 = vld [vmem:[%s2 + $0x370] sm:$0xff]
  %v152 = vld [vmem:[%s2 + $0x378] sm:$0xff]
  %v153 = vld [vmem:[%s2 + $0x380] sm:$0xff]
  %v154 = vld [vmem:[%s2 + $0x388] sm:$0xff]
  %v155 = vld [vmem:[%s2 + $0x390] sm:$0xff]
  %v156 = vld [vmem:[%s2 + $0x398] sm:$0xff]
  %v157 = vld [vmem:[%s2 + $0x3a0] sm:$0xff]
  %v158 = vld [vmem:[%s2 + $0x3a8] sm:$0xff]
  %v159 = vld [vmem:[%s2 + $0x3b0] sm:$0xff]
  %v160 = vld [vmem:[%s2 + $0x3b8] sm:$0xff]
  %v161 = vld [vmem:[%s2 + $0x3c0] sm:$0xff]
  %v162 = vld [vmem:[%s2 + $0x3c8] sm:$0xff]
  %v163 = vld [vmem:[%s2 + $0x3d0] sm:$0xff]
  %v164 = vld [vmem:[%s2 + $0x3d8] sm:$0xff]
  %v165 = vld [vmem:[%s2 + $0x3e0] sm:$0xff]
  %v166 = vld [vmem:[%s2 + $0x3e8] sm:$0xff]
  %v167 = vld [vmem:[%s2 + $0x3f0] sm:$0xff]
  %v168 = vld [vmem:[%s2 + $0x3f8] sm:$0xff]
  %v169 = vld [vmem:[%s2 + $0x400] sm:$0xff]
  %v170 = vld [vmem:[%s2 + $0x408] sm:$0xff]
  %v171 = vld [vmem:[%s2 + $0x410] sm:$0xff]
  %v172 = vld [vmem:[%s2 + $0x418] sm:$0xff]
  %v173 = vld [vmem:[%s2 + $0x420] sm:$0xff]
  %v174 = vld [vmem:[%s2 + $0x428] sm:$0xff]
  %v175 = vld [vmem:[%s2 + $0x430] sm:$0xff]
  %v176 = vld [vmem:[%s2 + $0x438] sm:$0xff]
  %v177 = vld [vmem:[%s2 + $0x440] sm:$0xff]
  %v178 = vld [vmem:[%s2 + $0x448] sm:$0xff]
  %v179 = vld [vmem:[%s2 + $0x450] sm:$0xff]
  %v180 = vld [vmem:[%s2 + $0x458] sm:$0xff]
  %v181 = vld [vmem:[%s2 + $0x460] sm:$0xff]
  %v182 = vld [vmem:[%s2 + $0x468] sm:$0xff]
  %v183 = vld [vmem:[%s2 + $0x470] sm:$0xff]
  %v184 = vld [vmem:[%s2 + $0x478] sm:$0xff]
  %v185 = vld [vmem:[%s2 + $0x480] sm:$0xff]
  %v186 = vld [vmem:[%s2 + $0x488] sm:$0xff]
  %v187 = vld [vmem:[%s2 + $0x490] sm:$0xff]
  %v188 = vld [vmem:[%s2 + $0x498] sm:$0xff]
  %v189 = vld [vmem:[%s2 + $0x4a0] sm:$0xff]
  %v190 = vld [vmem:[%s2 + $0x4a8] sm:$0xff]
  %v191 = vld [vmem:[%s2 + $0x4b0] sm:$0xff]
  %v192 = vld [vmem:[%s2 + $0x4b8] sm:$0xff]
  %v193 = vld [vmem:[%s2 + $0x4c0] sm:$0xff]
  %v194 = vld [vmem:[%s2 + $0x4c8] sm:$0xff]
  %v195 = vld [vmem:[%s2 + $0x4d0] sm:$0xff]
  %v196 = vld [vmem:[%s2 + $0x4d8] sm:$0xff]
  %v197 = vld [vmem:[%s2 + $0x4e0] sm:$0xff]
  %v198 = vld [vmem:[%s2 + $0x4e8] sm:$0xff]
  %v199 = vld [vmem:[%s2 + $0x4f0] sm:$0xff]
  %v200 = vld [vmem:[%s2 + $0x4f8] sm:$0xff]
  %v201 = vld [vmem:[%s2 + $0x500] sm:$0xff]
  %v202 = vld [vmem:[%s2 + $0x508] sm:$0xff]
  %v203 = vld [vmem:[%s2 + $0x510] sm:$0xff]
  %v204 = vld [vmem:[%s2 + $0x518] sm:$0xff]
  %v205 = vld [vmem:[%s2 + $0x520] sm:$0xff]
  %v206 = vld [vmem:[%s2 + $0x528] sm:$0xff]
  %v207 = vld [vmem:[%s2 + $0x530] sm:$0xff]
  %v208 = vld [vmem:[%s2 + $0x538] sm:$0xff]
  %v209 = vld [vmem:[%s2 + $0x540] sm:$0xff]
  %v210 = vld [vmem:[%s2 + $0x548] sm:$0xff]
  %v211 = vld [vmem:[%s2 + $0x550] sm:$0xff]
  %v212 = vld [vmem:[%s2 + $0x558] sm:$0xff]
  %v213 = vld [vmem:[%s2 + $0x560] sm:$0xff]
  %v214 = vld [vmem:[%s2 + $0x568] sm:$0xff]
  %v215 = vld [vmem:[%s2 + $0x570] sm:$0xff]
  %v216 = vld [vmem:[%s2 + $0x578] sm:$0xff]
  %v217 = vld [vmem:[%s2 + $0x580] sm:$0xff]
  %v218 = vld [vmem:[%s2 + $0x588] sm:$0xff]
  %v219 = vld [vmem:[%s2 + $0x590] sm:$0xff]
  %v220 = vld [vmem:[%s2 + $0x598] sm:$0xff]
  %v221 = vld [vmem:[%s2 + $0x5a0] sm:$0xff]
  %v222 = vld [vmem:[%s2 + $0x5a8] sm:$0xff]
  %v223 = vld [vmem:[%s2 + $0x5b0] sm:$0xff]
  %v224 = vld [vmem:[%s2 + $0x5b8] sm:$0xff]
  %v225 = vld [vmem:[%s2 + $0x5c0] sm:$0xff]
  %v226 = vld [vmem:[%s2 + $0x5c8] sm:$0xff]
  %v227 = vld [vmem:[%s2 + $0x5d0] sm:$0xff]
  %v228 = vld [vmem:[%s2 + $0x5d8] sm:$0xff]
  %v229 = vld [vmem:[%s2 + $0x5e0] sm:$0xff]
  %v230 = vld [vmem:[%s2 + $0x5e8] sm:$0xff]
  %v231 = vld [vmem:[%s2 + $0x5f0] sm:$0xff]
  %v232 = vld [vmem:[%s2 + $0x5f8] sm:$0xff]
  %v233 = vld [vmem:[%s2 + $0x600] sm:$0xff]
  %v234 = vld [vmem:[%s2 + $0x608] sm:$0xff]
  %v235 = vld [vmem:[%s2 + $0x610] sm:$0xff]
  %v236 = vld [vmem:[%s2 + $0x618] sm:$0xff]
  %v237 = vld [vmem:[%s2 + $0x620] sm:$0xff]
  %v238 = vld [vmem:[%s2 + $0x628] sm:$0xff]
  %v239 = vld [vmem:[%s2 + $0x630] sm:$0xff]
  %v240 = vld [vmem:[%s2 + $0x638] sm:$0xff]
  %v241 = vld [vmem:[%s2 + $0x640] sm:$0xff]
  %v242 = vld [vmem:[%s2 + $0x648] sm:$0xff]
  %v243 = vld [vmem:[%s2 + $0x650] sm:$0xff]
  %v244 = vld [vmem:[%s2 + $0x658] sm:$0xff]
  %v245 = vld [vmem:[%s2 + $0x660] sm:$0xff]
  %v246 = vld [vmem:[%s2 + $0x668] sm:$0xff]
  %v247 = vld [vmem:[%s2 + $0x670] sm:$0xff]
  %v248 = vld [vmem:[%s2 + $0x678] sm:$0xff]
  %v249 = vld [vmem:[%s2 + $0x680] sm:$0xff]
  %v250 = vld [vmem:[%s2 + $0x688] sm:$0xff]
  %v251 = vld [vmem:[%s2 + $0x690] sm:$0xff]
  %v252 = vld [vmem:[%s2 + $0x698] sm:$0xff]
  %v253 = vld [vmem:[%s2 + $0x6a0] sm:$0xff]
  %v254 = vld [vmem:[%s2 + $0x6a8] sm:$0xff]
  %v255 = vld [vmem:[%s2 + $0x6b0] sm:$0xff]
  %v256 = vld [vmem:[%s2 + $0x6b8] sm:$0xff]
  %v257 = vld [vmem:[%s2 + $0x6c0] sm:$0xff]
  %v258 = vld [vmem:[%s2 + $0x6c8] sm:$0xff]
  %v259 = vld [vmem:[%s2 + $0x6d0] sm:$0xff]
  %v260 = vld [vmem:[%s2 + $0x6d8] sm:$0xff]
  %v261 = vld [vmem:[%s2 + $0x6e0] sm:$0xff]
  %v262 = vld [vmem:[%s2 + $0x6e8] sm:$0xff]
  %v263 = vld [vmem:[%s2 + $0x6f0] sm:$0xff]
  %v264 = vld [vmem:[%s2 + $0x6f8] sm:$0xff]
  %v265 = vld [vmem:[%s2 + $0x700] sm:$0xff]
  %v266 = vld [vmem:[%s2 + $0x708] sm:$0xff]
  %v267 = vld [vmem:[%s2 + $0x710] sm:$0xff]
  %v268 = vld [vmem:[%s2 + $0x718] sm:$0xff]
  %v269 = vld [vmem:[%s2 + $0x720] sm:$0xff]
  %v270 = vld [vmem:[%s2 + $0x728] sm:$0xff]
  %v271 = vld [vmem:[%s2 + $0x730] sm:$0xff]
  %v272 = vld [vmem:[%s2 + $0x738] sm:$0xff]
  %v273 = vld [vmem:[%s2 + $0x740] sm:$0xff]
  %v274 = vld [vmem:[%s2 + $0x748] sm:$0xff]
  %v275 = vld [vmem:[%s2 + $0x750] sm:$0xff]
  %v276 = vld [vmem:[%s2 + $0x758] sm:$0xff]
  %v277 = vld [vmem:[%s2 + $0x760] sm:$0xff]
  %v278 = vld [vmem:[%s2 + $0x768] sm:$0xff]
  %v279 = vld [vmem:[%s2 + $0x770] sm:$0xff]
  %v280 = vld [vmem:[%s2 + $0x778] sm:$0xff]
  %v281 = vld [vmem:[%s2 + $0x780] sm:$0xff]
  %v282 = vld [vmem:[%s2 + $0x788] sm:$0xff]
  %v283 = vld [vmem:[%s2 + $0x790] sm:$0xff]
  %v284 = vld [vmem:[%s2 + $0x798] sm:$0xff]
  %v285 = vld [vmem:[%s2 + $0x7a0] sm:$0xff]
  %v286 = vld [vmem:[%s2 + $0x7a8] sm:$0xff]
  %v287 = vld [vmem:[%s2 + $0x7b0] sm:$0xff]
  %v288 = vld [vmem:[%s2 + $0x7b8] sm:$0xff]
  %v289 = vld [vmem:[%s2 + $0x7c0] sm:$0xff]
  %v290 = vld [vmem:[%s2 + $0x7c8] sm:$0xff]
  %v291 = vld [vmem:[%s2 + $0x7d0] sm:$0xff]
  %v292 = vld [vmem:[%s2 + $0x7d8] sm:$0xff]
  %v293 = vld [vmem:[%s2 + $0x7e0] sm:$0xff]
  %v294 = vld [vmem:[%s2 + $0x7e8] sm:$0xff]
  %v295 = vld [vmem:[%s2 + $0x7f0] sm:$0xff]
  %v296 = vld [vmem:[%s2 + $0x7f8] sm:$0xff]
  %v297 = vld [vmem:[%s2 + $0x800] sm:$0xff]
  %v298 = vld [vmem:[%s2 + $0x808] sm:$0xff]
  %v299 = vld [vmem:[%s2 + $0x810] sm:$0xff]
  %v300 = vld [vmem:[%s2 + $0x818] sm:$0xff]
  %v301 = vld [vmem:[%s2 + $0x820] sm:$0xff]
  %v302 = vld [vmem:[%s2 + $0x828] sm:$0xff]
  %v303 = vld [vmem:[%s2 + $0x830] sm:$0xff]
  %v304 = vld [vmem:[%s2 + $0x838] sm:$0xff]
  %v305 = vld [vmem:[%s2 + $0x840] sm:$0xff]
  %v306 = vld [vmem:[%s2 + $0x848] sm:$0xff]
  %v307 = vld [vmem:[%s2 + $0x850] sm:$0xff]
  %v308 = vld [vmem:[%s2 + $0x858] sm:$0xff]
  %v309 = vld [vmem:[%s2 + $0x860] sm:$0xff]
  %v310 = vld [vmem:[%s2 + $0x868] sm:$0xff]
  %v311 = vld [vmem:[%s2 + $0x870] sm:$0xff]
  %v312 = vld [vmem:[%s2 + $0x878] sm:$0xff]
  %v313 = vld [vmem:[%s2 + $0x880] sm:$0xff]
  %v314 = vld [vmem:[%s2 + $0x888] sm:$0xff]
  %v315 = vld [vmem:[%s2 + $0x890] sm:$0xff]
  %v316 = vld [vmem:[%s2 + $0x898] sm:$0xff]
  %v317 = vld [vmem:[%s2 + $0x8a0] sm:$0xff]
  %v318 = vld [vmem:[%s2 + $0x8a8] sm:$0xff]
  %v319 = vld [vmem:[%s2 + $0x8b0] sm:$0xff]
  %v320 = vld [vmem:[%s2 + $0x8b8] sm:$0xff]
  %v321 = vld [vmem:[%s2 + $0x8c0] sm:$0xff]
  %v322 = vld [vmem:[%s2 + $0x8c8] sm:$0xff]
  %v323 = vld [vmem:[%s2 + $0x8d0] sm:$0xff]
  %v324 = vld [vmem:[%s2 + $0x8d8] sm:$0xff]
  %v325 = vld [vmem:[%s2 + $0x8e0] sm:$0xff]
  %v326 = vld [vmem:[%s2 + $0x8e8] sm:$0xff]
  %v327 = vld [vmem:[%s2 + $0x8f0] sm:$0xff]
  %v328 = vld [vmem:[%s2 + $0x8f8] sm:$0xff]
  %v329 = vld [vmem:[%s2 + $0x900] sm:$0xff]
  %v330 = vld [vmem:[%s2 + $0x908] sm:$0xff]
  %v331 = vld [vmem:[%s2 + $0x910] sm:$0xff]
  %v332 = vld [vmem:[%s2 + $0x918] sm:$0xff]
  %v333 = vld [vmem:[%s2 + $0x920] sm:$0xff]
  %v334 = vld [vmem:[%s2 + $0x928] sm:$0xff]
  %v335 = vld [vmem:[%s2 + $0x930] sm:$0xff]
  %v336 = vld [vmem:[%s2 + $0x938] sm:$0xff]
  %v337 = vld [vmem:[%s2 + $0x940] sm:$0xff]
  %v338 = vld [vmem:[%s2 + $0x948] sm:$0xff]
  %v339 = vld [vmem:[%s2 + $0x950] sm:$0xff]
  %v340 = vld [vmem:[%s2 + $0x958] sm:$0xff]
  %v341 = vld [vmem:[%s2 + $0x960] sm:$0xff]
  %v342 = vld [vmem:[%s2 + $0x968] sm:$0xff]
  %v343 = vld [vmem:[%s2 + $0x970] sm:$0xff]
  %v344 = vld [vmem:[%s2 + $0x978] sm:$0xff]
  %v345 = vld [vmem:[%s2 + $0x980] sm:$0xff]
  %v346 = vld [vmem:[%s2 + $0x988] sm:$0xff]
  %v347 = vld [vmem:[%s2 + $0x990] sm:$0xff]
  %v348 = vld [vmem:[%s2 + $0x998] sm:$0xff]
  %v349 = vld [vmem:[%s2 + $0x9a0] sm:$0xff]
  %v350 = vld [vmem:[%s2 + $0x9a8] sm:$0xff]
  %v351 = vld [vmem:[%s2 + $0x9b0] sm:$0xff]
  %v352 = vld [vmem:[%s2 + $0x9b8] sm:$0xff]
  %v353 = vld [vmem:[%s2 + $0x9c0] sm:$0xff]
  %v354 = vld [vmem:[%s2 + $0x9c8] sm:$0xff]
  %v355 = vld [vmem:[%s2 + $0x9d0] sm:$0xff]
  %v356 = vld [vmem:[%s2 + $0x9d8] sm:$0xff]
  %v357 = vld [vmem:[%s2 + $0x9e0] sm:$0xff]
  %v358 = vld [vmem:[%s2 + $0x9e8] sm:$0xff]
  %v359 = vld [vmem:[%s2 + $0x9f0] sm:$0xff]
  %v360 = vld [vmem:[%s2 + $0x9f8] sm:$0xff]
  %v361 = vld [vmem:[%s2 + $0xa00] sm:$0xff]
  %v362 = vld [vmem:[%s2 + $0xa08] sm:$0xff]
  %v363 = vld [vmem:[%s2 + $0xa10] sm:$0xff]
  %v364 = vld [vmem:[%s2 + $0xa18] sm:$0xff]
  %v365 = vld [vmem:[%s2 + $0xa20] sm:$0xff]
  %v366 = vld [vmem:[%s2 + $0xa28] sm:$0xff]
  %v367 = vld [vmem:[%s2 + $0xa30] sm:$0xff]
  %v368 = vld [vmem:[%s2 + $0xa38] sm:$0xff]
  %v369 = vld [vmem:[%s2 + $0xa40] sm:$0xff]
  %v370 = vld [vmem:[%s2 + $0xa48] sm:$0xff]
  %v371 = vld [vmem:[%s2 + $0xa50] sm:$0xff]
  %v372 = vld [vmem:[%s2 + $0xa58] sm:$0xff]
  %v373 = vld [vmem:[%s2 + $0xa60] sm:$0xff]
  %v374 = vld [vmem:[%s2 + $0xa68] sm:$0xff]
  %v375 = vld [vmem:[%s2 + $0xa70] sm:$0xff]
  %v376 = vld [vmem:[%s2 + $0xa78] sm:$0xff]
  %v377 = vld [vmem:[%s2 + $0xa80] sm:$0xff]
  %v378 = vld [vmem:[%s2 + $0xa88] sm:$0xff]
  %v379 = vld [vmem:[%s2 + $0xa90] sm:$0xff]
  %v380 = vld [vmem:[%s2 + $0xa98] sm:$0xff]
  %v381 = vld [vmem:[%s2 + $0xaa0] sm:$0xff]
  %v382 = vld [vmem:[%s2 + $0xaa8] sm:$0xff]
  %v383 = vld [vmem:[%s2 + $0xab0] sm:$0xff]
  %v384 = vld [vmem:[%s2 + $0xab8] sm:$0xff]
  %v385 = vld [vmem:[%s2 + $0xac0] sm:$0xff]
  %v386 = vld [vmem:[%s2 + $0xac8] sm:$0xff]
  %v387 = vld [vmem:[%s2 + $0xad0] sm:$0xff]
  %v388 = vld [vmem:[%s2 + $0xad8] sm:$0xff]
  %v389 = vld [vmem:[%s2 + $0xae0] sm:$0xff]
  %v390 = vld [vmem:[%s2 + $0xae8] sm:$0xff]
  %v391 = vld [vmem:[%s2 + $0xaf0] sm:$0xff]
  %v392 = vld [vmem:[%s2 + $0xaf8] sm:$0xff]
  %v393 = vld [vmem:[%s2 + $0xb00] sm:$0xff]
  %v394 = vld [vmem:[%s2 + $0xb08] sm:$0xff]
  %v395 = vld [vmem:[%s2 + $0xb10] sm:$0xff]
  %v396 = vld [vmem:[%s2 + $0xb18] sm:$0xff]
  %v397 = vld [vmem:[%s2 + $0xb20] sm:$0xff]
  %v398 = vld [vmem:[%s2 + $0xb28] sm:$0xff]
  %v399 = vld [vmem:[%s2 + $0xb30] sm:$0xff]
  %v400 = vld [vmem:[%s2 + $0xb38] sm:$0xff]
  %v401 = vld [vmem:[%s2 + $0xb40] sm:$0xff]
  %v402 = vld [vmem:[%s2 + $0xb48] sm:$0xff]
  %v403 = vld [vmem:[%s2 + $0xb50] sm:$0xff]
  %v404 = vld [vmem:[%s2 + $0xb58] sm:$0xff]
  %v405 = vld [vmem:[%s2 + $0xb60] sm:$0xff]
  %v406 = vld [vmem:[%s2 + $0xb68] sm:$0xff]
  %v407 = vld [vmem:[%s2 + $0xb70] sm:$0xff]
  %v408 = vld [vmem:[%s2 + $0xb78] sm:$0xff]
  %v409 = vld [vmem:[%s2 + $0xb80] sm:$0xff]
  %v410 = vld [vmem:[%s2 + $0xb88] sm:$0xff]
  %v411 = vld [vmem:[%s2 + $0xb90] sm:$0xff]
  %v412 = vld [vmem:[%s2 + $0xb98] sm:$0xff]
  %v413 = vld [vmem:[%s2 + $0xba0] sm:$0xff]
  %v414 = vld [vmem:[%s2 + $0xba8] sm:$0xff]
  %v415 = vld [vmem:[%s2 + $0xbb0] sm:$0xff]
  %v416 = vld [vmem:[%s2 + $0xbb8] sm:$0xff]
  %v417 = vld [vmem:[%s2 + $0xbc0] sm:$0xff]
  %v418 = vld [vmem:[%s2 + $0xbc8] sm:$0xff]
  %v419 = vld [vmem:[%s2 + $0xbd0] sm:$0xff]
  %v420 = vld [vmem:[%s2 + $0xbd8] sm:$0xff]
  %v421 = vld [vmem:[%s2 + $0xbe0] sm:$0xff]
  %v422 = vld [vmem:[%s2 + $0xbe8] sm:$0xff]
  %v423 = vld [vmem:[%s2 + $0xbf0] sm:$0xff]
  %v424 = vld [vmem:[%s2 + $0xbf8] sm:$0xff]
  %v425 = vld [vmem:[%s2 + $0xc00] sm:$0xff]
  %v426 = vld [vmem:[%s2 + $0xc08] sm:$0xff]
  %v427 = vld [vmem:[%s2 + $0xc10] sm:$0xff]
  %v428 = vld [vmem:[%s2 + $0xc18] sm:$0xff]
  %v429 = vld [vmem:[%s2 + $0xc20] sm:$0xff]
  %v430 = vld [vmem:[%s2 + $0xc28] sm:$0xff]
  %v431 = vld [vmem:[%s2 + $0xc30] sm:$0xff]
  %v432 = vld [vmem:[%s2 + $0xc38] sm:$0xff]
  %v433 = vld [vmem:[%s1] sm:$0xff]
  %v434 = vld [vmem:[%s1 + $0x8] sm:$0xff]
  %v435 = vld [vmem:[%s1 + $0x10] sm:$0xff]
  %v436 = vld [vmem:[%s1 + $0x18] sm:$0xff]
  %v437 = vld [vmem:[%s1 + $0x20] sm:$0xff]
  %v438 = vld [vmem:[%s3] sm:$0xff]
  %v439 = vld [vmem:[%s3 + $0x8] sm:$0xff]
  %v440 = vld [vmem:[%s3 + $0x10] sm:$0xff]
  %v441 = vld [vmem:[%s3 + $0x18] sm:$0xff]
  %v442 = vld [vmem:[%s3 + $0x20] sm:$0xff]
  %v443 = vld [vmem:[%s3 + $0x28] sm:$0xff]
  %v444 = vld [vmem:[%s3 + $0x30] sm:$0xff]
  %v445 = vld [vmem:[%s3 + $0x38] sm:$0xff]
  %v446 = vld [vmem:[%s3 + $0x40] sm:$0xff]
  %v447 = vld [vmem:[%s3 + $0x48] sm:$0xff]
  %v448 = vld [vmem:[%s3 + $0x50] sm:$0xff]
  %v449 = vld [vmem:[%s3 + $0x58] sm:$0xff]
  %v450 = vld [vmem:[%s3 + $0x60] sm:$0xff]
  %v451 = vld [vmem:[%s3 + $0x68] sm:$0xff]
  %v452 = vld [vmem:[%s3 + $0x70] sm:$0xff]
  %v453 = vld [vmem:[%s3 + $0x78] sm:$0xff]
  %v454 = vld [vmem:[%s3 + $0x80] sm:$0xff]
  %v455 = vld [vmem:[%s3 + $0x88] sm:$0xff]
  %v456 = vld [vmem:[%s3 + $0x90] sm:$0xff]
  %v457 = vld [vmem:[%s3 + $0x98] sm:$0xff]
  %v458 = vld [vmem:[%s3 + $0xa0] sm:$0xff]
  %v459 = vld [vmem:[%s3 + $0xa8] sm:$0xff]
  %v460 = vld [vmem:[%s3 + $0xb0] sm:$0xff]
  %v461 = vld [vmem:[%s3 + $0xb8] sm:$0xff]
  %v462 = vld [vmem:[%s3 + $0xc0] sm:$0xff]
  %v463 = vld [vmem:[%s3 + $0xc8] sm:$0xff]
  %v464 = vld [vmem:[%s3 + $0xd0] sm:$0xff]
  %v465 = vld [vmem:[%s3 + $0xd8] sm:$0xff]
  %v466 = vld [vmem:[%s3 + $0xe0] sm:$0xff]
  %v467 = vld [vmem:[%s3 + $0xe8] sm:$0xff]
  %v468 = vld [vmem:[%s3 + $0xf0] sm:$0xff]
  %v469 = vld [vmem:[%s3 + $0xf8] sm:$0xff]
  %v470 = vld [vmem:[%s3 + $0x100] sm:$0xff]
  %v471 = vld [vmem:[%s3 + $0x108] sm:$0xff]
  %v472 = vld [vmem:[%s3 + $0x110] sm:$0xff]
  %v473 = vld [vmem:[%s3 + $0x118] sm:$0xff]
  %v474 = vld [vmem:[%s3 + $0x120] sm:$0xff]
  %v475 = vld [vmem:[%s3 + $0x128] sm:$0xff]
  %v476 = vld [vmem:[%s3 + $0x130] sm:$0xff]
  %v477 = vld [vmem:[%s3 + $0x138] sm:$0xff]
  %v478 = vld [vmem:[%s3 + $0x140] sm:$0xff]
  %v479 = vld [vmem:[%s3 + $0x148] sm:$0xff]
  %v480 = vld [vmem:[%s3 + $0x150] sm:$0xff]
  %v481 = vld [vmem:[%s3 + $0x158] sm:$0xff]
  %v482 = vld [vmem:[%s3 + $0x160] sm:$0xff]
  %v483 = vld [vmem:[%s3 + $0x168] sm:$0xff]
  %v484 = vld [vmem:[%s3 + $0x170] sm:$0xff]
  %v485 = vld [vmem:[%s3 + $0x178] sm:$0xff]
  %v486 = vld [vmem:[%s3 + $0x180] sm:$0xff]
  %v487 = vld [vmem:[%s3 + $0x188] sm:$0xff]
  %v488 = vld [vmem:[%s3 + $0x190] sm:$0xff]
  %v489 = vld [vmem:[%s3 + $0x198] sm:$0xff]
  %v490 = vld [vmem:[%s3 + $0x1a0] sm:$0xff]
  %v491 = vld [vmem:[%s3 + $0x1a8] sm:$0xff]
  %v492 = vld [vmem:[%s3 + $0x1b0] sm:$0xff]
  %v493 = vld [vmem:[%s3 + $0x1b8] sm:$0xff]
  %v494 = vld [vmem:[%s3 + $0x1c0] sm:$0xff]
  %v495 = vld [vmem:[%s3 + $0x1c8] sm:$0xff]
  %v496 = vld [vmem:[%s3 + $0x1d0] sm:$0xff]
  %v497 = vld [vmem:[%s3 + $0x1d8] sm:$0xff]
  %v498 = vld [vmem:[%s3 + $0x1e0] sm:$0xff]
  %v499 = vld [vmem:[%s3 + $0x1e8] sm:$0xff]
  %v500 = vld [vmem:[%s3 + $0x1f0] sm:$0xff]
  %v501 = vld [vmem:[%s3 + $0x1f8] sm:$0xff]
  %v502 = vld [vmem:[%s3 + $0x200] sm:$0xff]
  %v503 = vld [vmem:[%s3 + $0x208] sm:$0xff]
  %v504 = vld [vmem:[%s3 + $0x210] sm:$0xff]
  %v505 = vld [vmem:[%s3 + $0x218] sm:$0xff]
  %v506 = vld [vmem:[%s3 + $0x220] sm:$0xff]
  %v507 = vld [vmem:[%s3 + $0x228] sm:$0xff]
  %v508 = vld [vmem:[%s3 + $0x230] sm:$0xff]
  %v509 = vld [vmem:[%s3 + $0x238] sm:$0xff]
  %v510 = vld [vmem:[%s3 + $0x240] sm:$0xff]
  %v511 = vld [vmem:[%s3 + $0x248] sm:$0xff]
  %v512 = vld [vmem:[%s3 + $0x250] sm:$0xff]
  %v513 = vld [vmem:[%s3 + $0x258] sm:$0xff]
  %v514 = vld [vmem:[%s3 + $0x260] sm:$0xff]
  %v515 = vld [vmem:[%s3 + $0x268] sm:$0xff]
  %v516 = vld [vmem:[%s3 + $0x270] sm:$0xff]
  %v517 = vld [vmem:[%s3 + $0x278] sm:$0xff]
  %v518 = vld [vmem:[%s3 + $0x280] sm:$0xff]
  %v519 = vld [vmem:[%s3 + $0x288] sm:$0xff]
  %v520 = vld [vmem:[%s3 + $0x290] sm:$0xff]
  %v521 = vld [vmem:[%s3 + $0x298] sm:$0xff]
  %v522 = vld [vmem:[%s3 + $0x2a0] sm:$0xff]
  %v523 = vld [vmem:[%s3 + $0x2a8] sm:$0xff]
  %v524 = vld [vmem:[%s3 + $0x2b0] sm:$0xff]
  %v525 = vld [vmem:[%s3 + $0x2b8] sm:$0xff]
  %v526 = vld [vmem:[%s3 + $0x2c0] sm:$0xff]
  %v527 = vld [vmem:[%s3 + $0x2c8] sm:$0xff]
  %v528 = vld [vmem:[%s3 + $0x2d0] sm:$0xff]
  %v529 = vld [vmem:[%s3 + $0x2d8] sm:$0xff]
  %v530 = vld [vmem:[%s3 + $0x2e0] sm:$0xff]
  %v531 = vld [vmem:[%s3 + $0x2e8] sm:$0xff]
  %v532 = vld [vmem:[%s3 + $0x2f0] sm:$0xff]
  %v533 = vld [vmem:[%s3 + $0x2f8] sm:$0xff]
  %v534 = vld [vmem:[%s3 + $0x300] sm:$0xff]
  %v535 = vld [vmem:[%s3 + $0x308] sm:$0xff]
  %v536 = vld [vmem:[%s3 + $0x310] sm:$0xff]
  %v537 = vld [vmem:[%s3 + $0x318] sm:$0xff]
  %v538 = vld [vmem:[%s3 + $0x320] sm:$0xff]
  %v539 = vld [vmem:[%s3 + $0x328] sm:$0xff]
  %v540 = vld [vmem:[%s3 + $0x330] sm:$0xff]
  %v541 = vld [vmem:[%s3 + $0x338] sm:$0xff]
  %v542 = vld [vmem:[%s3 + $0x340] sm:$0xff]
  %v543 = vld [vmem:[%s3 + $0x348] sm:$0xff]
  %v544 = vld [vmem:[%s3 + $0x350] sm:$0xff]
  %v545 = vld [vmem:[%s3 + $0x358] sm:$0xff]
  %v546 = vld [vmem:[%s3 + $0x360] sm:$0xff]
  %v547 = vld [vmem:[%s3 + $0x368] sm:$0xff]
  %v548 = vld [vmem:[%s3 + $0x370] sm:$0xff]
  %v549 = vld [vmem:[%s3 + $0x378] sm:$0xff]
  %v550 = vld [vmem:[%s3 + $0x380] sm:$0xff]
  %v551 = vld [vmem:[%s3 + $0x388] sm:$0xff]
  %v552 = vld [vmem:[%s3 + $0x390] sm:$0xff]
  %v553 = vld [vmem:[%s3 + $0x398] sm:$0xff]
  %v554 = vld [vmem:[%s3 + $0x3a0] sm:$0xff]
  %v555 = vld [vmem:[%s3 + $0x3a8] sm:$0xff]
  %v556 = vld [vmem:[%s3 + $0x3b0] sm:$0xff]
  %v557 = vld [vmem:[%s3 + $0x3b8] sm:$0xff]
  %v558 = vld [vmem:[%s3 + $0x3c0] sm:$0xff]
  %v559 = vld [vmem:[%s3 + $0x3c8] sm:$0xff]
  %v560 = vld [vmem:[%s3 + $0x3d0] sm:$0xff]
  %v561 = vld [vmem:[%s3 + $0x3d8] sm:$0xff]
  %v562 = vld [vmem:[%s3 + $0x3e0] sm:$0xff]
  %v563 = vld [vmem:[%s3 + $0x3e8] sm:$0xff]
  %v564 = vld [vmem:[%s3 + $0x3f0] sm:$0xff]
  %v565 = vld [vmem:[%s3 + $0x3f8] sm:$0xff]
  %v566 = vld [vmem:[%s3 + $0x400] sm:$0xff]
  %v567 = vld [vmem:[%s3 + $0x408] sm:$0xff]
  %v568 = vld [vmem:[%s3 + $0x410] sm:$0xff]
  %v569 = vld [vmem:[%s3 + $0x418] sm:$0xff]
  %v570 = vld [vmem:[%s3 + $0x420] sm:$0xff]
  %v571 = vld [vmem:[%s3 + $0x428] sm:$0xff]
  %v572 = vld [vmem:[%s3 + $0x430] sm:$0xff]
  %v573 = vld [vmem:[%s3 + $0x438] sm:$0xff]
  %v574 = vld [vmem:[%s3 + $0x440] sm:$0xff]
  %v575 = vld [vmem:[%s3 + $0x448] sm:$0xff]
  %v576 = vld [vmem:[%s3 + $0x450] sm:$0xff]
  %v577 = vld [vmem:[%s3 + $0x458] sm:$0xff]
  %v578 = vld [vmem:[%s3 + $0x460] sm:$0xff]
  %v579 = vld [vmem:[%s3 + $0x468] sm:$0xff]
  %v580 = vld [vmem:[%s3 + $0x470] sm:$0xff]
  %v581 = vld [vmem:[%s3 + $0x478] sm:$0xff]
  %v582 = vld [vmem:[%s3 + $0x480] sm:$0xff]
  %v583 = vld [vmem:[%s3 + $0x488] sm:$0xff]
  %v584 = vld [vmem:[%s3 + $0x490] sm:$0xff]
  %v585 = vld [vmem:[%s3 + $0x498] sm:$0xff]
  %v586 = vld [vmem:[%s3 + $0x4a0] sm:$0xff]
  %v587 = vld [vmem:[%s3 + $0x4a8] sm:$0xff]
  %v588 = vld [vmem:[%s3 + $0x4b0] sm:$0xff]
  %v589 = vld [vmem:[%s3 + $0x4b8] sm:$0xff]
  %v590 = vld [vmem:[%s3 + $0x4c0] sm:$0xff]
  %v591 = vld [vmem:[%s3 + $0x4c8] sm:$0xff]
  %v592 = vld [vmem:[%s3 + $0x4d0] sm:$0xff]
  %v593 = vld [vmem:[%s3 + $0x4d8] sm:$0xff]
  %v594 = vld [vmem:[%s3 + $0x4e0] sm:$0xff]
  %v595 = vld [vmem:[%s3 + $0x4e8] sm:$0xff]
  %v596 = vld [vmem:[%s3 + $0x4f0] sm:$0xff]
  %v597 = vld [vmem:[%s3 + $0x4f8] sm:$0xff]
  %598 = vmatprep.subr.mxu0 %v469
  %599 = vmatpush1.msra.mxu0 %v468
  %600 = vmatprep.subr.mxu0 %v467
  %601 = vmatpush1.msra.mxu0 %v466
  %602 = vmatprep.subr.mxu0 %v465
  %603 = vmatpush1.msra.mxu0 %v464
  %604 = vmatprep.subr.mxu0 %v463
  %605 = vmatpush1.msra.mxu0 %v462
  %606 = vmatprep.subr.mxu0 %v461
  %607 = vmatpush1.msra.mxu0 %v460
  %608 = vmatprep.subr.mxu0 %v459
  %609 = vmatpush1.msra.mxu0 %v458
  %610 = vmatprep.subr.mxu0 %v457
  %611 = vmatpush1.msra.mxu0 %v456
  %612 = vmatprep.subr.mxu0 %v455
  %613 = vmatpush1.msra.mxu0 %v454
  %614 = vmatprep.subr.mxu0 %v453
  %615 = vmatpush1.msra.mxu0 %v452
  %616 = vmatprep.subr.mxu0 %v451
  %617 = vmatpush1.msra.mxu0 %v450
  %618 = vmatprep.subr.mxu0 %v449
  %619 = vmatpush1.msra.mxu0 %v448
  %620 = vmatprep.subr.mxu0 %v447
  %621 = vmatpush1.msra.mxu0 %v446
  %622 = vmatprep.subr.mxu0 %v445
  %623 = vmatpush1.msra.mxu0 %v444
  %624 = vmatprep.subr.mxu0 %v443
  %625 = vmatpush1.msra.mxu0 %v442
  %626 = vmatprep.subr.mxu0 %v441
  %627 = vmatpush1.msra.mxu0 %v440
  %628 = vmatprep.subr.mxu0 %v439
  %629 = vmatpush1.msra.mxu0 %v438
  %630 = vmatprep.subr.mxu0 %v501
  %631 = vmatpush2.msra.mxu0 %v500
  %632 = vmatprep.subr.mxu0 %v499
  %633 = vmatpush2.msra.mxu0 %v498
  %634 = vmatprep.subr.mxu0 %v497
  %635 = vmatpush2.msra.mxu0 %v496
  %636 = vmatprep.subr.mxu0 %v495
  %637 = vmatpush2.msra.mxu0 %v494
  %638 = vmatprep.subr.mxu0 %v493
  %639 = vmatpush2.msra.mxu0 %v492
  %640 = vmatprep.subr.mxu0 %v491
  %641 = vmatpush2.msra.mxu0 %v490
  %642 = vmatprep.subr.mxu0 %v489
  %643 = vmatpush2.msra.mxu0 %v488
  %644 = vmatprep.subr.mxu0 %v487
  %645 = vmatpush2.msra.mxu0 %v486
  %646 = vmatprep.subr.mxu0 %v485
  %647 = vmatpush2.msra.mxu0 %v484
  %648 = vmatprep.subr.mxu0 %v483
  %649 = vmatpush2.msra.mxu0 %v482
  %650 = vmatprep.subr.mxu0 %v481
  %651 = vmatpush2.msra.mxu0 %v480
  %652 = vmatprep.subr.mxu0 %v479
  %653 = vmatpush2.msra.mxu0 %v478
  %654 = vmatprep.subr.mxu0 %v477
  %655 = vmatpush2.msra.mxu0 %v476
  %656 = vmatprep.subr.mxu0 %v475
  %657 = vmatpush2.msra.mxu0 %v474
  %658 = vmatprep.subr.mxu0 %v473
  %659 = vmatpush2.msra.mxu0 %v472
  %660 = vmatprep.subr.mxu0 %v471
  %661 = vmatpush2.msra.mxu0 %v470
  %662 = vmatprep.mubr.f32.mxu0 %v434
  %663 = vmatmul.mubr.f32.gmra.mxu0 %v433
  %v664 = vpop.f32.mrf.mxu0
  %v665 = vadd.f32 0.0, %v664
  %v666 = vpop.f32.mrf.mxu0
  %v667 = vadd.f32 0.0, %v666
  %668 = vdwg.mxu0
  %669 = vmatprep.subr.mxu0 %v533
  %670 = vmatpush1.msra.mxu0 %v532
  %671 = vmatprep.subr.mxu0 %v531
  %672 = vmatpush1.msra.mxu0 %v530
  %673 = vmatprep.subr.mxu0 %v529
  %674 = vmatpush1.msra.mxu0 %v528
  %675 = vmatprep.subr.mxu0 %v527
  %676 = vmatpush1.msra.mxu0 %v526
  %677 = vmatprep.subr.mxu0 %v525
  %678 = vmatpush1.msra.mxu0 %v524
  %679 = vmatprep.subr.mxu0 %v523
  %680 = vmatpush1.msra.mxu0 %v522
  %681 = vmatprep.subr.mxu0 %v521
  %682 = vmatpush1.msra.mxu0 %v520
  %683 = vmatprep.subr.mxu0 %v519
  %684 = vmatpush1.msra.mxu0 %v518
  %685 = vmatprep.subr.mxu0 %v517
  %686 = vmatpush1.msra.mxu0 %v516
  %687 = vmatprep.subr.mxu0 %v515
  %688 = vmatpush1.msra.mxu0 %v514
  %689 = vmatprep.subr.mxu0 %v513
  %690 = vmatpush1.msra.mxu0 %v512
  %691 = vmatprep.subr.mxu0 %v511
  %692 = vmatpush1.msra.mxu0 %v510
  %693 = vmatprep.subr.mxu0 %v509
  %694 = vmatpush1.msra.mxu0 %v508
  %695 = vmatprep.subr.mxu0 %v507
  %696 = vmatpush1.msra.mxu0 %v506
  %697 = vmatprep.subr.mxu0 %v505
  %698 = vmatpush1.msra.mxu0 %v504
  %699 = vmatprep.subr.mxu0 %v503
  %700 = vmatpush1.msra.mxu0 %v502
  %701 = vmatprep.subr.mxu0 %v565
  %702 = vmatpush2.msra.mxu0 %v564
  %703 = vmatprep.subr.mxu0 %v563
  %704 = vmatpush2.msra.mxu0 %v562
  %705 = vmatprep.subr.mxu0 %v561
  %706 = vmatpush2.msra.mxu0 %v560
  %707 = vmatprep.subr.mxu0 %v559
  %708 = vmatpush2.msra.mxu0 %v558
  %709 = vmatprep.subr.mxu0 %v557
  %710 = vmatpush2.msra.mxu0 %v556
  %711 = vmatprep.subr.mxu0 %v555
  %712 = vmatpush2.msra.mxu0 %v554
  %713 = vmatprep.subr.mxu0 %v553
  %714 = vmatpush2.msra.mxu0 %v552
  %715 = vmatprep.subr.mxu0 %v551
  %716 = vmatpush2.msra.mxu0 %v550
  %717 = vmatprep.subr.mxu0 %v549
  %718 = vmatpush2.msra.mxu0 %v548
  %719 = vmatprep.subr.mxu0 %v547
  %720 = vmatpush2.msra.mxu0 %v546
  %721 = vmatprep.subr.mxu0 %v545
  %722 = vmatpush2.msra.mxu0 %v544
  %723 = vmatprep.subr.mxu0 %v543
  %724 = vmatpush2.msra.mxu0 %v542
  %725 = vmatprep.subr.mxu0 %v541
  %726 = vmatpush2.msra.mxu0 %v540
  %727 = vmatprep.subr.mxu0 %v539
  %728 = vmatpush2.msra.mxu0 %v538
  %729 = vmatprep.subr.mxu0 %v537
  %730 = vmatpush2.msra.mxu0 %v536
  %731 = vmatprep.subr.mxu0 %v535
  %732 = vmatpush2.msra.mxu0 %v534
  %733 = vmatprep.mubr.f32.mxu0 %v436
  %734 = vmatmul.mubr.f32.gmra.mxu0 %v435
  %v735 = vpop.f32.mrf.mxu0
  %v736 = vadd.f32 %v665, %v735
  %v737 = vpop.f32.mrf.mxu0
  %v738 = vadd.f32 %v667, %v737
  %739 = vdwg.mxu0
  %740 = vmatprep.subr.mxu0 %v597
  %741 = vmatpush1.msra.mxu0 %v596
  %742 = vmatprep.subr.mxu0 %v595
  %743 = vmatpush1.msra.mxu0 %v594
  %744 = vmatprep.subr.mxu0 %v593
  %745 = vmatpush1.msra.mxu0 %v592
  %746 = vmatprep.subr.mxu0 %v591
  %747 = vmatpush1.msra.mxu0 %v590
  %748 = vmatprep.subr.mxu0 %v589
  %749 = vmatpush1.msra.mxu0 %v588
  %750 = vmatprep.subr.mxu0 %v587
  %751 = vmatpush1.msra.mxu0 %v586
  %752 = vmatprep.subr.mxu0 %v585
  %753 = vmatpush1.msra.mxu0 %v584
  %754 = vmatprep.subr.mxu0 %v583
  %755 = vmatpush1.msra.mxu0 %v582
  %756 = vmatprep.subr.mxu0 %v581
  %757 = vmatpush1.msra.mxu0 %v580
  %758 = vmatprep.subr.mxu0 %v579
  %759 = vmatpush1.msra.mxu0 %v578
  %760 = vmatprep.subr.mxu0 %v577
  %761 = vmatpush1.msra.mxu0 %v576
  %762 = vmatprep.subr.mxu0 %v575
  %763 = vmatpush1.msra.mxu0 %v574
  %764 = vmatprep.subr.mxu0 %v573
  %765 = vmatpush1.msra.mxu0 %v572
  %766 = vmatprep.subr.mxu0 %v571
  %767 = vmatpush1.msra.mxu0 %v570
  %768 = vmatprep.subr.mxu0 %v569
  %769 = vmatpush1.msra.mxu0 %v568
  %770 = vmatprep.subr.mxu0 %v567
  %771 = vmatpush1.msra.mxu0 %v566
  %772 = vmatprep.subr.mxu0 0.0
  %773 = vmatpush2.msra.mxu0 0.0
  %774 = vmatprep.subr.mxu0 0.0
  %775 = vmatpush2.msra.mxu0 0.0
  %776 = vmatprep.subr.mxu0 0.0
  %777 = vmatpush2.msra.mxu0 0.0
  %778 = vmatprep.subr.mxu0 0.0
  %779 = vmatpush2.msra.mxu0 0.0
  %780 = vmatprep.subr.mxu0 0.0
  %781 = vmatpush2.msra.mxu0 0.0
  %782 = vmatprep.subr.mxu0 0.0
  %783 = vmatpush2.msra.mxu0 0.0
  %784 = vmatprep.subr.mxu0 0.0
  %785 = vmatpush2.msra.mxu0 0.0
  %786 = vmatprep.subr.mxu0 0.0
  %787 = vmatpush2.msra.mxu0 0.0
  %788 = vmatprep.subr.mxu0 0.0
  %789 = vmatpush2.msra.mxu0 0.0
  %790 = vmatprep.subr.mxu0 0.0
  %791 = vmatpush2.msra.mxu0 0.0
  %792 = vmatprep.subr.mxu0 0.0
  %793 = vmatpush2.msra.mxu0 0.0
  %794 = vmatprep.subr.mxu0 0.0
  %795 = vmatpush2.msra.mxu0 0.0
  %796 = vmatprep.subr.mxu0 0.0
  %797 = vmatpush2.msra.mxu0 0.0
  %798 = vmatprep.subr.mxu0 0.0
  %799 = vmatpush2.msra.mxu0 0.0
  %800 = vmatprep.subr.mxu0 0.0
  %801 = vmatpush2.msra.mxu0 0.0
  %802 = vmatprep.subr.mxu0 0.0
  %803 = vmatpush2.msra.mxu0 0.0
  %804 = vmatprep.mubr.f32.mxu0 0.0
  %805 = vmatmul.mubr.f32.gmra.mxu0 %v437
  %v806 = vpop.f32.mrf.mxu0
  %v807 = vadd.f32 %v736, %v806
  %v808 = vpop.f32.mrf.mxu0
  %v809 = vadd.f32 %v738, %v808
  %810 = vdwg.mxu0
  %vm811 = vcmask 261120
  %v813 = vsel %vm811, %v40, 0
  %815 = vmatprep.subr.mxu0 %v72
  %816 = vmatpush1.msra.mxu0 %v71
  %817 = vmatprep.subr.mxu0 %v70
  %818 = vmatpush1.msra.mxu0 %v69
  %819 = vmatprep.subr.mxu0 %v68
  %820 = vmatpush1.msra.mxu0 %v67
  %821 = vmatprep.subr.mxu0 %v66
  %822 = vmatpush1.msra.mxu0 %v65
  %823 = vmatprep.subr.mxu0 %v64
  %824 = vmatpush1.msra.mxu0 %v63
  %825 = vmatprep.subr.mxu0 %v62
  %826 = vmatpush1.msra.mxu0 %v61
  %827 = vmatprep.subr.mxu0 %v60
  %828 = vmatpush1.msra.mxu0 %v59
  %829 = vmatprep.subr.mxu0 %v58
  %830 = vmatpush1.msra.mxu0 %v57
  %831 = vmatprep.subr.mxu0 %v56
  %832 = vmatpush1.msra.mxu0 %v55
  %833 = vmatprep.subr.mxu0 %v54
  %834 = vmatpush1.msra.mxu0 %v53
  %835 = vmatprep.subr.mxu0 %v52
  %836 = vmatpush1.msra.mxu0 %v51
  %837 = vmatprep.subr.mxu0 %v50
  %838 = vmatpush1.msra.mxu0 %v49
  %839 = vmatprep.subr.mxu0 %v48
  %840 = vmatpush1.msra.mxu0 %v47
  %841 = vmatprep.subr.mxu0 %v46
  %842 = vmatpush1.msra.mxu0 %v45
  %843 = vmatprep.subr.mxu0 %v44
  %844 = vmatpush1.msra.mxu0 %v43
  %845 = vmatprep.subr.mxu0 %v42
  %846 = vmatpush1.msra.mxu0 %v41
  %847 = vmatprep.subr.mxu0 %v104
  %848 = vmatpush2.msra.mxu0 %v103
  %849 = vmatprep.subr.mxu0 %v102
  %850 = vmatpush2.msra.mxu0 %v101
  %851 = vmatprep.subr.mxu0 %v100
  %852 = vmatpush2.msra.mxu0 %v99
  %853 = vmatprep.subr.mxu0 %v98
  %854 = vmatpush2.msra.mxu0 %v97
  %855 = vmatprep.subr.mxu0 %v96
  %856 = vmatpush2.msra.mxu0 %v95
  %857 = vmatprep.subr.mxu0 %v94
  %858 = vmatpush2.msra.mxu0 %v93
  %859 = vmatprep.subr.mxu0 %v92
  %860 = vmatpush2.msra.mxu0 %v91
  %861 = vmatprep.subr.mxu0 %v90
  %862 = vmatpush2.msra.mxu0 %v89
  %863 = vmatprep.subr.mxu0 %v88
  %864 = vmatpush2.msra.mxu0 %v87
  %865 = vmatprep.subr.mxu0 %v86
  %866 = vmatpush2.msra.mxu0 %v85
  %867 = vmatprep.subr.mxu0 %v84
  %868 = vmatpush2.msra.mxu0 %v83
  %869 = vmatprep.subr.mxu0 %v82
  %870 = vmatpush2.msra.mxu0 %v81
  %871 = vmatprep.subr.mxu0 %v80
  %872 = vmatpush2.msra.mxu0 %v79
  %873 = vmatprep.subr.mxu0 %v78
  %874 = vmatpush2.msra.mxu0 %v77
  %875 = vmatprep.subr.mxu0 %v76
  %876 = vmatpush2.msra.mxu0 %v75
  %877 = vmatprep.subr.mxu0 %v74
  %878 = vmatpush2.msra.mxu0 %v73
  %879 = vmatprep.mubr.f32.mxu0 %v29
  %880 = vmatmul.mubr.f32.gmra.mxu0 %v28
  %v881 = vpop.f32.mrf.mxu0
  %v882 = vadd.f32 %v807, %v881
  %v883 = vpop.f32.mrf.mxu0
  %v884 = vadd.f32 %v809, %v883
  %885 = vdwg.mxu0
  %886 = vmatprep.subr.mxu0 %v136
  %887 = vmatpush1.msra.mxu0 %v135
  %888 = vmatprep.subr.mxu0 %v134
  %889 = vmatpush1.msra.mxu0 %v133
  %890 = vmatprep.subr.mxu0 %v132
  %891 = vmatpush1.msra.mxu0 %v131
  %892 = vmatprep.subr.mxu0 %v130
  %893 = vmatpush1.msra.mxu0 %v129
  %894 = vmatprep.subr.mxu0 %v128
  %895 = vmatpush1.msra.mxu0 %v127
  %896 = vmatprep.subr.mxu0 %v126
  %897 = vmatpush1.msra.mxu0 %v125
  %898 = vmatprep.subr.mxu0 %v124
  %899 = vmatpush1.msra.mxu0 %v123
  %900 = vmatprep.subr.mxu0 %v122
  %901 = vmatpush1.msra.mxu0 %v121
  %902 = vmatprep.subr.mxu0 %v120
  %903 = vmatpush1.msra.mxu0 %v119
  %904 = vmatprep.subr.mxu0 %v118
  %905 = vmatpush1.msra.mxu0 %v117
  %906 = vmatprep.subr.mxu0 %v116
  %907 = vmatpush1.msra.mxu0 %v115
  %908 = vmatprep.subr.mxu0 %v114
  %909 = vmatpush1.msra.mxu0 %v113
  %910 = vmatprep.subr.mxu0 %v112
  %911 = vmatpush1.msra.mxu0 %v111
  %912 = vmatprep.subr.mxu0 %v110
  %913 = vmatpush1.msra.mxu0 %v109
  %914 = vmatprep.subr.mxu0 %v108
  %915 = vmatpush1.msra.mxu0 %v107
  %916 = vmatprep.subr.mxu0 %v106
  %917 = vmatpush1.msra.mxu0 %v105
  %918 = vmatprep.subr.mxu0 %v168
  %919 = vmatpush2.msra.mxu0 %v167
  %920 = vmatprep.subr.mxu0 %v166
  %921 = vmatpush2.msra.mxu0 %v165
  %922 = vmatprep.subr.mxu0 %v164
  %923 = vmatpush2.msra.mxu0 %v163
  %924 = vmatprep.subr.mxu0 %v162
  %925 = vmatpush2.msra.mxu0 %v161
  %926 = vmatprep.subr.mxu0 %v160
  %927 = vmatpush2.msra.mxu0 %v159
  %928 = vmatprep.subr.mxu0 %v158
  %929 = vmatpush2.msra.mxu0 %v157
  %930 = vmatprep.subr.mxu0 %v156
  %931 = vmatpush2.msra.mxu0 %v155
  %932 = vmatprep.subr.mxu0 %v154
  %933 = vmatpush2.msra.mxu0 %v153
  %934 = vmatprep.subr.mxu0 %v152
  %935 = vmatpush2.msra.mxu0 %v151
  %936 = vmatprep.subr.mxu0 %v150
  %937 = vmatpush2.msra.mxu0 %v149
  %938 = vmatprep.subr.mxu0 %v148
  %939 = vmatpush2.msra.mxu0 %v147
  %940 = vmatprep.subr.mxu0 %v146
  %941 = vmatpush2.msra.mxu0 %v145
  %942 = vmatprep.subr.mxu0 %v144
  %943 = vmatpush2.msra.mxu0 %v143
  %944 = vmatprep.subr.mxu0 %v142
  %945 = vmatpush2.msra.mxu0 %v141
  %946 = vmatprep.subr.mxu0 %v140
  %947 = vmatpush2.msra.mxu0 %v139
  %948 = vmatprep.subr.mxu0 %v138
  %949 = vmatpush2.msra.mxu0 %v137
  %950 = vmatprep.mubr.f32.mxu0 %v31
  %951 = vmatmul.mubr.f32.gmra.mxu0 %v30
  %v952 = vpop.f32.mrf.mxu0
  %v953 = vadd.f32 %v882, %v952
  %v954 = vpop.f32.mrf.mxu0
  %v955 = vadd.f32 %v884, %v954
  %956 = vdwg.mxu0
  %957 = vmatprep.subr.mxu0 %v200
  %958 = vmatpush1.msra.mxu0 %v199
  %959 = vmatprep.subr.mxu0 %v198
  %960 = vmatpush1.msra.mxu0 %v197
  %961 = vmatprep.subr.mxu0 %v196
  %962 = vmatpush1.msra.mxu0 %v195
  %963 = vmatprep.subr.mxu0 %v194
  %964 = vmatpush1.msra.mxu0 %v193
  %965 = vmatprep.subr.mxu0 %v192
  %966 = vmatpush1.msra.mxu0 %v191
  %967 = vmatprep.subr.mxu0 %v190
  %968 = vmatpush1.msra.mxu0 %v189
  %969 = vmatprep.subr.mxu0 %v188
  %970 = vmatpush1.msra.mxu0 %v187
  %971 = vmatprep.subr.mxu0 %v186
  %972 = vmatpush1.msra.mxu0 %v185
  %973 = vmatprep.subr.mxu0 %v184
  %974 = vmatpush1.msra.mxu0 %v183
  %975 = vmatprep.subr.mxu0 %v182
  %976 = vmatpush1.msra.mxu0 %v181
  %977 = vmatprep.subr.mxu0 %v180
  %978 = vmatpush1.msra.mxu0 %v179
  %979 = vmatprep.subr.mxu0 %v178
  %980 = vmatpush1.msra.mxu0 %v177
  %981 = vmatprep.subr.mxu0 %v176
  %982 = vmatpush1.msra.mxu0 %v175
  %983 = vmatprep.subr.mxu0 %v174
  %984 = vmatpush1.msra.mxu0 %v173
  %985 = vmatprep.subr.mxu0 %v172
  %986 = vmatpush1.msra.mxu0 %v171
  %987 = vmatprep.subr.mxu0 %v170
  %988 = vmatpush1.msra.mxu0 %v169
  %989 = vmatprep.subr.mxu0 %v232
  %990 = vmatpush2.msra.mxu0 %v231
  %991 = vmatprep.subr.mxu0 %v230
  %992 = vmatpush2.msra.mxu0 %v229
  %993 = vmatprep.subr.mxu0 %v228
  %994 = vmatpush2.msra.mxu0 %v227
  %995 = vmatprep.subr.mxu0 %v226
  %996 = vmatpush2.msra.mxu0 %v225
  %997 = vmatprep.subr.mxu0 %v224
  %998 = vmatpush2.msra.mxu0 %v223
  %999 = vmatprep.subr.mxu0 %v222
  %1000 = vmatpush2.msra.mxu0 %v221
  %1001 = vmatprep.subr.mxu0 %v220
  %1002 = vmatpush2.msra.mxu0 %v219
  %1003 = vmatprep.subr.mxu0 %v218
  %1004 = vmatpush2.msra.mxu0 %v217
  %1005 = vmatprep.subr.mxu0 %v216
  %1006 = vmatpush2.msra.mxu0 %v215
  %1007 = vmatprep.subr.mxu0 %v214
  %1008 = vmatpush2.msra.mxu0 %v213
  %1009 = vmatprep.subr.mxu0 %v212
  %1010 = vmatpush2.msra.mxu0 %v211
  %1011 = vmatprep.subr.mxu0 %v210
  %1012 = vmatpush2.msra.mxu0 %v209
  %1013 = vmatprep.subr.mxu0 %v208
  %1014 = vmatpush2.msra.mxu0 %v207
  %1015 = vmatprep.subr.mxu0 %v206
  %1016 = vmatpush2.msra.mxu0 %v205
  %1017 = vmatprep.subr.mxu0 %v204
  %1018 = vmatpush2.msra.mxu0 %v203
  %1019 = vmatprep.subr.mxu0 %v202
  %1020 = vmatpush2.msra.mxu0 %v201
  %1021 = vmatprep.mubr.f32.mxu0 %v33
  %1022 = vmatmul.mubr.f32.gmra.mxu0 %v32
  %v1023 = vpop.f32.mrf.mxu0
  %v1024 = vadd.f32 %v953, %v1023
  %v1025 = vpop.f32.mrf.mxu0
  %v1026 = vadd.f32 %v955, %v1025
  %1027 = vdwg.mxu0
  %1028 = vmatprep.subr.mxu0 %v264
  %1029 = vmatpush1.msra.mxu0 %v263
  %1030 = vmatprep.subr.mxu0 %v262
  %1031 = vmatpush1.msra.mxu0 %v261
  %1032 = vmatprep.subr.mxu0 %v260
  %1033 = vmatpush1.msra.mxu0 %v259
  %1034 = vmatprep.subr.mxu0 %v258
  %1035 = vmatpush1.msra.mxu0 %v257
  %1036 = vmatprep.subr.mxu0 %v256
  %1037 = vmatpush1.msra.mxu0 %v255
  %1038 = vmatprep.subr.mxu0 %v254
  %1039 = vmatpush1.msra.mxu0 %v253
  %1040 = vmatprep.subr.mxu0 %v252
  %1041 = vmatpush1.msra.mxu0 %v251
  %1042 = vmatprep.subr.mxu0 %v250
  %1043 = vmatpush1.msra.mxu0 %v249
  %1044 = vmatprep.subr.mxu0 %v248
  %1045 = vmatpush1.msra.mxu0 %v247
  %1046 = vmatprep.subr.mxu0 %v246
  %1047 = vmatpush1.msra.mxu0 %v245
  %1048 = vmatprep.subr.mxu0 %v244
  %1049 = vmatpush1.msra.mxu0 %v243
  %1050 = vmatprep.subr.mxu0 %v242
  %1051 = vmatpush1.msra.mxu0 %v241
  %1052 = vmatprep.subr.mxu0 %v240
  %1053 = vmatpush1.msra.mxu0 %v239
  %1054 = vmatprep.subr.mxu0 %v238
  %1055 = vmatpush1.msra.mxu0 %v237
  %1056 = vmatprep.subr.mxu0 %v236
  %1057 = vmatpush1.msra.mxu0 %v235
  %1058 = vmatprep.subr.mxu0 %v234
  %1059 = vmatpush1.msra.mxu0 %v233
  %1060 = vmatprep.subr.mxu0 %v296
  %1061 = vmatpush2.msra.mxu0 %v295
  %1062 = vmatprep.subr.mxu0 %v294
  %1063 = vmatpush2.msra.mxu0 %v293
  %1064 = vmatprep.subr.mxu0 %v292
  %1065 = vmatpush2.msra.mxu0 %v291
  %1066 = vmatprep.subr.mxu0 %v290
  %1067 = vmatpush2.msra.mxu0 %v289
  %1068 = vmatprep.subr.mxu0 %v288
  %1069 = vmatpush2.msra.mxu0 %v287
  %1070 = vmatprep.subr.mxu0 %v286
  %1071 = vmatpush2.msra.mxu0 %v285
  %1072 = vmatprep.subr.mxu0 %v284
  %1073 = vmatpush2.msra.mxu0 %v283
  %1074 = vmatprep.subr.mxu0 %v282
  %1075 = vmatpush2.msra.mxu0 %v281
  %1076 = vmatprep.subr.mxu0 %v280
  %1077 = vmatpush2.msra.mxu0 %v279
  %1078 = vmatprep.subr.mxu0 %v278
  %1079 = vmatpush2.msra.mxu0 %v277
  %1080 = vmatprep.subr.mxu0 %v276
  %1081 = vmatpush2.msra.mxu0 %v275
  %1082 = vmatprep.subr.mxu0 %v274
  %1083 = vmatpush2.msra.mxu0 %v273
  %1084 = vmatprep.subr.mxu0 %v272
  %1085 = vmatpush2.msra.mxu0 %v271
  %1086 = vmatprep.subr.mxu0 %v270
  %1087 = vmatpush2.msra.mxu0 %v269
  %1088 = vmatprep.subr.mxu0 %v268
  %1089 = vmatpush2.msra.mxu0 %v267
  %1090 = vmatprep.subr.mxu0 %v266
  %1091 = vmatpush2.msra.mxu0 %v265
  %1092 = vmatprep.mubr.f32.mxu0 %v35
  %1093 = vmatmul.mubr.f32.gmra.mxu0 %v34
  %v1094 = vpop.f32.mrf.mxu0
  %v1095 = vadd.f32 %v1024, %v1094
  %v1096 = vpop.f32.mrf.mxu0
  %v1097 = vadd.f32 %v1026, %v1096
  %1098 = vdwg.mxu0
  %1099 = vmatprep.subr.mxu0 %v328
  %1100 = vmatpush1.msra.mxu0 %v327
  %1101 = vmatprep.subr.mxu0 %v326
  %1102 = vmatpush1.msra.mxu0 %v325
  %1103 = vmatprep.subr.mxu0 %v324
  %1104 = vmatpush1.msra.mxu0 %v323
  %1105 = vmatprep.subr.mxu0 %v322
  %1106 = vmatpush1.msra.mxu0 %v321
  %1107 = vmatprep.subr.mxu0 %v320
  %1108 = vmatpush1.msra.mxu0 %v319
  %1109 = vmatprep.subr.mxu0 %v318
  %1110 = vmatpush1.msra.mxu0 %v317
  %1111 = vmatprep.subr.mxu0 %v316
  %1112 = vmatpush1.msra.mxu0 %v315
  %1113 = vmatprep.subr.mxu0 %v314
  %1114 = vmatpush1.msra.mxu0 %v313
  %1115 = vmatprep.subr.mxu0 %v312
  %1116 = vmatpush1.msra.mxu0 %v311
  %1117 = vmatprep.subr.mxu0 %v310
  %1118 = vmatpush1.msra.mxu0 %v309
  %1119 = vmatprep.subr.mxu0 %v308
  %1120 = vmatpush1.msra.mxu0 %v307
  %1121 = vmatprep.subr.mxu0 %v306
  %1122 = vmatpush1.msra.mxu0 %v305
  %1123 = vmatprep.subr.mxu0 %v304
  %1124 = vmatpush1.msra.mxu0 %v303
  %1125 = vmatprep.subr.mxu0 %v302
  %1126 = vmatpush1.msra.mxu0 %v301
  %1127 = vmatprep.subr.mxu0 %v300
  %1128 = vmatpush1.msra.mxu0 %v299
  %1129 = vmatprep.subr.mxu0 %v298
  %1130 = vmatpush1.msra.mxu0 %v297
  %1131 = vmatprep.subr.mxu0 %v360
  %1132 = vmatpush2.msra.mxu0 %v359
  %1133 = vmatprep.subr.mxu0 %v358
  %1134 = vmatpush2.msra.mxu0 %v357
  %1135 = vmatprep.subr.mxu0 %v356
  %1136 = vmatpush2.msra.mxu0 %v355
  %1137 = vmatprep.subr.mxu0 %v354
  %1138 = vmatpush2.msra.mxu0 %v353
  %1139 = vmatprep.subr.mxu0 %v352
  %1140 = vmatpush2.msra.mxu0 %v351
  %1141 = vmatprep.subr.mxu0 %v350
  %1142 = vmatpush2.msra.mxu0 %v349
  %1143 = vmatprep.subr.mxu0 %v348
  %1144 = vmatpush2.msra.mxu0 %v347
  %1145 = vmatprep.subr.mxu0 %v346
  %1146 = vmatpush2.msra.mxu0 %v345
  %1147 = vmatprep.subr.mxu0 %v344
  %1148 = vmatpush2.msra.mxu0 %v343
  %1149 = vmatprep.subr.mxu0 %v342
  %1150 = vmatpush2.msra.mxu0 %v341
  %1151 = vmatprep.subr.mxu0 %v340
  %1152 = vmatpush2.msra.mxu0 %v339
  %1153 = vmatprep.subr.mxu0 %v338
  %1154 = vmatpush2.msra.mxu0 %v337
  %1155 = vmatprep.subr.mxu0 %v336
  %1156 = vmatpush2.msra.mxu0 %v335
  %1157 = vmatprep.subr.mxu0 %v334
  %1158 = vmatpush2.msra.mxu0 %v333
  %1159 = vmatprep.subr.mxu0 %v332
  %1160 = vmatpush2.msra.mxu0 %v331
  %1161 = vmatprep.subr.mxu0 %v330
  %1162 = vmatpush2.msra.mxu0 %v329
  %1163 = vmatprep.mubr.f32.mxu0 %v37
  %1164 = vmatmul.mubr.f32.gmra.mxu0 %v36
  %v1165 = vpop.f32.mrf.mxu0
  %v1166 = vadd.f32 %v1095, %v1165
  %v1167 = vpop.f32.mrf.mxu0
  %v1168 = vadd.f32 %v1097, %v1167
  %1169 = vdwg.mxu0
  %1170 = vmatprep.subr.mxu0 %v392
  %1171 = vmatpush1.msra.mxu0 %v391
  %1172 = vmatprep.subr.mxu0 %v390
  %1173 = vmatpush1.msra.mxu0 %v389
  %1174 = vmatprep.subr.mxu0 %v388
  %1175 = vmatpush1.msra.mxu0 %v387
  %1176 = vmatprep.subr.mxu0 %v386
  %1177 = vmatpush1.msra.mxu0 %v385
  %1178 = vmatprep.subr.mxu0 %v384
  %1179 = vmatpush1.msra.mxu0 %v383
  %1180 = vmatprep.subr.mxu0 %v382
  %1181 = vmatpush1.msra.mxu0 %v381
  %1182 = vmatprep.subr.mxu0 %v380
  %1183 = vmatpush1.msra.mxu0 %v379
  %1184 = vmatprep.subr.mxu0 %v378
  %1185 = vmatpush1.msra.mxu0 %v377
  %1186 = vmatprep.subr.mxu0 %v376
  %1187 = vmatpush1.msra.mxu0 %v375
  %1188 = vmatprep.subr.mxu0 %v374
  %1189 = vmatpush1.msra.mxu0 %v373
  %1190 = vmatprep.subr.mxu0 %v372
  %1191 = vmatpush1.msra.mxu0 %v371
  %1192 = vmatprep.subr.mxu0 %v370
  %1193 = vmatpush1.msra.mxu0 %v369
  %1194 = vmatprep.subr.mxu0 %v368
  %1195 = vmatpush1.msra.mxu0 %v367
  %1196 = vmatprep.subr.mxu0 %v366
  %1197 = vmatpush1.msra.mxu0 %v365
  %1198 = vmatprep.subr.mxu0 %v364
  %1199 = vmatpush1.msra.mxu0 %v363
  %1200 = vmatprep.subr.mxu0 %v362
  %1201 = vmatpush1.msra.mxu0 %v361
  %1202 = vmatprep.subr.mxu0 %v424
  %1203 = vmatpush2.msra.mxu0 %v423
  %1204 = vmatprep.subr.mxu0 %v422
  %1205 = vmatpush2.msra.mxu0 %v421
  %1206 = vmatprep.subr.mxu0 %v420
  %1207 = vmatpush2.msra.mxu0 %v419
  %1208 = vmatprep.subr.mxu0 %v418
  %1209 = vmatpush2.msra.mxu0 %v417
  %1210 = vmatprep.subr.mxu0 %v416
  %1211 = vmatpush2.msra.mxu0 %v415
  %1212 = vmatprep.subr.mxu0 %v414
  %1213 = vmatpush2.msra.mxu0 %v413
  %1214 = vmatprep.subr.mxu0 %v412
  %1215 = vmatpush2.msra.mxu0 %v411
  %1216 = vmatprep.subr.mxu0 %v410
  %1217 = vmatpush2.msra.mxu0 %v409
  %1218 = vmatprep.subr.mxu0 %v408
  %1219 = vmatpush2.msra.mxu0 %v407
  %1220 = vmatprep.subr.mxu0 %v406
  %1221 = vmatpush2.msra.mxu0 %v405
  %1222 = vmatprep.subr.mxu0 %v404
  %1223 = vmatpush2.msra.mxu0 %v403
  %1224 = vmatprep.subr.mxu0 %v402
  %1225 = vmatpush2.msra.mxu0 %v401
  %1226 = vmatprep.subr.mxu0 %v400
  %1227 = vmatpush2.msra.mxu0 %v399
  %1228 = vmatprep.subr.mxu0 %v398
  %1229 = vmatpush2.msra.mxu0 %v397
  %1230 = vmatprep.subr.mxu0 %v396
  %1231 = vmatpush2.msra.mxu0 %v395
  %1232 = vmatprep.subr.mxu0 %v394
  %1233 = vmatpush2.msra.mxu0 %v393
  %1234 = vmatprep.mubr.f32.mxu0 %v39
  %1235 = vmatmul.mubr.f32.gmra.mxu0 %v38
  %v1236 = vpop.f32.mrf.mxu0
  %v1237 = vadd.f32 %v1166, %v1236
  %v1238 = vpop.f32.mrf.mxu0
  %v1239 = vadd.f32 %v1168, %v1238
  %1240 = vdwg.mxu0
  %1241 = vmatprep.subr.mxu0 0.0
  %1242 = vmatpush1.msra.mxu0 0.0
  %1243 = vmatprep.subr.mxu0 0.0
  %1244 = vmatpush1.msra.mxu0 0.0
  %1245 = vmatprep.subr.mxu0 0.0
  %1246 = vmatpush1.msra.mxu0 0.0
  %1247 = vmatprep.subr.mxu0 0.0
  %1248 = vmatpush1.msra.mxu0 0.0
  %1249 = vmatprep.subr.mxu0 0.0
  %1250 = vmatpush1.msra.mxu0 0.0
  %1251 = vmatprep.subr.mxu0 0.0
  %1252 = vmatpush1.msra.mxu0 0.0
  %1253 = vmatprep.subr.mxu0 0.0
  %1254 = vmatpush1.msra.mxu0 0.0
  %1255 = vmatprep.subr.mxu0 0.0
  %1256 = vmatpush1.msra.mxu0 0.0
  %1257 = vmatprep.subr.mxu0 0.0
  %1258 = vmatpush1.msra.mxu0 0.0
  %1259 = vmatprep.subr.mxu0 0.0
  %1260 = vmatpush1.msra.mxu0 0.0
  %1261 = vmatprep.subr.mxu0 0.0
  %1262 = vmatpush1.msra.mxu0 0.0
  %1263 = vmatprep.subr.mxu0 0.0
  %1264 = vmatpush1.msra.mxu0 0.0
  %1265 = vmatprep.subr.mxu0 %v432
  %1266 = vmatpush1.msra.mxu0 %v431
  %1267 = vmatprep.subr.mxu0 %v430
  %1268 = vmatpush1.msra.mxu0 %v429
  %1269 = vmatprep.subr.mxu0 %v428
  %1270 = vmatpush1.msra.mxu0 %v427
  %1271 = vmatprep.subr.mxu0 %v426
  %1272 = vmatpush1.msra.mxu0 %v425
  %1273 = vmatprep.subr.mxu0 0.0
  %1274 = vmatpush2.msra.mxu0 0.0
  %1275 = vmatprep.subr.mxu0 0.0
  %1276 = vmatpush2.msra.mxu0 0.0
  %1277 = vmatprep.subr.mxu0 0.0
  %1278 = vmatpush2.msra.mxu0 0.0
  %1279 = vmatprep.subr.mxu0 0.0
  %1280 = vmatpush2.msra.mxu0 0.0
  %1281 = vmatprep.subr.mxu0 0.0
  %1282 = vmatpush2.msra.mxu0 0.0
  %1283 = vmatprep.subr.mxu0 0.0
  %1284 = vmatpush2.msra.mxu0 0.0
  %1285 = vmatprep.subr.mxu0 0.0
  %1286 = vmatpush2.msra.mxu0 0.0
  %1287 = vmatprep.subr.mxu0 0.0
  %1288 = vmatpush2.msra.mxu0 0.0
  %1289 = vmatprep.subr.mxu0 0.0
  %1290 = vmatpush2.msra.mxu0 0.0
  %1291 = vmatprep.subr.mxu0 0.0
  %1292 = vmatpush2.msra.mxu0 0.0
  %1293 = vmatprep.subr.mxu0 0.0
  %1294 = vmatpush2.msra.mxu0 0.0
  %1295 = vmatprep.subr.mxu0 0.0
  %1296 = vmatpush2.msra.mxu0 0.0
  %1297 = vmatprep.subr.mxu0 0.0
  %1298 = vmatpush2.msra.mxu0 0.0
  %1299 = vmatprep.subr.mxu0 0.0
  %1300 = vmatpush2.msra.mxu0 0.0
  %1301 = vmatprep.subr.mxu0 0.0
  %1302 = vmatpush2.msra.mxu0 0.0
  %1303 = vmatprep.subr.mxu0 0.0
  %1304 = vmatpush2.msra.mxu0 0.0
  %1305 = vmatprep.mubr.f32.mxu0 0.0
  %1306 = vmatmul.mubr.f32.gmra.mxu0 %v813
  %v1307 = vpop.f32.mrf.mxu0
  %v1308 = vadd.f32 %v1237, %v1307
  %v1309 = vpop.f32.mrf.mxu0
  %v1310 = vadd.f32 %v1239, %v1309
  %1311 = vdwg.mxu0
  %v1312 = vld [vmem:[%s4] sm:$0x3]
  %v1314 = vlaneseq
  %v1315 = vshrl.u32 %v1314, 7
  %v1316 = vsub.s32 0, %v1315
  %v1317 = vrot.slane %v1312, %v1316
  %v1318 = vlaneseq
  %v1319 = vshrl.u32 %v1318, 7
  %v1320 = vsub.s32 1, %v1319
  %v1321 = vrot.slane %v1312, %v1320
  %v1324 = vadd.f32 %v1308, %v1317
  %v1325 = vadd.f32 %v1310, %v1321
  %v1326 = vmax.f32 %v1324, 0.0
  %v1327 = vmax.f32 %v1325, 0.0
  %v1328 = vld [vmem:[%s5] sm:$0x3]
  %v1330 = vlaneseq
  %v1331 = vshrl.u32 %v1330, 7
  %v1332 = vsub.s32 0, %v1331
  %v1333 = vrot.slane %v1328, %v1332
  %v1334 = vlaneseq
  %v1335 = vshrl.u32 %v1334, 7
  %v1336 = vsub.s32 1, %v1335
  %v1337 = vrot.slane %v1328, %v1336
  %v1340 = vmul.f32 %v1326, %v1333
  %v1341 = vmul.f32 %v1327, %v1337
  %v1342 = vadd.f32 %v1340, %v1341
  %1343 = vadd.xlane.f32.xlu0 %v1342
  %v1344 = vpop.xlane.xlu0 %1343
  %v1345 = vld [vmem:[#allocation2] sm:$0x1]
  %v1347 = vlaneseq
  %v1348 = vshrl.u32 %v1347, 7
  %v1349 = vsub.s32 0, %v1348
  %v1350 = vrot.slane %v1345, %v1349
  %v1352 = vadd.f32 %v1344, %v1350
  %vm1353 = vcmask 7168
  %1354 = vst.msk [vmem:[%s7] sm:$0xff] %vm1353, %v1352
  // Predicated region
  $region30: #{critic_net_forward.3} parent=0 // pred_check
    _
  $region31: #{critic_net_forward.3} parent=0 // pred_check_branch
    %1356 = sbr.rel (0) target = $region33
  $region32: #{critic_net_forward.3} parent=0 // pred_region
    _
  $region33: #{critic_net_forward.3} parent=0 // pred_fallthru
    _
  // Predicated region
  $region34: #{critic_net_forward.3} parent=0 // pred_check
    _
  $region35: #{critic_net_forward.3} parent=0 // pred_check_branch
    %1358 = sbr.rel (0) target = $region37
  $region36: #{critic_net_forward.3} parent=0 // pred_region
    _
  $region37: #{critic_net_forward.3} parent=0 // pred_fallthru
    _

// kernel: critic_net_forward.2
$region0: #{critic_net_forward.2}
  #allocation0 [shape = 'u32[]', space=smem, size = 0x4, offset = 0x4, fixed_abs, tag = 'smem constant byte address 0x4 - core index']
  #allocation1 [shape = 'u32[144,128]{1,0:T(1,128)}', space=vmem, size = 0x12000, scoped, tag = 'internal scratch']
  #allocation2 [shape = 'f32[392,16]{1,0:T(8,128)}', space=vmem, size = 0x31000, scoped, tag = 'scratch operand']
  #allocation3 [shape = 'f32[384,64]{1,0:T(8,128)}', space=vmem, size = 0x30000, scoped, tag = 'scratch operand']
  %s0 = inlined_call_operand.vmem [shape: f32[392,243], index: 0, kind: input, shape index: {}]
  %s1 = inlined_call_operand.vmem [shape: f32[243,16], index: 1, kind: input, shape index: {}]
  %s2 = inlined_call_operand.vmem [shape: f32[1,16], index: 2, kind: input, shape index: {}]
  %s3 = inlined_call_operand.vmem [shape: f32[64,32], index: 3, kind: input, shape index: {}]
  %s4 = inlined_call_operand.vmem [shape: f32[1,32], index: 4, kind: input, shape index: {}]
  %s5 = inlined_call_operand.vmem [shape: f32[392,32], index: 5, kind: output, shape index: {}]
  %s6 = sld [smem:[#allocation0]]
  $region30: #{critic_net_forward.2} parent=0
    _
  %s8 = ssub.s32 1, %s6
  %s9 = scalar_select 0, %s8, %s6
  // Predicated region
  $region2: #{critic_net_forward.2} parent=0 // pred_check
    _
  $region3: #{critic_net_forward.2} parent=0 // pred_check_branch
    %11 = sbr.rel (0) target = $region5
  $region4: #{critic_net_forward.2} parent=0 // pred_region
    _
  $region5: #{critic_net_forward.2} parent=0 // pred_fallthru
    _
  // Predicated region
  $region6: #{critic_net_forward.2} parent=0 // pred_check
    _
  $region7: #{critic_net_forward.2} parent=0 // pred_check_branch
    %13 = sbr.rel (0) target = $region9
  $region8: #{critic_net_forward.2} parent=0 // pred_region
    _
  $region9: #{critic_net_forward.2} parent=0 // pred_fallthru
    _
  // Predicated region
  $region10: #{critic_net_forward.2} parent=0 // pred_check
    _
  $region11: #{critic_net_forward.2} parent=0 // pred_check_branch
    %15 = sbr.rel (0) target = $region13
  $region12: #{critic_net_forward.2} parent=0 // pred_region
    _
  $region13: #{critic_net_forward.2} parent=0 // pred_fallthru
    _
  // Predicated region
  $region14: #{critic_net_forward.2} parent=0 // pred_check
    _
  $region15: #{critic_net_forward.2} parent=0 // pred_check_branch
    %17 = sbr.rel (0) target = $region17
  $region16: #{critic_net_forward.2} parent=0 // pred_region
    _
  $region17: #{critic_net_forward.2} parent=0 // pred_fallthru
    _
  // Predicated region
  $region18: #{critic_net_forward.2} parent=0 // pred_check
    _
  $region19: #{critic_net_forward.2} parent=0 // pred_check_branch
    %19 = sbr.rel (0) target = $region21
  $region20: #{critic_net_forward.2} parent=0 // pred_region
    _
  $region21: #{critic_net_forward.2} parent=0 // pred_fallthru
    _
  %v20 = vld [vmem:[%s0] sm:$0xff]
  %v21 = vld [vmem:[%s0 + $0x8] sm:$0xff]
  %v22 = vld [vmem:[%s0 + $0x10] sm:$0xff]
  %v23 = vld [vmem:[%s0 + $0x18] sm:$0xff]
  %v24 = vld [vmem:[%s0 + $0x20] sm:$0xff]
  %v25 = vld [vmem:[%s0 + $0x28] sm:$0xff]
  %v26 = vld [vmem:[%s0 + $0x30] sm:$0xff]
  %v27 = vld [vmem:[%s0 + $0x38] sm:$0xff]
  %v28 = vld [vmem:[%s0 + $0x40] sm:$0xff]
  %v29 = vld [vmem:[%s0 + $0x48] sm:$0xff]
  %v30 = vld [vmem:[%s0 + $0x50] sm:$0xff]
  %v31 = vld [vmem:[%s0 + $0x58] sm:$0xff]
  %v32 = vld [vmem:[%s0 + $0x60] sm:$0xff]
  %v33 = vld [vmem:[%s0 + $0x68] sm:$0xff]
  %v34 = vld [vmem:[%s0 + $0x70] sm:$0xff]
  %v35 = vld [vmem:[%s0 + $0x78] sm:$0xff]
  %v36 = vld [vmem:[%s0 + $0x80] sm:$0xff]
  %v37 = vld [vmem:[%s0 + $0x88] sm:$0xff]
  %v38 = vld [vmem:[%s0 + $0x90] sm:$0xff]
  %v39 = vld [vmem:[%s0 + $0x98] sm:$0xff]
  %v40 = vld [vmem:[%s0 + $0xa0] sm:$0xff]
  %v41 = vld [vmem:[%s0 + $0xa8] sm:$0xff]
  %v42 = vld [vmem:[%s0 + $0xb0] sm:$0xff]
  %v43 = vld [vmem:[%s0 + $0xb8] sm:$0xff]
  %v44 = vld [vmem:[%s0 + $0xc0] sm:$0xff]
  %v45 = vld [vmem:[%s0 + $0xc8] sm:$0xff]
  %v46 = vld [vmem:[%s0 + $0xd0] sm:$0xff]
  %v47 = vld [vmem:[%s0 + $0xd8] sm:$0xff]
  %v48 = vld [vmem:[%s0 + $0xe0] sm:$0xff]
  %v49 = vld [vmem:[%s0 + $0xe8] sm:$0xff]
  %v50 = vld [vmem:[%s0 + $0xf0] sm:$0xff]
  %v51 = vld [vmem:[%s0 + $0xf8] sm:$0xff]
  %v52 = vld [vmem:[%s0 + $0x100] sm:$0xff]
  %v53 = vld [vmem:[%s0 + $0x108] sm:$0xff]
  %v54 = vld [vmem:[%s0 + $0x110] sm:$0xff]
  %v55 = vld [vmem:[%s0 + $0x118] sm:$0xff]
  %v56 = vld [vmem:[%s0 + $0x120] sm:$0xff]
  %v57 = vld [vmem:[%s0 + $0x128] sm:$0xff]
  %v58 = vld [vmem:[%s0 + $0x130] sm:$0xff]
  %v59 = vld [vmem:[%s0 + $0x138] sm:$0xff]
  %v60 = vld [vmem:[%s0 + $0x140] sm:$0xff]
  %v61 = vld [vmem:[%s0 + $0x148] sm:$0xff]
  %v62 = vld [vmem:[%s0 + $0x150] sm:$0xff]
  %v63 = vld [vmem:[%s0 + $0x158] sm:$0xff]
  %v64 = vld [vmem:[%s0 + $0x160] sm:$0xff]
  %v65 = vld [vmem:[%s0 + $0x168] sm:$0xff]
  %v66 = vld [vmem:[%s0 + $0x170] sm:$0xff]
  %v67 = vld [vmem:[%s0 + $0x178] sm:$0xff]
  %v68 = vld [vmem:[%s0 + $0x180] sm:$0xff]
  %v69 = vld [vmem:[%s0 + $0x188] sm:$0xff]
  %v70 = vld [vmem:[%s0 + $0x190] sm:$0xff]
  %v71 = vld [vmem:[%s0 + $0x198] sm:$0xff]
  %v72 = vld [vmem:[%s0 + $0x1a0] sm:$0xff]
  %v73 = vld [vmem:[%s0 + $0x1a8] sm:$0xff]
  %v74 = vld [vmem:[%s0 + $0x1b0] sm:$0xff]
  %v75 = vld [vmem:[%s0 + $0x1b8] sm:$0xff]
  %v76 = vld [vmem:[%s0 + $0x1c0] sm:$0xff]
  %v77 = vld [vmem:[%s0 + $0x1c8] sm:$0xff]
  %v78 = vld [vmem:[%s0 + $0x1d0] sm:$0xff]
  %v79 = vld [vmem:[%s0 + $0x1d8] sm:$0xff]
  %v80 = vld [vmem:[%s0 + $0x1e0] sm:$0xff]
  %v81 = vld [vmem:[%s0 + $0x1e8] sm:$0xff]
  %v82 = vld [vmem:[%s0 + $0x1f0] sm:$0xff]
  %v83 = vld [vmem:[%s0 + $0x1f8] sm:$0xff]
  %v84 = vld [vmem:[%s0 + $0x200] sm:$0xff]
  %v85 = vld [vmem:[%s0 + $0x208] sm:$0xff]
  %v86 = vld [vmem:[%s0 + $0x210] sm:$0xff]
  %v87 = vld [vmem:[%s0 + $0x218] sm:$0xff]
  %v88 = vld [vmem:[%s0 + $0x220] sm:$0xff]
  %v89 = vld [vmem:[%s0 + $0x228] sm:$0xff]
  %v90 = vld [vmem:[%s0 + $0x230] sm:$0xff]
  %v91 = vld [vmem:[%s0 + $0x238] sm:$0xff]
  %v92 = vld [vmem:[%s0 + $0x240] sm:$0xff]
  %v93 = vld [vmem:[%s0 + $0x248] sm:$0xff]
  %v94 = vld [vmem:[%s0 + $0x250] sm:$0xff]
  %v95 = vld [vmem:[%s0 + $0x258] sm:$0xff]
  %v96 = vld [vmem:[%s0 + $0x260] sm:$0xff]
  %v97 = vld [vmem:[%s0 + $0x268] sm:$0xff]
  %v98 = vld [vmem:[%s0 + $0x270] sm:$0xff]
  %v99 = vld [vmem:[%s0 + $0x278] sm:$0xff]
  %v100 = vld [vmem:[%s0 + $0x280] sm:$0xff]
  %v101 = vld [vmem:[%s0 + $0x288] sm:$0xff]
  %v102 = vld [vmem:[%s0 + $0x290] sm:$0xff]
  %v103 = vld [vmem:[%s0 + $0x298] sm:$0xff]
  %v104 = vld [vmem:[%s0 + $0x2a0] sm:$0xff]
  %v105 = vld [vmem:[%s0 + $0x2a8] sm:$0xff]
  %v106 = vld [vmem:[%s0 + $0x2b0] sm:$0xff]
  %v107 = vld [vmem:[%s0 + $0x2b8] sm:$0xff]
  %v108 = vld [vmem:[%s0 + $0x2c0] sm:$0xff]
  %v109 = vld [vmem:[%s0 + $0x2c8] sm:$0xff]
  %v110 = vld [vmem:[%s0 + $0x2d0] sm:$0xff]
  %v111 = vld [vmem:[%s0 + $0x2d8] sm:$0xff]
  %v112 = vld [vmem:[%s0 + $0x2e0] sm:$0xff]
  %v113 = vld [vmem:[%s0 + $0x2e8] sm:$0xff]
  %v114 = vld [vmem:[%s0 + $0x2f0] sm:$0xff]
  %v115 = vld [vmem:[%s0 + $0x2f8] sm:$0xff]
  %v116 = vld [vmem:[%s0 + $0x300] sm:$0xff]
  %v117 = vld [vmem:[%s0 + $0x308] sm:$0xff]
  %v118 = vld [vmem:[%s1] sm:$0xff]
  %v119 = vld [vmem:[%s1 + $0x8] sm:$0xff]
  %v120 = vld [vmem:[%s1 + $0x10] sm:$0xff]
  %v121 = vld [vmem:[%s1 + $0x18] sm:$0xff]
  %v122 = vld [vmem:[%s1 + $0x20] sm:$0xff]
  %v123 = vld [vmem:[%s1 + $0x28] sm:$0xff]
  %v124 = vld [vmem:[%s1 + $0x30] sm:$0xff]
  %v125 = vld [vmem:[%s1 + $0x38] sm:$0xff]
  %v126 = vld [vmem:[%s1 + $0x40] sm:$0xff]
  %v127 = vld [vmem:[%s1 + $0x48] sm:$0xff]
  %v128 = vld [vmem:[%s1 + $0x50] sm:$0xff]
  %v129 = vld [vmem:[%s1 + $0x58] sm:$0xff]
  %v130 = vld [vmem:[%s1 + $0x60] sm:$0xff]
  %v131 = vld [vmem:[%s1 + $0x68] sm:$0xff]
  %v132 = vld [vmem:[%s1 + $0x70] sm:$0xff]
  %v133 = vld [vmem:[%s1 + $0x78] sm:$0xff]
  %v134 = vld [vmem:[%s1 + $0x80] sm:$0xff]
  %v135 = vld [vmem:[%s1 + $0x88] sm:$0xff]
  %v136 = vld [vmem:[%s1 + $0x90] sm:$0xff]
  %v137 = vld [vmem:[%s1 + $0x98] sm:$0xff]
  %v138 = vld [vmem:[%s1 + $0xa0] sm:$0xff]
  %v139 = vld [vmem:[%s1 + $0xa8] sm:$0xff]
  %v140 = vld [vmem:[%s1 + $0xb0] sm:$0xff]
  %v141 = vld [vmem:[%s1 + $0xb8] sm:$0xff]
  %v142 = vld [vmem:[%s1 + $0xc0] sm:$0xff]
  %v143 = vld [vmem:[%s1 + $0xc8] sm:$0xff]
  %v144 = vld [vmem:[%s1 + $0xd0] sm:$0xff]
  %v145 = vld [vmem:[%s1 + $0xd8] sm:$0xff]
  %v146 = vld [vmem:[%s1 + $0xe0] sm:$0xff]
  %v147 = vld [vmem:[%s1 + $0xe8] sm:$0xff]
  %v148 = vld [vmem:[%s1 + $0xf0] sm:$0x7]
  %v149 = vld [vmem:[%s2] sm:$0x1]
  %v151 = vlaneseq
  %v152 = vshrl.u32 %v151, 7
  %v153 = vsub.s32 0, %v152
  %v154 = vrot.slane %v149, %v153
  %vm156 = vcmask 941056
  %v158 = vsel %vm156, %v21, 0
  %v161 = vsel %vm156, %v23, 0
  %v164 = vsel %vm156, %v25, 0
  %v167 = vsel %vm156, %v27, 0
  %v170 = vsel %vm156, %v29, 0
  %v173 = vsel %vm156, %v31, 0
  %v176 = vsel %vm156, %v33, 0
  %v179 = vsel %vm156, %v35, 0
  %v182 = vsel %vm156, %v37, 0
  %v185 = vsel %vm156, %v39, 0
  %v188 = vsel %vm156, %v41, 0
  %v191 = vsel %vm156, %v43, 0
  %v194 = vsel %vm156, %v45, 0
  %v197 = vsel %vm156, %v47, 0
  %v200 = vsel %vm156, %v49, 0
  %v203 = vsel %vm156, %v51, 0
  %v206 = vsel %vm156, %v53, 0
  %v209 = vsel %vm156, %v55, 0
  %v212 = vsel %vm156, %v57, 0
  %v215 = vsel %vm156, %v59, 0
  %v218 = vsel %vm156, %v61, 0
  %v221 = vsel %vm156, %v63, 0
  %v224 = vsel %vm156, %v65, 0
  %v227 = vsel %vm156, %v67, 0
  %v230 = vsel %vm156, %v69, 0
  %v233 = vsel %vm156, %v71, 0
  %v236 = vsel %vm156, %v73, 0
  %v239 = vsel %vm156, %v75, 0
  %v242 = vsel %vm156, %v77, 0
  %v245 = vsel %vm156, %v79, 0
  %v248 = vsel %vm156, %v81, 0
  %v251 = vsel %vm156, %v83, 0
  %v254 = vsel %vm156, %v85, 0
  %v257 = vsel %vm156, %v87, 0
  %v260 = vsel %vm156, %v89, 0
  %v263 = vsel %vm156, %v91, 0
  %v266 = vsel %vm156, %v93, 0
  %v269 = vsel %vm156, %v95, 0
  %v272 = vsel %vm156, %v97, 0
  %v275 = vsel %vm156, %v99, 0
  %v278 = vsel %vm156, %v101, 0
  %v281 = vsel %vm156, %v103, 0
  %v284 = vsel %vm156, %v105, 0
  %v287 = vsel %vm156, %v107, 0
  %v290 = vsel %vm156, %v109, 0
  %v293 = vsel %vm156, %v111, 0
  %v296 = vsel %vm156, %v113, 0
  %v299 = vsel %vm156, %v115, 0
  %v302 = vsel %vm156, %v117, 0
  %vm304 = vcmask 1042432
  %v306 = vsel %vm304, %v148, 0
  %308 = vmatprep.subr.mxu0 0.0
  %309 = vmatpush1.msra.mxu0 %v133
  %310 = vmatprep.subr.mxu0 0.0
  %311 = vmatpush1.msra.mxu0 %v132
  %312 = vmatprep.subr.mxu0 0.0
  %313 = vmatpush1.msra.mxu0 %v131
  %314 = vmatprep.subr.mxu0 0.0
  %315 = vmatpush1.msra.mxu0 %v130
  %316 = vmatprep.subr.mxu0 0.0
  %317 = vmatpush1.msra.mxu0 %v129
  %318 = vmatprep.subr.mxu0 0.0
  %319 = vmatpush1.msra.mxu0 %v128
  %320 = vmatprep.subr.mxu0 0.0
  %321 = vmatpush1.msra.mxu0 %v127
  %322 = vmatprep.subr.mxu0 0.0
  %323 = vmatpush1.msra.mxu0 %v126
  %324 = vmatprep.subr.mxu0 0.0
  %325 = vmatpush1.msra.mxu0 %v125
  %326 = vmatprep.subr.mxu0 0.0
  %327 = vmatpush1.msra.mxu0 %v124
  %328 = vmatprep.subr.mxu0 0.0
  %329 = vmatpush1.msra.mxu0 %v123
  %330 = vmatprep.subr.mxu0 0.0
  %331 = vmatpush1.msra.mxu0 %v122
  %332 = vmatprep.subr.mxu0 0.0
  %333 = vmatpush1.msra.mxu0 %v121
  %334 = vmatprep.subr.mxu0 0.0
  %335 = vmatpush1.msra.mxu0 %v120
  %336 = vmatprep.subr.mxu0 0.0
  %337 = vmatpush1.msra.mxu0 %v119
  %338 = vmatprep.subr.mxu0 0.0
  %339 = vmatpush1.msra.mxu0 %v118
  %340 = vmatprep.subr.mxu0 0.0
  %341 = vmatpush2.msra.mxu0 0.0
  %342 = vmatprep.subr.mxu0 0.0
  %343 = vmatpush2.msra.mxu0 %v306
  %344 = vmatprep.subr.mxu0 0.0
  %345 = vmatpush2.msra.mxu0 %v147
  %346 = vmatprep.subr.mxu0 0.0
  %347 = vmatpush2.msra.mxu0 %v146
  %348 = vmatprep.subr.mxu0 0.0
  %349 = vmatpush2.msra.mxu0 %v145
  %350 = vmatprep.subr.mxu0 0.0
  %351 = vmatpush2.msra.mxu0 %v144
  %352 = vmatprep.subr.mxu0 0.0
  %353 = vmatpush2.msra.mxu0 %v143
  %354 = vmatprep.subr.mxu0 0.0
  %355 = vmatpush2.msra.mxu0 %v142
  %356 = vmatprep.subr.mxu0 0.0
  %357 = vmatpush2.msra.mxu0 %v141
  %358 = vmatprep.subr.mxu0 0.0
  %359 = vmatpush2.msra.mxu0 %v140
  %360 = vmatprep.subr.mxu0 0.0
  %361 = vmatpush2.msra.mxu0 %v139
  %362 = vmatprep.subr.mxu0 0.0
  %363 = vmatpush2.msra.mxu0 %v138
  %364 = vmatprep.subr.mxu0 0.0
  %365 = vmatpush2.msra.mxu0 %v137
  %366 = vmatprep.subr.mxu0 0.0
  %367 = vmatpush2.msra.mxu0 %v136
  %368 = vmatprep.subr.mxu0 0.0
  %369 = vmatpush2.msra.mxu0 %v135
  %370 = vmatprep.subr.mxu0 0.0
  %371 = vmatpush2.msra.mxu0 %v134
  %372 = vmatprep.mubr.f32.mxu0 %v158
  %373 = vmatmul.mubr.f32.gmra.mxu0 %v20
  %v374 = vpop.f32.mrf.mxu0
  %v375 = vadd.f32 %v154, %v374
  %v376 = vpop.f32.mrf.mxu0
  %377 = vmatprep.mubr.f32.mxu0 %v161
  %378 = vmatmul.mubr.f32.gmra.mxu0 %v22
  %v379 = vpop.f32.mrf.mxu0
  %v380 = vadd.f32 %v154, %v379
  %v381 = vpop.f32.mrf.mxu0
  %382 = vmatprep.mubr.f32.mxu0 %v164
  %383 = vmatmul.mubr.f32.gmra.mxu0 %v24
  %v384 = vpop.f32.mrf.mxu0
  %v385 = vadd.f32 %v154, %v384
  %v386 = vpop.f32.mrf.mxu0
  %387 = vmatprep.mubr.f32.mxu0 %v167
  %388 = vmatmul.mubr.f32.gmra.mxu0 %v26
  %v389 = vpop.f32.mrf.mxu0
  %v390 = vadd.f32 %v154, %v389
  %v391 = vpop.f32.mrf.mxu0
  %392 = vmatprep.mubr.f32.mxu0 %v170
  %393 = vmatmul.mubr.f32.gmra.mxu0 %v28
  %v394 = vpop.f32.mrf.mxu0
  %v395 = vadd.f32 %v154, %v394
  %v396 = vpop.f32.mrf.mxu0
  %397 = vmatprep.mubr.f32.mxu0 %v173
  %398 = vmatmul.mubr.f32.gmra.mxu0 %v30
  %v399 = vpop.f32.mrf.mxu0
  %v400 = vadd.f32 %v154, %v399
  %v401 = vpop.f32.mrf.mxu0
  %402 = vmatprep.mubr.f32.mxu0 %v176
  %403 = vmatmul.mubr.f32.gmra.mxu0 %v32
  %v404 = vpop.f32.mrf.mxu0
  %v405 = vadd.f32 %v154, %v404
  %v406 = vpop.f32.mrf.mxu0
  %407 = vmatprep.mubr.f32.mxu0 %v179
  %408 = vmatmul.mubr.f32.gmra.mxu0 %v34
  %v409 = vpop.f32.mrf.mxu0
  %v410 = vadd.f32 %v154, %v409
  %v411 = vpop.f32.mrf.mxu0
  %412 = vmatprep.mubr.f32.mxu0 %v182
  %413 = vmatmul.mubr.f32.gmra.mxu0 %v36
  %v414 = vpop.f32.mrf.mxu0
  %v415 = vadd.f32 %v154, %v414
  %v416 = vpop.f32.mrf.mxu0
  %417 = vmatprep.mubr.f32.mxu0 %v185
  %418 = vmatmul.mubr.f32.gmra.mxu0 %v38
  %v419 = vpop.f32.mrf.mxu0
  %v420 = vadd.f32 %v154, %v419
  %v421 = vpop.f32.mrf.mxu0
  %422 = vmatprep.mubr.f32.mxu0 %v188
  %423 = vmatmul.mubr.f32.gmra.mxu0 %v40
  %v424 = vpop.f32.mrf.mxu0
  %v425 = vadd.f32 %v154, %v424
  %v426 = vpop.f32.mrf.mxu0
  %427 = vmatprep.mubr.f32.mxu0 %v191
  %428 = vmatmul.mubr.f32.gmra.mxu0 %v42
  %v429 = vpop.f32.mrf.mxu0
  %v430 = vadd.f32 %v154, %v429
  %v431 = vpop.f32.mrf.mxu0
  %432 = vmatprep.mubr.f32.mxu0 %v194
  %433 = vmatmul.mubr.f32.gmra.mxu0 %v44
  %v434 = vpop.f32.mrf.mxu0
  %v435 = vadd.f32 %v154, %v434
  %v436 = vpop.f32.mrf.mxu0
  %437 = vmatprep.mubr.f32.mxu0 %v197
  %438 = vmatmul.mubr.f32.gmra.mxu0 %v46
  %v439 = vpop.f32.mrf.mxu0
  %v440 = vadd.f32 %v154, %v439
  %v441 = vpop.f32.mrf.mxu0
  %442 = vmatprep.mubr.f32.mxu0 %v200
  %443 = vmatmul.mubr.f32.gmra.mxu0 %v48
  %v444 = vpop.f32.mrf.mxu0
  %v445 = vadd.f32 %v154, %v444
  %v446 = vpop.f32.mrf.mxu0
  %447 = vmatprep.mubr.f32.mxu0 %v203
  %448 = vmatmul.mubr.f32.gmra.mxu0 %v50
  %v449 = vpop.f32.mrf.mxu0
  %v450 = vadd.f32 %v154, %v449
  %v451 = vpop.f32.mrf.mxu0
  %452 = vmatprep.mubr.f32.mxu0 %v206
  %453 = vmatmul.mubr.f32.gmra.mxu0 %v52
  %v454 = vpop.f32.mrf.mxu0
  %v455 = vadd.f32 %v154, %v454
  %v456 = vpop.f32.mrf.mxu0
  %457 = vmatprep.mubr.f32.mxu0 %v209
  %458 = vmatmul.mubr.f32.gmra.mxu0 %v54
  %v459 = vpop.f32.mrf.mxu0
  %v460 = vadd.f32 %v154, %v459
  %v461 = vpop.f32.mrf.mxu0
  %462 = vmatprep.mubr.f32.mxu0 %v212
  %463 = vmatmul.mubr.f32.gmra.mxu0 %v56
  %v464 = vpop.f32.mrf.mxu0
  %v465 = vadd.f32 %v154, %v464
  %v466 = vpop.f32.mrf.mxu0
  %467 = vmatprep.mubr.f32.mxu0 %v215
  %468 = vmatmul.mubr.f32.gmra.mxu0 %v58
  %v469 = vpop.f32.mrf.mxu0
  %v470 = vadd.f32 %v154, %v469
  %v471 = vpop.f32.mrf.mxu0
  %472 = vmatprep.mubr.f32.mxu0 %v218
  %473 = vmatmul.mubr.f32.gmra.mxu0 %v60
  %v474 = vpop.f32.mrf.mxu0
  %v475 = vadd.f32 %v154, %v474
  %v476 = vpop.f32.mrf.mxu0
  %477 = vmatprep.mubr.f32.mxu0 %v221
  %478 = vmatmul.mubr.f32.gmra.mxu0 %v62
  %v479 = vpop.f32.mrf.mxu0
  %v480 = vadd.f32 %v154, %v479
  %v481 = vpop.f32.mrf.mxu0
  %482 = vmatprep.mubr.f32.mxu0 %v224
  %483 = vmatmul.mubr.f32.gmra.mxu0 %v64
  %v484 = vpop.f32.mrf.mxu0
  %v485 = vadd.f32 %v154, %v484
  %v486 = vpop.f32.mrf.mxu0
  %487 = vmatprep.mubr.f32.mxu0 %v227
  %488 = vmatmul.mubr.f32.gmra.mxu0 %v66
  %v489 = vpop.f32.mrf.mxu0
  %v490 = vadd.f32 %v154, %v489
  %v491 = vpop.f32.mrf.mxu0
  %492 = vmatprep.mubr.f32.mxu0 %v230
  %493 = vmatmul.mubr.f32.gmra.mxu0 %v68
  %v494 = vpop.f32.mrf.mxu0
  %v495 = vadd.f32 %v154, %v494
  %v496 = vpop.f32.mrf.mxu0
  %497 = vmatprep.mubr.f32.mxu0 %v233
  %498 = vmatmul.mubr.f32.gmra.mxu0 %v70
  %v499 = vpop.f32.mrf.mxu0
  %v500 = vadd.f32 %v154, %v499
  %v501 = vpop.f32.mrf.mxu0
  %502 = vmatprep.mubr.f32.mxu0 %v236
  %503 = vmatmul.mubr.f32.gmra.mxu0 %v72
  %v504 = vpop.f32.mrf.mxu0
  %v505 = vadd.f32 %v154, %v504
  %v506 = vpop.f32.mrf.mxu0
  %507 = vmatprep.mubr.f32.mxu0 %v239
  %508 = vmatmul.mubr.f32.gmra.mxu0 %v74
  %v509 = vpop.f32.mrf.mxu0
  %v510 = vadd.f32 %v154, %v509
  %v511 = vpop.f32.mrf.mxu0
  %512 = vmatprep.mubr.f32.mxu0 %v242
  %513 = vmatmul.mubr.f32.gmra.mxu0 %v76
  %v514 = vpop.f32.mrf.mxu0
  %v515 = vadd.f32 %v154, %v514
  %v516 = vpop.f32.mrf.mxu0
  %517 = vmatprep.mubr.f32.mxu0 %v245
  %518 = vmatmul.mubr.f32.gmra.mxu0 %v78
  %v519 = vpop.f32.mrf.mxu0
  %v520 = vadd.f32 %v154, %v519
  %v521 = vpop.f32.mrf.mxu0
  %522 = vmatprep.mubr.f32.mxu0 %v248
  %523 = vmatmul.mubr.f32.gmra.mxu0 %v80
  %v524 = vpop.f32.mrf.mxu0
  %v525 = vadd.f32 %v154, %v524
  %v526 = vpop.f32.mrf.mxu0
  %527 = vmatprep.mubr.f32.mxu0 %v251
  %528 = vmatmul.mubr.f32.gmra.mxu0 %v82
  %v529 = vpop.f32.mrf.mxu0
  %v530 = vadd.f32 %v154, %v529
  %v531 = vpop.f32.mrf.mxu0
  %532 = vmatprep.mubr.f32.mxu0 %v254
  %533 = vmatmul.mubr.f32.gmra.mxu0 %v84
  %v534 = vpop.f32.mrf.mxu0
  %v535 = vadd.f32 %v154, %v534
  %v536 = vpop.f32.mrf.mxu0
  %537 = vmatprep.mubr.f32.mxu0 %v257
  %538 = vmatmul.mubr.f32.gmra.mxu0 %v86
  %v539 = vpop.f32.mrf.mxu0
  %v540 = vadd.f32 %v154, %v539
  %v541 = vpop.f32.mrf.mxu0
  %542 = vmatprep.mubr.f32.mxu0 %v260
  %543 = vmatmul.mubr.f32.gmra.mxu0 %v88
  %v544 = vpop.f32.mrf.mxu0
  %v545 = vadd.f32 %v154, %v544
  %v546 = vpop.f32.mrf.mxu0
  %547 = vmatprep.mubr.f32.mxu0 %v263
  %548 = vmatmul.mubr.f32.gmra.mxu0 %v90
  %v549 = vpop.f32.mrf.mxu0
  %v550 = vadd.f32 %v154, %v549
  %v551 = vpop.f32.mrf.mxu0
  %552 = vmatprep.mubr.f32.mxu0 %v266
  %553 = vmatmul.mubr.f32.gmra.mxu0 %v92
  %v554 = vpop.f32.mrf.mxu0
  %v555 = vadd.f32 %v154, %v554
  %v556 = vpop.f32.mrf.mxu0
  %557 = vmatprep.mubr.f32.mxu0 %v269
  %558 = vmatmul.mubr.f32.gmra.mxu0 %v94
  %v559 = vpop.f32.mrf.mxu0
  %v560 = vadd.f32 %v154, %v559
  %v561 = vpop.f32.mrf.mxu0
  %562 = vmatprep.mubr.f32.mxu0 %v272
  %563 = vmatmul.mubr.f32.gmra.mxu0 %v96
  %v564 = vpop.f32.mrf.mxu0
  %v565 = vadd.f32 %v154, %v564
  %v566 = vpop.f32.mrf.mxu0
  %567 = vmatprep.mubr.f32.mxu0 %v275
  %568 = vmatmul.mubr.f32.gmra.mxu0 %v98
  %v569 = vpop.f32.mrf.mxu0
  %v570 = vadd.f32 %v154, %v569
  %v571 = vpop.f32.mrf.mxu0
  %572 = vmatprep.mubr.f32.mxu0 %v278
  %573 = vmatmul.mubr.f32.gmra.mxu0 %v100
  %v574 = vpop.f32.mrf.mxu0
  %v575 = vadd.f32 %v154, %v574
  %v576 = vpop.f32.mrf.mxu0
  %577 = vmatprep.mubr.f32.mxu0 %v281
  %578 = vmatmul.mubr.f32.gmra.mxu0 %v102
  %v579 = vpop.f32.mrf.mxu0
  %v580 = vadd.f32 %v154, %v579
  %v581 = vpop.f32.mrf.mxu0
  %582 = vmatprep.mubr.f32.mxu0 %v284
  %583 = vmatmul.mubr.f32.gmra.mxu0 %v104
  %v584 = vpop.f32.mrf.mxu0
  %v585 = vadd.f32 %v154, %v584
  %v586 = vpop.f32.mrf.mxu0
  %587 = vmatprep.mubr.f32.mxu0 %v287
  %588 = vmatmul.mubr.f32.gmra.mxu0 %v106
  %v589 = vpop.f32.mrf.mxu0
  %v590 = vadd.f32 %v154, %v589
  %v591 = vpop.f32.mrf.mxu0
  %592 = vmatprep.mubr.f32.mxu0 %v290
  %593 = vmatmul.mubr.f32.gmra.mxu0 %v108
  %v594 = vpop.f32.mrf.mxu0
  %v595 = vadd.f32 %v154, %v594
  %v596 = vpop.f32.mrf.mxu0
  %597 = vmatprep.mubr.f32.mxu0 %v293
  %598 = vmatmul.mubr.f32.gmra.mxu0 %v110
  %v599 = vpop.f32.mrf.mxu0
  %v600 = vadd.f32 %v154, %v599
  %v601 = vpop.f32.mrf.mxu0
  %602 = vmatprep.mubr.f32.mxu0 %v296
  %603 = vmatmul.mubr.f32.gmra.mxu0 %v112
  %v604 = vpop.f32.mrf.mxu0
  %v605 = vadd.f32 %v154, %v604
  %v606 = vpop.f32.mrf.mxu0
  %607 = vmatprep.mubr.f32.mxu0 %v299
  %608 = vmatmul.mubr.f32.gmra.mxu0 %v114
  %v609 = vpop.f32.mrf.mxu0
  %v610 = vadd.f32 %v154, %v609
  %v611 = vpop.f32.mrf.mxu0
  %612 = vmatprep.mubr.f32.mxu0 %v302
  %613 = vmatmul.mubr.f32.gmra.mxu0 %v116
  %v614 = vpop.f32.mrf.mxu0
  %v615 = vadd.f32 %v154, %v614
  %v616 = vpop.f32.mrf.mxu0
  %617 = vdwg.mxu0
  %v618 = vmax.f32 %v375, 0.0
  %v619 = vmax.f32 %v380, 0.0
  %v620 = vmax.f32 %v385, 0.0
  %v621 = vmax.f32 %v390, 0.0
  %v622 = vmax.f32 %v395, 0.0
  %v623 = vmax.f32 %v400, 0.0
  %v624 = vmax.f32 %v405, 0.0
  %v625 = vmax.f32 %v410, 0.0
  %v626 = vmax.f32 %v415, 0.0
  %v627 = vmax.f32 %v420, 0.0
  %v628 = vmax.f32 %v425, 0.0
  %v629 = vmax.f32 %v430, 0.0
  %v630 = vmax.f32 %v435, 0.0
  %v631 = vmax.f32 %v440, 0.0
  %v632 = vmax.f32 %v445, 0.0
  %v633 = vmax.f32 %v450, 0.0
  %v634 = vmax.f32 %v455, 0.0
  %v635 = vmax.f32 %v460, 0.0
  %v636 = vmax.f32 %v465, 0.0
  %v637 = vmax.f32 %v470, 0.0
  %v638 = vmax.f32 %v475, 0.0
  %v639 = vmax.f32 %v480, 0.0
  %v640 = vmax.f32 %v485, 0.0
  %v641 = vmax.f32 %v490, 0.0
  %v642 = vmax.f32 %v495, 0.0
  %v643 = vmax.f32 %v500, 0.0
  %v644 = vmax.f32 %v505, 0.0
  %v645 = vmax.f32 %v510, 0.0
  %v646 = vmax.f32 %v515, 0.0
  %v647 = vmax.f32 %v520, 0.0
  %v648 = vmax.f32 %v525, 0.0
  %v649 = vmax.f32 %v530, 0.0
  %v650 = vmax.f32 %v535, 0.0
  %v651 = vmax.f32 %v540, 0.0
  %v652 = vmax.f32 %v545, 0.0
  %v653 = vmax.f32 %v550, 0.0
  %v654 = vmax.f32 %v555, 0.0
  %v655 = vmax.f32 %v560, 0.0
  %v656 = vmax.f32 %v565, 0.0
  %v657 = vmax.f32 %v570, 0.0
  %v658 = vmax.f32 %v575, 0.0
  %v659 = vmax.f32 %v580, 0.0
  %v660 = vmax.f32 %v585, 0.0
  %v661 = vmax.f32 %v590, 0.0
  %v662 = vmax.f32 %v595, 0.0
  %v663 = vmax.f32 %v600, 0.0
  %v664 = vmax.f32 %v605, 0.0
  %v665 = vmax.f32 %v610, 0.0
  %v666 = vmax.f32 %v615, 0.0
  %vm667 = vcmask 130048
  %668 = vst.msk [vmem:[#allocation2] sm:$0xff] %vm667, %v618
  %669 = vst.msk [vmem:[#allocation2 + $0x8] sm:$0xff] %vm667, %v619
  %670 = vst.msk [vmem:[#allocation2 + $0x10] sm:$0xff] %vm667, %v620
  %671 = vst.msk [vmem:[#allocation2 + $0x18] sm:$0xff] %vm667, %v621
  %672 = vst.msk [vmem:[#allocation2 + $0x20] sm:$0xff] %vm667, %v622
  %673 = vst.msk [vmem:[#allocation2 + $0x28] sm:$0xff] %vm667, %v623
  %674 = vst.msk [vmem:[#allocation2 + $0x30] sm:$0xff] %vm667, %v624
  %675 = vst.msk [vmem:[#allocation2 + $0x38] sm:$0xff] %vm667, %v625
  %676 = vst.msk [vmem:[#allocation2 + $0x40] sm:$0xff] %vm667, %v626
  %677 = vst.msk [vmem:[#allocation2 + $0x48] sm:$0xff] %vm667, %v627
  %678 = vst.msk [vmem:[#allocation2 + $0x50] sm:$0xff] %vm667, %v628
  %679 = vst.msk [vmem:[#allocation2 + $0x58] sm:$0xff] %vm667, %v629
  %680 = vst.msk [vmem:[#allocation2 + $0x60] sm:$0xff] %vm667, %v630
  %681 = vst.msk [vmem:[#allocation2 + $0x68] sm:$0xff] %vm667, %v631
  %682 = vst.msk [vmem:[#allocation2 + $0x70] sm:$0xff] %vm667, %v632
  %683 = vst.msk [vmem:[#allocation2 + $0x78] sm:$0xff] %vm667, %v633
  %684 = vst.msk [vmem:[#allocation2 + $0x80] sm:$0xff] %vm667, %v634
  %685 = vst.msk [vmem:[#allocation2 + $0x88] sm:$0xff] %vm667, %v635
  %686 = vst.msk [vmem:[#allocation2 + $0x90] sm:$0xff] %vm667, %v636
  %687 = vst.msk [vmem:[#allocation2 + $0x98] sm:$0xff] %vm667, %v637
  %688 = vst.msk [vmem:[#allocation2 + $0xa0] sm:$0xff] %vm667, %v638
  %689 = vst.msk [vmem:[#allocation2 + $0xa8] sm:$0xff] %vm667, %v639
  %690 = vst.msk [vmem:[#allocation2 + $0xb0] sm:$0xff] %vm667, %v640
  %691 = vst.msk [vmem:[#allocation2 + $0xb8] sm:$0xff] %vm667, %v641
  %692 = vst.msk [vmem:[#allocation2 + $0xc0] sm:$0xff] %vm667, %v642
  %693 = vst.msk [vmem:[#allocation2 + $0xc8] sm:$0xff] %vm667, %v643
  %694 = vst.msk [vmem:[#allocation2 + $0xd0] sm:$0xff] %vm667, %v644
  %695 = vst.msk [vmem:[#allocation2 + $0xd8] sm:$0xff] %vm667, %v645
  %696 = vst.msk [vmem:[#allocation2 + $0xe0] sm:$0xff] %vm667, %v646
  %697 = vst.msk [vmem:[#allocation2 + $0xe8] sm:$0xff] %vm667, %v647
  %698 = vst.msk [vmem:[#allocation2 + $0xf0] sm:$0xff] %vm667, %v648
  %699 = vst.msk [vmem:[#allocation2 + $0xf8] sm:$0xff] %vm667, %v649
  %700 = vst.msk [vmem:[#allocation2 + $0x100] sm:$0xff] %vm667, %v650
  %701 = vst.msk [vmem:[#allocation2 + $0x108] sm:$0xff] %vm667, %v651
  %702 = vst.msk [vmem:[#allocation2 + $0x110] sm:$0xff] %vm667, %v652
  %703 = vst.msk [vmem:[#allocation2 + $0x118] sm:$0xff] %vm667, %v653
  %704 = vst.msk [vmem:[#allocation2 + $0x120] sm:$0xff] %vm667, %v654
  %705 = vst.msk [vmem:[#allocation2 + $0x128] sm:$0xff] %vm667, %v655
  %706 = vst.msk [vmem:[#allocation2 + $0x130] sm:$0xff] %vm667, %v656
  %707 = vst.msk [vmem:[#allocation2 + $0x138] sm:$0xff] %vm667, %v657
  %708 = vst.msk [vmem:[#allocation2 + $0x140] sm:$0xff] %vm667, %v658
  %709 = vst.msk [vmem:[#allocation2 + $0x148] sm:$0xff] %vm667, %v659
  %710 = vst.msk [vmem:[#allocation2 + $0x150] sm:$0xff] %vm667, %v660
  %711 = vst.msk [vmem:[#allocation2 + $0x158] sm:$0xff] %vm667, %v661
  %712 = vst.msk [vmem:[#allocation2 + $0x160] sm:$0xff] %vm667, %v662
  %713 = vst.msk [vmem:[#allocation2 + $0x168] sm:$0xff] %vm667, %v663
  %714 = vst.msk [vmem:[#allocation2 + $0x170] sm:$0xff] %vm667, %v664
  %715 = vst.msk [vmem:[#allocation2 + $0x178] sm:$0xff] %vm667, %v665
  %716 = vst.msk [vmem:[#allocation2 + $0x180] sm:$0xff] %vm667, %v666
  %v717 = vld [vmem:[#allocation2] sm:$0xff]
  %v718 = vld [vmem:[#allocation2 + $0x8] sm:$0xff]
  %v719 = vld [vmem:[#allocation2 + $0x10] sm:$0xff]
  %v720 = vld [vmem:[#allocation2 + $0x18] sm:$0xff]
  %v721 = vld [vmem:[#allocation2 + $0x20] sm:$0xff]
  %v722 = vld [vmem:[#allocation2 + $0x28] sm:$0xff]
  %v723 = vld [vmem:[#allocation2 + $0x30] sm:$0xff]
  %v724 = vld [vmem:[#allocation2 + $0x38] sm:$0xff]
  %v725 = vld [vmem:[#allocation2 + $0x40] sm:$0xff]
  %v726 = vld [vmem:[#allocation2 + $0x48] sm:$0xff]
  %v727 = vld [vmem:[#allocation2 + $0x50] sm:$0xff]
  %v728 = vld [vmem:[#allocation2 + $0x58] sm:$0xff]
  %v729 = vld [vmem:[#allocation2 + $0x60] sm:$0xff]
  %v730 = vld [vmem:[#allocation2 + $0x68] sm:$0xff]
  %v731 = vld [vmem:[#allocation2 + $0x70] sm:$0xff]
  %v732 = vld [vmem:[#allocation2 + $0x78] sm:$0xff]
  %v733 = vld [vmem:[#allocation2 + $0x80] sm:$0xff]
  %v734 = vld [vmem:[#allocation2 + $0x88] sm:$0xff]
  %v735 = vld [vmem:[#allocation2 + $0x90] sm:$0xff]
  %v736 = vld [vmem:[#allocation2 + $0x98] sm:$0xff]
  %v737 = vld [vmem:[#allocation2 + $0xa0] sm:$0xff]
  %v738 = vld [vmem:[#allocation2 + $0xa8] sm:$0xff]
  %v739 = vld [vmem:[#allocation2 + $0xb0] sm:$0xff]
  %v740 = vld [vmem:[#allocation2 + $0xb8] sm:$0xff]
  %v741 = vld [vmem:[#allocation2 + $0xc0] sm:$0xff]
  %v742 = vld [vmem:[#allocation2 + $0xc8] sm:$0xff]
  %v743 = vld [vmem:[#allocation2 + $0xd0] sm:$0xff]
  %v744 = vld [vmem:[#allocation2 + $0xd8] sm:$0xff]
  %v745 = vld [vmem:[#allocation2 + $0xe0] sm:$0xff]
  %v746 = vld [vmem:[#allocation2 + $0xe8] sm:$0xff]
  %v747 = vld [vmem:[#allocation2 + $0xf0] sm:$0xff]
  %v748 = vld [vmem:[#allocation2 + $0xf8] sm:$0xff]
  %v749 = vld [vmem:[#allocation2 + $0x100] sm:$0xff]
  %v750 = vld [vmem:[#allocation2 + $0x108] sm:$0xff]
  %v751 = vld [vmem:[#allocation2 + $0x110] sm:$0xff]
  %v752 = vld [vmem:[#allocation2 + $0x118] sm:$0xff]
  %v753 = vld [vmem:[#allocation2 + $0x120] sm:$0xff]
  %v754 = vld [vmem:[#allocation2 + $0x128] sm:$0xff]
  %v755 = vld [vmem:[#allocation2 + $0x130] sm:$0xff]
  %v756 = vld [vmem:[#allocation2 + $0x138] sm:$0xff]
  %v757 = vld [vmem:[#allocation2 + $0x140] sm:$0xff]
  %v758 = vld [vmem:[#allocation2 + $0x148] sm:$0xff]
  %v759 = vld [vmem:[#allocation2 + $0x150] sm:$0xff]
  %v760 = vld [vmem:[#allocation2 + $0x158] sm:$0xff]
  %v761 = vld [vmem:[#allocation2 + $0x160] sm:$0xff]
  %v762 = vld [vmem:[#allocation2 + $0x168] sm:$0xff]
  %v763 = vld [vmem:[#allocation2 + $0x170] sm:$0xff]
  %v764 = vld [vmem:[#allocation2 + $0x178] sm:$0xff]
  %765 = vst.msk [vmem:[#allocation3] sm:$0xff] %vm667, %v717
  %766 = vst.msk [vmem:[#allocation3 + $0x8] sm:$0xff] %vm667, %v718
  %767 = vst.msk [vmem:[#allocation3 + $0x10] sm:$0xff] %vm667, %v719
  %768 = vst.msk [vmem:[#allocation3 + $0x18] sm:$0xff] %vm667, %v720
  %769 = vst.msk [vmem:[#allocation3 + $0x20] sm:$0xff] %vm667, %v721
  %770 = vst.msk [vmem:[#allocation3 + $0x28] sm:$0xff] %vm667, %v722
  %771 = vst.msk [vmem:[#allocation3 + $0x30] sm:$0xff] %vm667, %v723
  %772 = vst.msk [vmem:[#allocation3 + $0x38] sm:$0xff] %vm667, %v724
  %773 = vst.msk [vmem:[#allocation3 + $0x40] sm:$0xff] %vm667, %v725
  %774 = vst.msk [vmem:[#allocation3 + $0x48] sm:$0xff] %vm667, %v726
  %775 = vst.msk [vmem:[#allocation3 + $0x50] sm:$0xff] %vm667, %v727
  %776 = vst.msk [vmem:[#allocation3 + $0x58] sm:$0xff] %vm667, %v728
  %777 = vst.msk [vmem:[#allocation3 + $0x60] sm:$0xff] %vm667, %v729
  %778 = vst.msk [vmem:[#allocation3 + $0x68] sm:$0xff] %vm667, %v730
  %779 = vst.msk [vmem:[#allocation3 + $0x70] sm:$0xff] %vm667, %v731
  %780 = vst.msk [vmem:[#allocation3 + $0x78] sm:$0xff] %vm667, %v732
  %781 = vst.msk [vmem:[#allocation3 + $0x80] sm:$0xff] %vm667, %v733
  %782 = vst.msk [vmem:[#allocation3 + $0x88] sm:$0xff] %vm667, %v734
  %783 = vst.msk [vmem:[#allocation3 + $0x90] sm:$0xff] %vm667, %v735
  %784 = vst.msk [vmem:[#allocation3 + $0x98] sm:$0xff] %vm667, %v736
  %785 = vst.msk [vmem:[#allocation3 + $0xa0] sm:$0xff] %vm667, %v737
  %786 = vst.msk [vmem:[#allocation3 + $0xa8] sm:$0xff] %vm667, %v738
  %787 = vst.msk [vmem:[#allocation3 + $0xb0] sm:$0xff] %vm667, %v739
  %788 = vst.msk [vmem:[#allocation3 + $0xb8] sm:$0xff] %vm667, %v740
  %789 = vst.msk [vmem:[#allocation3 + $0xc0] sm:$0xff] %vm667, %v741
  %790 = vst.msk [vmem:[#allocation3 + $0xc8] sm:$0xff] %vm667, %v742
  %791 = vst.msk [vmem:[#allocation3 + $0xd0] sm:$0xff] %vm667, %v743
  %792 = vst.msk [vmem:[#allocation3 + $0xd8] sm:$0xff] %vm667, %v744
  %793 = vst.msk [vmem:[#allocation3 + $0xe0] sm:$0xff] %vm667, %v745
  %794 = vst.msk [vmem:[#allocation3 + $0xe8] sm:$0xff] %vm667, %v746
  %795 = vst.msk [vmem:[#allocation3 + $0xf0] sm:$0xff] %vm667, %v747
  %796 = vst.msk [vmem:[#allocation3 + $0xf8] sm:$0xff] %vm667, %v748
  %797 = vst.msk [vmem:[#allocation3 + $0x100] sm:$0xff] %vm667, %v749
  %798 = vst.msk [vmem:[#allocation3 + $0x108] sm:$0xff] %vm667, %v750
  %799 = vst.msk [vmem:[#allocation3 + $0x110] sm:$0xff] %vm667, %v751
  %800 = vst.msk [vmem:[#allocation3 + $0x118] sm:$0xff] %vm667, %v752
  %801 = vst.msk [vmem:[#allocation3 + $0x120] sm:$0xff] %vm667, %v753
  %802 = vst.msk [vmem:[#allocation3 + $0x128] sm:$0xff] %vm667, %v754
  %803 = vst.msk [vmem:[#allocation3 + $0x130] sm:$0xff] %vm667, %v755
  %804 = vst.msk [vmem:[#allocation3 + $0x138] sm:$0xff] %vm667, %v756
  %805 = vst.msk [vmem:[#allocation3 + $0x140] sm:$0xff] %vm667, %v757
  %806 = vst.msk [vmem:[#allocation3 + $0x148] sm:$0xff] %vm667, %v758
  %807 = vst.msk [vmem:[#allocation3 + $0x150] sm:$0xff] %vm667, %v759
  %808 = vst.msk [vmem:[#allocation3 + $0x158] sm:$0xff] %vm667, %v760
  %809 = vst.msk [vmem:[#allocation3 + $0x160] sm:$0xff] %vm667, %v761
  %810 = vst.msk [vmem:[#allocation3 + $0x168] sm:$0xff] %vm667, %v762
  %811 = vst.msk [vmem:[#allocation3 + $0x170] sm:$0xff] %vm667, %v763
  %812 = vst.msk [vmem:[#allocation3 + $0x178] sm:$0xff] %vm667, %v764
  %v813 = vld [vmem:[#allocation2 + $0x1] sm:$0xff]
  %v814 = vld [vmem:[#allocation2 + $0x9] sm:$0xff]
  %v815 = vld [vmem:[#allocation2 + $0x11] sm:$0xff]
  %v816 = vld [vmem:[#allocation2 + $0x19] sm:$0xff]
  %v817 = vld [vmem:[#allocation2 + $0x21] sm:$0xff]
  %v818 = vld [vmem:[#allocation2 + $0x29] sm:$0xff]
  %v819 = vld [vmem:[#allocation2 + $0x31] sm:$0xff]
  %v820 = vld [vmem:[#allocation2 + $0x39] sm:$0xff]
  %v821 = vld [vmem:[#allocation2 + $0x41] sm:$0xff]
  %v822 = vld [vmem:[#allocation2 + $0x49] sm:$0xff]
  %v823 = vld [vmem:[#allocation2 + $0x51] sm:$0xff]
  %v824 = vld [vmem:[#allocation2 + $0x59] sm:$0xff]
  %v825 = vld [vmem:[#allocation2 + $0x61] sm:$0xff]
  %v826 = vld [vmem:[#allocation2 + $0x69] sm:$0xff]
  %v827 = vld [vmem:[#allocation2 + $0x71] sm:$0xff]
  %v828 = vld [vmem:[#allocation2 + $0x79] sm:$0xff]
  %v829 = vld [vmem:[#allocation2 + $0x81] sm:$0xff]
  %v830 = vld [vmem:[#allocation2 + $0x89] sm:$0xff]
  %v831 = vld [vmem:[#allocation2 + $0x91] sm:$0xff]
  %v832 = vld [vmem:[#allocation2 + $0x99] sm:$0xff]
  %v833 = vld [vmem:[#allocation2 + $0xa1] sm:$0xff]
  %v834 = vld [vmem:[#allocation2 + $0xa9] sm:$0xff]
  %v835 = vld [vmem:[#allocation2 + $0xb1] sm:$0xff]
  %v836 = vld [vmem:[#allocation2 + $0xb9] sm:$0xff]
  %v837 = vld [vmem:[#allocation2 + $0xc1] sm:$0xff]
  %v838 = vld [vmem:[#allocation2 + $0xc9] sm:$0xff]
  %v839 = vld [vmem:[#allocation2 + $0xd1] sm:$0xff]
  %v840 = vld [vmem:[#allocation2 + $0xd9] sm:$0xff]
  %v841 = vld [vmem:[#allocation2 + $0xe1] sm:$0xff]
  %v842 = vld [vmem:[#allocation2 + $0xe9] sm:$0xff]
  %v843 = vld [vmem:[#allocation2 + $0xf1] sm:$0xff]
  %v844 = vld [vmem:[#allocation2 + $0xf9] sm:$0xff]
  %v845 = vld [vmem:[#allocation2 + $0x101] sm:$0xff]
  %v846 = vld [vmem:[#allocation2 + $0x109] sm:$0xff]
  %v847 = vld [vmem:[#allocation2 + $0x111] sm:$0xff]
  %v848 = vld [vmem:[#allocation2 + $0x119] sm:$0xff]
  %v849 = vld [vmem:[#allocation2 + $0x121] sm:$0xff]
  %v850 = vld [vmem:[#allocation2 + $0x129] sm:$0xff]
  %v851 = vld [vmem:[#allocation2 + $0x131] sm:$0xff]
  %v852 = vld [vmem:[#allocation2 + $0x139] sm:$0xff]
  %v853 = vld [vmem:[#allocation2 + $0x141] sm:$0xff]
  %v854 = vld [vmem:[#allocation2 + $0x149] sm:$0xff]
  %v855 = vld [vmem:[#allocation2 + $0x151] sm:$0xff]
  %v856 = vld [vmem:[#allocation2 + $0x159] sm:$0xff]
  %v857 = vld [vmem:[#allocation2 + $0x161] sm:$0xff]
  %v858 = vld [vmem:[#allocation2 + $0x169] sm:$0xff]
  %v859 = vld [vmem:[#allocation2 + $0x171] sm:$0xff]
  %v860 = vld [vmem:[#allocation2 + $0x179] sm:$0xff]
  %909 = vrot.lane.b32.xlu0 %v813, 16
  %v910 = vpop.permute.xlu0 %909
  %911 = vrot.lane.b32.xlu0 %v814, 16
  %v912 = vpop.permute.xlu0 %911
  %913 = vrot.lane.b32.xlu0 %v815, 16
  %v914 = vpop.permute.xlu0 %913
  %915 = vrot.lane.b32.xlu0 %v816, 16
  %v916 = vpop.permute.xlu0 %915
  %917 = vrot.lane.b32.xlu0 %v817, 16
  %v918 = vpop.permute.xlu0 %917
  %919 = vrot.lane.b32.xlu0 %v818, 16
  %v920 = vpop.permute.xlu0 %919
  %921 = vrot.lane.b32.xlu0 %v819, 16
  %v922 = vpop.permute.xlu0 %921
  %923 = vrot.lane.b32.xlu0 %v820, 16
  %v924 = vpop.permute.xlu0 %923
  %925 = vrot.lane.b32.xlu0 %v821, 16
  %v926 = vpop.permute.xlu0 %925
  %927 = vrot.lane.b32.xlu0 %v822, 16
  %v928 = vpop.permute.xlu0 %927
  %929 = vrot.lane.b32.xlu0 %v823, 16
  %v930 = vpop.permute.xlu0 %929
  %931 = vrot.lane.b32.xlu0 %v824, 16
  %v932 = vpop.permute.xlu0 %931
  %933 = vrot.lane.b32.xlu0 %v825, 16
  %v934 = vpop.permute.xlu0 %933
  %935 = vrot.lane.b32.xlu0 %v826, 16
  %v936 = vpop.permute.xlu0 %935
  %937 = vrot.lane.b32.xlu0 %v827, 16
  %v938 = vpop.permute.xlu0 %937
  %939 = vrot.lane.b32.xlu0 %v828, 16
  %v940 = vpop.permute.xlu0 %939
  %941 = vrot.lane.b32.xlu0 %v829, 16
  %v942 = vpop.permute.xlu0 %941
  %943 = vrot.lane.b32.xlu0 %v830, 16
  %v944 = vpop.permute.xlu0 %943
  %945 = vrot.lane.b32.xlu0 %v831, 16
  %v946 = vpop.permute.xlu0 %945
  %947 = vrot.lane.b32.xlu0 %v832, 16
  %v948 = vpop.permute.xlu0 %947
  %949 = vrot.lane.b32.xlu0 %v833, 16
  %v950 = vpop.permute.xlu0 %949
  %951 = vrot.lane.b32.xlu0 %v834, 16
  %v952 = vpop.permute.xlu0 %951
  %953 = vrot.lane.b32.xlu0 %v835, 16
  %v954 = vpop.permute.xlu0 %953
  %955 = vrot.lane.b32.xlu0 %v836, 16
  %v956 = vpop.permute.xlu0 %955
  %957 = vrot.lane.b32.xlu0 %v837, 16
  %v958 = vpop.permute.xlu0 %957
  %959 = vrot.lane.b32.xlu0 %v838, 16
  %v960 = vpop.permute.xlu0 %959
  %961 = vrot.lane.b32.xlu0 %v839, 16
  %v962 = vpop.permute.xlu0 %961
  %963 = vrot.lane.b32.xlu0 %v840, 16
  %v964 = vpop.permute.xlu0 %963
  %965 = vrot.lane.b32.xlu0 %v841, 16
  %v966 = vpop.permute.xlu0 %965
  %967 = vrot.lane.b32.xlu0 %v842, 16
  %v968 = vpop.permute.xlu0 %967
  %969 = vrot.lane.b32.xlu0 %v843, 16
  %v970 = vpop.permute.xlu0 %969
  %971 = vrot.lane.b32.xlu0 %v844, 16
  %v972 = vpop.permute.xlu0 %971
  %973 = vrot.lane.b32.xlu0 %v845, 16
  %v974 = vpop.permute.xlu0 %973
  %975 = vrot.lane.b32.xlu0 %v846, 16
  %v976 = vpop.permute.xlu0 %975
  %977 = vrot.lane.b32.xlu0 %v847, 16
  %v978 = vpop.permute.xlu0 %977
  %979 = vrot.lane.b32.xlu0 %v848, 16
  %v980 = vpop.permute.xlu0 %979
  %981 = vrot.lane.b32.xlu0 %v849, 16
  %v982 = vpop.permute.xlu0 %981
  %983 = vrot.lane.b32.xlu0 %v850, 16
  %v984 = vpop.permute.xlu0 %983
  %985 = vrot.lane.b32.xlu0 %v851, 16
  %v986 = vpop.permute.xlu0 %985
  %987 = vrot.lane.b32.xlu0 %v852, 16
  %v988 = vpop.permute.xlu0 %987
  %989 = vrot.lane.b32.xlu0 %v853, 16
  %v990 = vpop.permute.xlu0 %989
  %991 = vrot.lane.b32.xlu0 %v854, 16
  %v992 = vpop.permute.xlu0 %991
  %993 = vrot.lane.b32.xlu0 %v855, 16
  %v994 = vpop.permute.xlu0 %993
  %995 = vrot.lane.b32.xlu0 %v856, 16
  %v996 = vpop.permute.xlu0 %995
  %997 = vrot.lane.b32.xlu0 %v857, 16
  %v998 = vpop.permute.xlu0 %997
  %999 = vrot.lane.b32.xlu0 %v858, 16
  %v1000 = vpop.permute.xlu0 %999
  %1001 = vrot.lane.b32.xlu0 %v859, 16
  %v1002 = vpop.permute.xlu0 %1001
  %1003 = vrot.lane.b32.xlu0 %v860, 16
  %v1004 = vpop.permute.xlu0 %1003
  %vm1053 = vcmask 261248
  %1054 = vst.msk [vmem:[#allocation3] sm:$0xff] %vm1053, %v910
  %1055 = vst.msk [vmem:[#allocation3 + $0x8] sm:$0xff] %vm1053, %v912
  %1056 = vst.msk [vmem:[#allocation3 + $0x10] sm:$0xff] %vm1053, %v914
  %1057 = vst.msk [vmem:[#allocation3 + $0x18] sm:$0xff] %vm1053, %v916
  %1058 = vst.msk [vmem:[#allocation3 + $0x20] sm:$0xff] %vm1053, %v918
  %1059 = vst.msk [vmem:[#allocation3 + $0x28] sm:$0xff] %vm1053, %v920
  %1060 = vst.msk [vmem:[#allocation3 + $0x30] sm:$0xff] %vm1053, %v922
  %1061 = vst.msk [vmem:[#allocation3 + $0x38] sm:$0xff] %vm1053, %v924
  %1062 = vst.msk [vmem:[#allocation3 + $0x40] sm:$0xff] %vm1053, %v926
  %1063 = vst.msk [vmem:[#allocation3 + $0x48] sm:$0xff] %vm1053, %v928
  %1064 = vst.msk [vmem:[#allocation3 + $0x50] sm:$0xff] %vm1053, %v930
  %1065 = vst.msk [vmem:[#allocation3 + $0x58] sm:$0xff] %vm1053, %v932
  %1066 = vst.msk [vmem:[#allocation3 + $0x60] sm:$0xff] %vm1053, %v934
  %1067 = vst.msk [vmem:[#allocation3 + $0x68] sm:$0xff] %vm1053, %v936
  %1068 = vst.msk [vmem:[#allocation3 + $0x70] sm:$0xff] %vm1053, %v938
  %1069 = vst.msk [vmem:[#allocation3 + $0x78] sm:$0xff] %vm1053, %v940
  %1070 = vst.msk [vmem:[#allocation3 + $0x80] sm:$0xff] %vm1053, %v942
  %1071 = vst.msk [vmem:[#allocation3 + $0x88] sm:$0xff] %vm1053, %v944
  %1072 = vst.msk [vmem:[#allocation3 + $0x90] sm:$0xff] %vm1053, %v946
  %1073 = vst.msk [vmem:[#allocation3 + $0x98] sm:$0xff] %vm1053, %v948
  %1074 = vst.msk [vmem:[#allocation3 + $0xa0] sm:$0xff] %vm1053, %v950
  %1075 = vst.msk [vmem:[#allocation3 + $0xa8] sm:$0xff] %vm1053, %v952
  %1076 = vst.msk [vmem:[#allocation3 + $0xb0] sm:$0xff] %vm1053, %v954
  %1077 = vst.msk [vmem:[#allocation3 + $0xb8] sm:$0xff] %vm1053, %v956
  %1078 = vst.msk [vmem:[#allocation3 + $0xc0] sm:$0xff] %vm1053, %v958
  %1079 = vst.msk [vmem:[#allocation3 + $0xc8] sm:$0xff] %vm1053, %v960
  %1080 = vst.msk [vmem:[#allocation3 + $0xd0] sm:$0xff] %vm1053, %v962
  %1081 = vst.msk [vmem:[#allocation3 + $0xd8] sm:$0xff] %vm1053, %v964
  %1082 = vst.msk [vmem:[#allocation3 + $0xe0] sm:$0xff] %vm1053, %v966
  %1083 = vst.msk [vmem:[#allocation3 + $0xe8] sm:$0xff] %vm1053, %v968
  %1084 = vst.msk [vmem:[#allocation3 + $0xf0] sm:$0xff] %vm1053, %v970
  %1085 = vst.msk [vmem:[#allocation3 + $0xf8] sm:$0xff] %vm1053, %v972
  %1086 = vst.msk [vmem:[#allocation3 + $0x100] sm:$0xff] %vm1053, %v974
  %1087 = vst.msk [vmem:[#allocation3 + $0x108] sm:$0xff] %vm1053, %v976
  %1088 = vst.msk [vmem:[#allocation3 + $0x110] sm:$0xff] %vm1053, %v978
  %1089 = vst.msk [vmem:[#allocation3 + $0x118] sm:$0xff] %vm1053, %v980
  %1090 = vst.msk [vmem:[#allocation3 + $0x120] sm:$0xff] %vm1053, %v982
  %1091 = vst.msk [vmem:[#allocation3 + $0x128] sm:$0xff] %vm1053, %v984
  %1092 = vst.msk [vmem:[#allocation3 + $0x130] sm:$0xff] %vm1053, %v986
  %1093 = vst.msk [vmem:[#allocation3 + $0x138] sm:$0xff] %vm1053, %v988
  %1094 = vst.msk [vmem:[#allocation3 + $0x140] sm:$0xff] %vm1053, %v990
  %1095 = vst.msk [vmem:[#allocation3 + $0x148] sm:$0xff] %vm1053, %v992
  %1096 = vst.msk [vmem:[#allocation3 + $0x150] sm:$0xff] %vm1053, %v994
  %1097 = vst.msk [vmem:[#allocation3 + $0x158] sm:$0xff] %vm1053, %v996
  %1098 = vst.msk [vmem:[#allocation3 + $0x160] sm:$0xff] %vm1053, %v998
  %1099 = vst.msk [vmem:[#allocation3 + $0x168] sm:$0xff] %vm1053, %v1000
  %1100 = vst.msk [vmem:[#allocation3 + $0x170] sm:$0xff] %vm1053, %v1002
  %1101 = vst.msk [vmem:[#allocation3 + $0x178] sm:$0xff] %vm1053, %v1004
  %v1102 = vld [vmem:[#allocation2 + $0x7] sm:$0xff]
  %v1103 = vld [vmem:[#allocation2 + $0xf] sm:$0xff]
  %v1104 = vld [vmem:[#allocation2 + $0x17] sm:$0xff]
  %v1105 = vld [vmem:[#allocation2 + $0x1f] sm:$0xff]
  %v1106 = vld [vmem:[#allocation2 + $0x27] sm:$0xff]
  %v1107 = vld [vmem:[#allocation2 + $0x2f] sm:$0xff]
  %v1108 = vld [vmem:[#allocation2 + $0x37] sm:$0xff]
  %v1109 = vld [vmem:[#allocation2 + $0x3f] sm:$0xff]
  %v1110 = vld [vmem:[#allocation2 + $0x47] sm:$0xff]
  %v1111 = vld [vmem:[#allocation2 + $0x4f] sm:$0xff]
  %v1112 = vld [vmem:[#allocation2 + $0x57] sm:$0xff]
  %v1113 = vld [vmem:[#allocation2 + $0x5f] sm:$0xff]
  %v1114 = vld [vmem:[#allocation2 + $0x67] sm:$0xff]
  %v1115 = vld [vmem:[#allocation2 + $0x6f] sm:$0xff]
  %v1116 = vld [vmem:[#allocation2 + $0x77] sm:$0xff]
  %v1117 = vld [vmem:[#allocation2 + $0x7f] sm:$0xff]
  %v1118 = vld [vmem:[#allocation2 + $0x87] sm:$0xff]
  %v1119 = vld [vmem:[#allocation2 + $0x8f] sm:$0xff]
  %v1120 = vld [vmem:[#allocation2 + $0x97] sm:$0xff]
  %v1121 = vld [vmem:[#allocation2 + $0x9f] sm:$0xff]
  %v1122 = vld [vmem:[#allocation2 + $0xa7] sm:$0xff]
  %v1123 = vld [vmem:[#allocation2 + $0xaf] sm:$0xff]
  %v1124 = vld [vmem:[#allocation2 + $0xb7] sm:$0xff]
  %v1125 = vld [vmem:[#allocation2 + $0xbf] sm:$0xff]
  %v1126 = vld [vmem:[#allocation2 + $0xc7] sm:$0xff]
  %v1127 = vld [vmem:[#allocation2 + $0xcf] sm:$0xff]
  %v1128 = vld [vmem:[#allocation2 + $0xd7] sm:$0xff]
  %v1129 = vld [vmem:[#allocation2 + $0xdf] sm:$0xff]
  %v1130 = vld [vmem:[#allocation2 + $0xe7] sm:$0xff]
  %v1131 = vld [vmem:[#allocation2 + $0xef] sm:$0xff]
  %v1132 = vld [vmem:[#allocation2 + $0xf7] sm:$0xff]
  %v1133 = vld [vmem:[#allocation2 + $0xff] sm:$0xff]
  %v1134 = vld [vmem:[#allocation2 + $0x107] sm:$0xff]
  %v1135 = vld [vmem:[#allocation2 + $0x10f] sm:$0xff]
  %v1136 = vld [vmem:[#allocation2 + $0x117] sm:$0xff]
  %v1137 = vld [vmem:[#allocation2 + $0x11f] sm:$0xff]
  %v1138 = vld [vmem:[#allocation2 + $0x127] sm:$0xff]
  %v1139 = vld [vmem:[#allocation2 + $0x12f] sm:$0xff]
  %v1140 = vld [vmem:[#allocation2 + $0x137] sm:$0xff]
  %v1141 = vld [vmem:[#allocation2 + $0x13f] sm:$0xff]
  %v1142 = vld [vmem:[#allocation2 + $0x147] sm:$0xff]
  %v1143 = vld [vmem:[#allocation2 + $0x14f] sm:$0xff]
  %v1144 = vld [vmem:[#allocation2 + $0x157] sm:$0xff]
  %v1145 = vld [vmem:[#allocation2 + $0x15f] sm:$0xff]
  %v1146 = vld [vmem:[#allocation2 + $0x167] sm:$0xff]
  %v1147 = vld [vmem:[#allocation2 + $0x16f] sm:$0xff]
  %v1148 = vld [vmem:[#allocation2 + $0x177] sm:$0xff]
  %v1149 = vld [vmem:[#allocation2 + $0x17f] sm:$0xff]
  %1198 = vrot.lane.b32.xlu0 %v1102, 32
  %v1199 = vpop.permute.xlu0 %1198
  %1200 = vrot.lane.b32.xlu0 %v1103, 32
  %v1201 = vpop.permute.xlu0 %1200
  %1202 = vrot.lane.b32.xlu0 %v1104, 32
  %v1203 = vpop.permute.xlu0 %1202
  %1204 = vrot.lane.b32.xlu0 %v1105, 32
  %v1205 = vpop.permute.xlu0 %1204
  %1206 = vrot.lane.b32.xlu0 %v1106, 32
  %v1207 = vpop.permute.xlu0 %1206
  %1208 = vrot.lane.b32.xlu0 %v1107, 32
  %v1209 = vpop.permute.xlu0 %1208
  %1210 = vrot.lane.b32.xlu0 %v1108, 32
  %v1211 = vpop.permute.xlu0 %1210
  %1212 = vrot.lane.b32.xlu0 %v1109, 32
  %v1213 = vpop.permute.xlu0 %1212
  %1214 = vrot.lane.b32.xlu0 %v1110, 32
  %v1215 = vpop.permute.xlu0 %1214
  %1216 = vrot.lane.b32.xlu0 %v1111, 32
  %v1217 = vpop.permute.xlu0 %1216
  %1218 = vrot.lane.b32.xlu0 %v1112, 32
  %v1219 = vpop.permute.xlu0 %1218
  %1220 = vrot.lane.b32.xlu0 %v1113, 32
  %v1221 = vpop.permute.xlu0 %1220
  %1222 = vrot.lane.b32.xlu0 %v1114, 32
  %v1223 = vpop.permute.xlu0 %1222
  %1224 = vrot.lane.b32.xlu0 %v1115, 32
  %v1225 = vpop.permute.xlu0 %1224
  %1226 = vrot.lane.b32.xlu0 %v1116, 32
  %v1227 = vpop.permute.xlu0 %1226
  %1228 = vrot.lane.b32.xlu0 %v1117, 32
  %v1229 = vpop.permute.xlu0 %1228
  %1230 = vrot.lane.b32.xlu0 %v1118, 32
  %v1231 = vpop.permute.xlu0 %1230
  %1232 = vrot.lane.b32.xlu0 %v1119, 32
  %v1233 = vpop.permute.xlu0 %1232
  %1234 = vrot.lane.b32.xlu0 %v1120, 32
  %v1235 = vpop.permute.xlu0 %1234
  %1236 = vrot.lane.b32.xlu0 %v1121, 32
  %v1237 = vpop.permute.xlu0 %1236
  %1238 = vrot.lane.b32.xlu0 %v1122, 32
  %v1239 = vpop.permute.xlu0 %1238
  %1240 = vrot.lane.b32.xlu0 %v1123, 32
  %v1241 = vpop.permute.xlu0 %1240
  %1242 = vrot.lane.b32.xlu0 %v1124, 32
  %v1243 = vpop.permute.xlu0 %1242
  %1244 = vrot.lane.b32.xlu0 %v1125, 32
  %v1245 = vpop.permute.xlu0 %1244
  %1246 = vrot.lane.b32.xlu0 %v1126, 32
  %v1247 = vpop.permute.xlu0 %1246
  %1248 = vrot.lane.b32.xlu0 %v1127, 32
  %v1249 = vpop.permute.xlu0 %1248
  %1250 = vrot.lane.b32.xlu0 %v1128, 32
  %v1251 = vpop.permute.xlu0 %1250
  %1252 = vrot.lane.b32.xlu0 %v1129, 32
  %v1253 = vpop.permute.xlu0 %1252
  %1254 = vrot.lane.b32.xlu0 %v1130, 32
  %v1255 = vpop.permute.xlu0 %1254
  %1256 = vrot.lane.b32.xlu0 %v1131, 32
  %v1257 = vpop.permute.xlu0 %1256
  %1258 = vrot.lane.b32.xlu0 %v1132, 32
  %v1259 = vpop.permute.xlu0 %1258
  %1260 = vrot.lane.b32.xlu0 %v1133, 32
  %v1261 = vpop.permute.xlu0 %1260
  %1262 = vrot.lane.b32.xlu0 %v1134, 32
  %v1263 = vpop.permute.xlu0 %1262
  %1264 = vrot.lane.b32.xlu0 %v1135, 32
  %v1265 = vpop.permute.xlu0 %1264
  %1266 = vrot.lane.b32.xlu0 %v1136, 32
  %v1267 = vpop.permute.xlu0 %1266
  %1268 = vrot.lane.b32.xlu0 %v1137, 32
  %v1269 = vpop.permute.xlu0 %1268
  %1270 = vrot.lane.b32.xlu0 %v1138, 32
  %v1271 = vpop.permute.xlu0 %1270
  %1272 = vrot.lane.b32.xlu0 %v1139, 32
  %v1273 = vpop.permute.xlu0 %1272
  %1274 = vrot.lane.b32.xlu0 %v1140, 32
  %v1275 = vpop.permute.xlu0 %1274
  %1276 = vrot.lane.b32.xlu0 %v1141, 32
  %v1277 = vpop.permute.xlu0 %1276
  %1278 = vrot.lane.b32.xlu0 %v1142, 32
  %v1279 = vpop.permute.xlu0 %1278
  %1280 = vrot.lane.b32.xlu0 %v1143, 32
  %v1281 = vpop.permute.xlu0 %1280
  %1282 = vrot.lane.b32.xlu0 %v1144, 32
  %v1283 = vpop.permute.xlu0 %1282
  %1284 = vrot.lane.b32.xlu0 %v1145, 32
  %v1285 = vpop.permute.xlu0 %1284
  %1286 = vrot.lane.b32.xlu0 %v1146, 32
  %v1287 = vpop.permute.xlu0 %1286
  %1288 = vrot.lane.b32.xlu0 %v1147, 32
  %v1289 = vpop.permute.xlu0 %1288
  %1290 = vrot.lane.b32.xlu0 %v1148, 32
  %v1291 = vpop.permute.xlu0 %1290
  %1292 = vrot.lane.b32.xlu0 %v1149, 32
  %v1293 = vpop.permute.xlu0 %1292
  %vm1342 = vcmask 392448
  %1343 = vst.msk [vmem:[#allocation3] sm:$0xff] %vm1342, %v1199
  %1344 = vst.msk [vmem:[#allocation3 + $0x8] sm:$0xff] %vm1342, %v1201
  %1345 = vst.msk [vmem:[#allocation3 + $0x10] sm:$0xff] %vm1342, %v1203
  %1346 = vst.msk [vmem:[#allocation3 + $0x18] sm:$0xff] %vm1342, %v1205
  %1347 = vst.msk [vmem:[#allocation3 + $0x20] sm:$0xff] %vm1342, %v1207
  %1348 = vst.msk [vmem:[#allocation3 + $0x28] sm:$0xff] %vm1342, %v1209
  %1349 = vst.msk [vmem:[#allocation3 + $0x30] sm:$0xff] %vm1342, %v1211
  %1350 = vst.msk [vmem:[#allocation3 + $0x38] sm:$0xff] %vm1342, %v1213
  %1351 = vst.msk [vmem:[#allocation3 + $0x40] sm:$0xff] %vm1342, %v1215
  %1352 = vst.msk [vmem:[#allocation3 + $0x48] sm:$0xff] %vm1342, %v1217
  %1353 = vst.msk [vmem:[#allocation3 + $0x50] sm:$0xff] %vm1342, %v1219
  %1354 = vst.msk [vmem:[#allocation3 + $0x58] sm:$0xff] %vm1342, %v1221
  %1355 = vst.msk [vmem:[#allocation3 + $0x60] sm:$0xff] %vm1342, %v1223
  %1356 = vst.msk [vmem:[#allocation3 + $0x68] sm:$0xff] %vm1342, %v1225
  %1357 = vst.msk [vmem:[#allocation3 + $0x70] sm:$0xff] %vm1342, %v1227
  %1358 = vst.msk [vmem:[#allocation3 + $0x78] sm:$0xff] %vm1342, %v1229
  %1359 = vst.msk [vmem:[#allocation3 + $0x80] sm:$0xff] %vm1342, %v1231
  %1360 = vst.msk [vmem:[#allocation3 + $0x88] sm:$0xff] %vm1342, %v1233
  %1361 = vst.msk [vmem:[#allocation3 + $0x90] sm:$0xff] %vm1342, %v1235
  %1362 = vst.msk [vmem:[#allocation3 + $0x98] sm:$0xff] %vm1342, %v1237
  %1363 = vst.msk [vmem:[#allocation3 + $0xa0] sm:$0xff] %vm1342, %v1239
  %1364 = vst.msk [vmem:[#allocation3 + $0xa8] sm:$0xff] %vm1342, %v1241
  %1365 = vst.msk [vmem:[#allocation3 + $0xb0] sm:$0xff] %vm1342, %v1243
  %1366 = vst.msk [vmem:[#allocation3 + $0xb8] sm:$0xff] %vm1342, %v1245
  %1367 = vst.msk [vmem:[#allocation3 + $0xc0] sm:$0xff] %vm1342, %v1247
  %1368 = vst.msk [vmem:[#allocation3 + $0xc8] sm:$0xff] %vm1342, %v1249
  %1369 = vst.msk [vmem:[#allocation3 + $0xd0] sm:$0xff] %vm1342, %v1251
  %1370 = vst.msk [vmem:[#allocation3 + $0xd8] sm:$0xff] %vm1342, %v1253
  %1371 = vst.msk [vmem:[#allocation3 + $0xe0] sm:$0xff] %vm1342, %v1255
  %1372 = vst.msk [vmem:[#allocation3 + $0xe8] sm:$0xff] %vm1342, %v1257
  %1373 = vst.msk [vmem:[#allocation3 + $0xf0] sm:$0xff] %vm1342, %v1259
  %1374 = vst.msk [vmem:[#allocation3 + $0xf8] sm:$0xff] %vm1342, %v1261
  %1375 = vst.msk [vmem:[#allocation3 + $0x100] sm:$0xff] %vm1342, %v1263
  %1376 = vst.msk [vmem:[#allocation3 + $0x108] sm:$0xff] %vm1342, %v1265
  %1377 = vst.msk [vmem:[#allocation3 + $0x110] sm:$0xff] %vm1342, %v1267
  %1378 = vst.msk [vmem:[#allocation3 + $0x118] sm:$0xff] %vm1342, %v1269
  %1379 = vst.msk [vmem:[#allocation3 + $0x120] sm:$0xff] %vm1342, %v1271
  %1380 = vst.msk [vmem:[#allocation3 + $0x128] sm:$0xff] %vm1342, %v1273
  %1381 = vst.msk [vmem:[#allocation3 + $0x130] sm:$0xff] %vm1342, %v1275
  %1382 = vst.msk [vmem:[#allocation3 + $0x138] sm:$0xff] %vm1342, %v1277
  %1383 = vst.msk [vmem:[#allocation3 + $0x140] sm:$0xff] %vm1342, %v1279
  %1384 = vst.msk [vmem:[#allocation3 + $0x148] sm:$0xff] %vm1342, %v1281
  %1385 = vst.msk [vmem:[#allocation3 + $0x150] sm:$0xff] %vm1342, %v1283
  %1386 = vst.msk [vmem:[#allocation3 + $0x158] sm:$0xff] %vm1342, %v1285
  %1387 = vst.msk [vmem:[#allocation3 + $0x160] sm:$0xff] %vm1342, %v1287
  %1388 = vst.msk [vmem:[#allocation3 + $0x168] sm:$0xff] %vm1342, %v1289
  %1389 = vst.msk [vmem:[#allocation3 + $0x170] sm:$0xff] %vm1342, %v1291
  %1390 = vst.msk [vmem:[#allocation3 + $0x178] sm:$0xff] %vm1342, %v1293
  %v1391 = vld [vmem:[#allocation2 + $0x8] sm:$0xff]
  %v1392 = vld [vmem:[#allocation2 + $0x10] sm:$0xff]
  %v1393 = vld [vmem:[#allocation2 + $0x18] sm:$0xff]
  %v1394 = vld [vmem:[#allocation2 + $0x20] sm:$0xff]
  %v1395 = vld [vmem:[#allocation2 + $0x28] sm:$0xff]
  %v1396 = vld [vmem:[#allocation2 + $0x30] sm:$0xff]
  %v1397 = vld [vmem:[#allocation2 + $0x38] sm:$0xff]
  %v1398 = vld [vmem:[#allocation2 + $0x40] sm:$0xff]
  %v1399 = vld [vmem:[#allocation2 + $0x48] sm:$0xff]
  %v1400 = vld [vmem:[#allocation2 + $0x50] sm:$0xff]
  %v1401 = vld [vmem:[#allocation2 + $0x58] sm:$0xff]
  %v1402 = vld [vmem:[#allocation2 + $0x60] sm:$0xff]
  %v1403 = vld [vmem:[#allocation2 + $0x68] sm:$0xff]
  %v1404 = vld [vmem:[#allocation2 + $0x70] sm:$0xff]
  %v1405 = vld [vmem:[#allocation2 + $0x78] sm:$0xff]
  %v1406 = vld [vmem:[#allocation2 + $0x80] sm:$0xff]
  %v1407 = vld [vmem:[#allocation2 + $0x88] sm:$0xff]
  %v1408 = vld [vmem:[#allocation2 + $0x90] sm:$0xff]
  %v1409 = vld [vmem:[#allocation2 + $0x98] sm:$0xff]
  %v1410 = vld [vmem:[#allocation2 + $0xa0] sm:$0xff]
  %v1411 = vld [vmem:[#allocation2 + $0xa8] sm:$0xff]
  %v1412 = vld [vmem:[#allocation2 + $0xb0] sm:$0xff]
  %v1413 = vld [vmem:[#allocation2 + $0xb8] sm:$0xff]
  %v1414 = vld [vmem:[#allocation2 + $0xc0] sm:$0xff]
  %v1415 = vld [vmem:[#allocation2 + $0xc8] sm:$0xff]
  %v1416 = vld [vmem:[#allocation2 + $0xd0] sm:$0xff]
  %v1417 = vld [vmem:[#allocation2 + $0xd8] sm:$0xff]
  %v1418 = vld [vmem:[#allocation2 + $0xe0] sm:$0xff]
  %v1419 = vld [vmem:[#allocation2 + $0xe8] sm:$0xff]
  %v1420 = vld [vmem:[#allocation2 + $0xf0] sm:$0xff]
  %v1421 = vld [vmem:[#allocation2 + $0xf8] sm:$0xff]
  %v1422 = vld [vmem:[#allocation2 + $0x100] sm:$0xff]
  %v1423 = vld [vmem:[#allocation2 + $0x108] sm:$0xff]
  %v1424 = vld [vmem:[#allocation2 + $0x110] sm:$0xff]
  %v1425 = vld [vmem:[#allocation2 + $0x118] sm:$0xff]
  %v1426 = vld [vmem:[#allocation2 + $0x120] sm:$0xff]
  %v1427 = vld [vmem:[#allocation2 + $0x128] sm:$0xff]
  %v1428 = vld [vmem:[#allocation2 + $0x130] sm:$0xff]
  %v1429 = vld [vmem:[#allocation2 + $0x138] sm:$0xff]
  %v1430 = vld [vmem:[#allocation2 + $0x140] sm:$0xff]
  %v1431 = vld [vmem:[#allocation2 + $0x148] sm:$0xff]
  %v1432 = vld [vmem:[#allocation2 + $0x150] sm:$0xff]
  %v1433 = vld [vmem:[#allocation2 + $0x158] sm:$0xff]
  %v1434 = vld [vmem:[#allocation2 + $0x160] sm:$0xff]
  %v1435 = vld [vmem:[#allocation2 + $0x168] sm:$0xff]
  %v1436 = vld [vmem:[#allocation2 + $0x170] sm:$0xff]
  %v1437 = vld [vmem:[#allocation2 + $0x178] sm:$0xff]
  %v1438 = vld [vmem:[#allocation2 + $0x180] sm:$0xff]
  %1487 = vrot.lane.b32.xlu0 %v1391, 48
  %v1488 = vpop.permute.xlu0 %1487
  %1489 = vrot.lane.b32.xlu0 %v1392, 48
  %v1490 = vpop.permute.xlu0 %1489
  %1491 = vrot.lane.b32.xlu0 %v1393, 48
  %v1492 = vpop.permute.xlu0 %1491
  %1493 = vrot.lane.b32.xlu0 %v1394, 48
  %v1494 = vpop.permute.xlu0 %1493
  %1495 = vrot.lane.b32.xlu0 %v1395, 48
  %v1496 = vpop.permute.xlu0 %1495
  %1497 = vrot.lane.b32.xlu0 %v1396, 48
  %v1498 = vpop.permute.xlu0 %1497
  %1499 = vrot.lane.b32.xlu0 %v1397, 48
  %v1500 = vpop.permute.xlu0 %1499
  %1501 = vrot.lane.b32.xlu0 %v1398, 48
  %v1502 = vpop.permute.xlu0 %1501
  %1503 = vrot.lane.b32.xlu0 %v1399, 48
  %v1504 = vpop.permute.xlu0 %1503
  %1505 = vrot.lane.b32.xlu0 %v1400, 48
  %v1506 = vpop.permute.xlu0 %1505
  %1507 = vrot.lane.b32.xlu0 %v1401, 48
  %v1508 = vpop.permute.xlu0 %1507
  %1509 = vrot.lane.b32.xlu0 %v1402, 48
  %v1510 = vpop.permute.xlu0 %1509
  %1511 = vrot.lane.b32.xlu0 %v1403, 48
  %v1512 = vpop.permute.xlu0 %1511
  %1513 = vrot.lane.b32.xlu0 %v1404, 48
  %v1514 = vpop.permute.xlu0 %1513
  %1515 = vrot.lane.b32.xlu0 %v1405, 48
  %v1516 = vpop.permute.xlu0 %1515
  %1517 = vrot.lane.b32.xlu0 %v1406, 48
  %v1518 = vpop.permute.xlu0 %1517
  %1519 = vrot.lane.b32.xlu0 %v1407, 48
  %v1520 = vpop.permute.xlu0 %1519
  %1521 = vrot.lane.b32.xlu0 %v1408, 48
  %v1522 = vpop.permute.xlu0 %1521
  %1523 = vrot.lane.b32.xlu0 %v1409, 48
  %v1524 = vpop.permute.xlu0 %1523
  %1525 = vrot.lane.b32.xlu0 %v1410, 48
  %v1526 = vpop.permute.xlu0 %1525
  %1527 = vrot.lane.b32.xlu0 %v1411, 48
  %v1528 = vpop.permute.xlu0 %1527
  %1529 = vrot.lane.b32.xlu0 %v1412, 48
  %v1530 = vpop.permute.xlu0 %1529
  %1531 = vrot.lane.b32.xlu0 %v1413, 48
  %v1532 = vpop.permute.xlu0 %1531
  %1533 = vrot.lane.b32.xlu0 %v1414, 48
  %v1534 = vpop.permute.xlu0 %1533
  %1535 = vrot.lane.b32.xlu0 %v1415, 48
  %v1536 = vpop.permute.xlu0 %1535
  %1537 = vrot.lane.b32.xlu0 %v1416, 48
  %v1538 = vpop.permute.xlu0 %1537
  %1539 = vrot.lane.b32.xlu0 %v1417, 48
  %v1540 = vpop.permute.xlu0 %1539
  %1541 = vrot.lane.b32.xlu0 %v1418, 48
  %v1542 = vpop.permute.xlu0 %1541
  %1543 = vrot.lane.b32.xlu0 %v1419, 48
  %v1544 = vpop.permute.xlu0 %1543
  %1545 = vrot.lane.b32.xlu0 %v1420, 48
  %v1546 = vpop.permute.xlu0 %1545
  %1547 = vrot.lane.b32.xlu0 %v1421, 48
  %v1548 = vpop.permute.xlu0 %1547
  %1549 = vrot.lane.b32.xlu0 %v1422, 48
  %v1550 = vpop.permute.xlu0 %1549
  %1551 = vrot.lane.b32.xlu0 %v1423, 48
  %v1552 = vpop.permute.xlu0 %1551
  %1553 = vrot.lane.b32.xlu0 %v1424, 48
  %v1554 = vpop.permute.xlu0 %1553
  %1555 = vrot.lane.b32.xlu0 %v1425, 48
  %v1556 = vpop.permute.xlu0 %1555
  %1557 = vrot.lane.b32.xlu0 %v1426, 48
  %v1558 = vpop.permute.xlu0 %1557
  %1559 = vrot.lane.b32.xlu0 %v1427, 48
  %v1560 = vpop.permute.xlu0 %1559
  %1561 = vrot.lane.b32.xlu0 %v1428, 48
  %v1562 = vpop.permute.xlu0 %1561
  %1563 = vrot.lane.b32.xlu0 %v1429, 48
  %v1564 = vpop.permute.xlu0 %1563
  %1565 = vrot.lane.b32.xlu0 %v1430, 48
  %v1566 = vpop.permute.xlu0 %1565
  %1567 = vrot.lane.b32.xlu0 %v1431, 48
  %v1568 = vpop.permute.xlu0 %1567
  %1569 = vrot.lane.b32.xlu0 %v1432, 48
  %v1570 = vpop.permute.xlu0 %1569
  %1571 = vrot.lane.b32.xlu0 %v1433, 48
  %v1572 = vpop.permute.xlu0 %1571
  %1573 = vrot.lane.b32.xlu0 %v1434, 48
  %v1574 = vpop.permute.xlu0 %1573
  %1575 = vrot.lane.b32.xlu0 %v1435, 48
  %v1576 = vpop.permute.xlu0 %1575
  %1577 = vrot.lane.b32.xlu0 %v1436, 48
  %v1578 = vpop.permute.xlu0 %1577
  %1579 = vrot.lane.b32.xlu0 %v1437, 48
  %v1580 = vpop.permute.xlu0 %1579
  %1581 = vrot.lane.b32.xlu0 %v1438, 48
  %v1582 = vpop.permute.xlu0 %1581
  %vm1631 = vcmask 523648
  %1632 = vst.msk [vmem:[#allocation3] sm:$0xff] %vm1631, %v1488
  %1633 = vst.msk [vmem:[#allocation3 + $0x8] sm:$0xff] %vm1631, %v1490
  %1634 = vst.msk [vmem:[#allocation3 + $0x10] sm:$0xff] %vm1631, %v1492
  %1635 = vst.msk [vmem:[#allocation3 + $0x18] sm:$0xff] %vm1631, %v1494
  %1636 = vst.msk [vmem:[#allocation3 + $0x20] sm:$0xff] %vm1631, %v1496
  %1637 = vst.msk [vmem:[#allocation3 + $0x28] sm:$0xff] %vm1631, %v1498
  %1638 = vst.msk [vmem:[#allocation3 + $0x30] sm:$0xff] %vm1631, %v1500
  %1639 = vst.msk [vmem:[#allocation3 + $0x38] sm:$0xff] %vm1631, %v1502
  %1640 = vst.msk [vmem:[#allocation3 + $0x40] sm:$0xff] %vm1631, %v1504
  %1641 = vst.msk [vmem:[#allocation3 + $0x48] sm:$0xff] %vm1631, %v1506
  %1642 = vst.msk [vmem:[#allocation3 + $0x50] sm:$0xff] %vm1631, %v1508
  %1643 = vst.msk [vmem:[#allocation3 + $0x58] sm:$0xff] %vm1631, %v1510
  %1644 = vst.msk [vmem:[#allocation3 + $0x60] sm:$0xff] %vm1631, %v1512
  %1645 = vst.msk [vmem:[#allocation3 + $0x68] sm:$0xff] %vm1631, %v1514
  %1646 = vst.msk [vmem:[#allocation3 + $0x70] sm:$0xff] %vm1631, %v1516
  %1647 = vst.msk [vmem:[#allocation3 + $0x78] sm:$0xff] %vm1631, %v1518
  %1648 = vst.msk [vmem:[#allocation3 + $0x80] sm:$0xff] %vm1631, %v1520
  %1649 = vst.msk [vmem:[#allocation3 + $0x88] sm:$0xff] %vm1631, %v1522
  %1650 = vst.msk [vmem:[#allocation3 + $0x90] sm:$0xff] %vm1631, %v1524
  %1651 = vst.msk [vmem:[#allocation3 + $0x98] sm:$0xff] %vm1631, %v1526
  %1652 = vst.msk [vmem:[#allocation3 + $0xa0] sm:$0xff] %vm1631, %v1528
  %1653 = vst.msk [vmem:[#allocation3 + $0xa8] sm:$0xff] %vm1631, %v1530
  %1654 = vst.msk [vmem:[#allocation3 + $0xb0] sm:$0xff] %vm1631, %v1532
  %1655 = vst.msk [vmem:[#allocation3 + $0xb8] sm:$0xff] %vm1631, %v1534
  %1656 = vst.msk [vmem:[#allocation3 + $0xc0] sm:$0xff] %vm1631, %v1536
  %1657 = vst.msk [vmem:[#allocation3 + $0xc8] sm:$0xff] %vm1631, %v1538
  %1658 = vst.msk [vmem:[#allocation3 + $0xd0] sm:$0xff] %vm1631, %v1540
  %1659 = vst.msk [vmem:[#allocation3 + $0xd8] sm:$0xff] %vm1631, %v1542
  %1660 = vst.msk [vmem:[#allocation3 + $0xe0] sm:$0xff] %vm1631, %v1544
  %1661 = vst.msk [vmem:[#allocation3 + $0xe8] sm:$0xff] %vm1631, %v1546
  %1662 = vst.msk [vmem:[#allocation3 + $0xf0] sm:$0xff] %vm1631, %v1548
  %1663 = vst.msk [vmem:[#allocation3 + $0xf8] sm:$0xff] %vm1631, %v1550
  %1664 = vst.msk [vmem:[#allocation3 + $0x100] sm:$0xff] %vm1631, %v1552
  %1665 = vst.msk [vmem:[#allocation3 + $0x108] sm:$0xff] %vm1631, %v1554
  %1666 = vst.msk [vmem:[#allocation3 + $0x110] sm:$0xff] %vm1631, %v1556
  %1667 = vst.msk [vmem:[#allocation3 + $0x118] sm:$0xff] %vm1631, %v1558
  %1668 = vst.msk [vmem:[#allocation3 + $0x120] sm:$0xff] %vm1631, %v1560
  %1669 = vst.msk [vmem:[#allocation3 + $0x128] sm:$0xff] %vm1631, %v1562
  %1670 = vst.msk [vmem:[#allocation3 + $0x130] sm:$0xff] %vm1631, %v1564
  %1671 = vst.msk [vmem:[#allocation3 + $0x138] sm:$0xff] %vm1631, %v1566
  %1672 = vst.msk [vmem:[#allocation3 + $0x140] sm:$0xff] %vm1631, %v1568
  %1673 = vst.msk [vmem:[#allocation3 + $0x148] sm:$0xff] %vm1631, %v1570
  %1674 = vst.msk [vmem:[#allocation3 + $0x150] sm:$0xff] %vm1631, %v1572
  %1675 = vst.msk [vmem:[#allocation3 + $0x158] sm:$0xff] %vm1631, %v1574
  %1676 = vst.msk [vmem:[#allocation3 + $0x160] sm:$0xff] %vm1631, %v1576
  %1677 = vst.msk [vmem:[#allocation3 + $0x168] sm:$0xff] %vm1631, %v1578
  %1678 = vst.msk [vmem:[#allocation3 + $0x170] sm:$0xff] %vm1631, %v1580
  %1679 = vst.msk [vmem:[#allocation3 + $0x178] sm:$0xff] %vm1631, %v1582
  %v1680 = vld [vmem:[#allocation3] sm:$0xff]
  %v1681 = vld [vmem:[#allocation3 + $0x8] sm:$0xff]
  %v1682 = vld [vmem:[#allocation3 + $0x10] sm:$0xff]
  %v1683 = vld [vmem:[#allocation3 + $0x18] sm:$0xff]
  %v1684 = vld [vmem:[#allocation3 + $0x20] sm:$0xff]
  %v1685 = vld [vmem:[#allocation3 + $0x28] sm:$0xff]
  %v1686 = vld [vmem:[#allocation3 + $0x30] sm:$0xff]
  %v1687 = vld [vmem:[#allocation3 + $0x38] sm:$0xff]
  %v1688 = vld [vmem:[#allocation3 + $0x40] sm:$0xff]
  %v1689 = vld [vmem:[#allocation3 + $0x48] sm:$0xff]
  %v1690 = vld [vmem:[#allocation3 + $0x50] sm:$0xff]
  %v1691 = vld [vmem:[#allocation3 + $0x58] sm:$0xff]
  %v1692 = vld [vmem:[#allocation3 + $0x60] sm:$0xff]
  %v1693 = vld [vmem:[#allocation3 + $0x68] sm:$0xff]
  %v1694 = vld [vmem:[#allocation3 + $0x70] sm:$0xff]
  %v1695 = vld [vmem:[#allocation3 + $0x78] sm:$0xff]
  %v1696 = vld [vmem:[#allocation3 + $0x80] sm:$0xff]
  %v1697 = vld [vmem:[#allocation3 + $0x88] sm:$0xff]
  %v1698 = vld [vmem:[#allocation3 + $0x90] sm:$0xff]
  %v1699 = vld [vmem:[#allocation3 + $0x98] sm:$0xff]
  %v1700 = vld [vmem:[#allocation3 + $0xa0] sm:$0xff]
  %v1701 = vld [vmem:[#allocation3 + $0xa8] sm:$0xff]
  %v1702 = vld [vmem:[#allocation3 + $0xb0] sm:$0xff]
  %v1703 = vld [vmem:[#allocation3 + $0xb8] sm:$0xff]
  %v1704 = vld [vmem:[#allocation3 + $0xc0] sm:$0xff]
  %v1705 = vld [vmem:[#allocation3 + $0xc8] sm:$0xff]
  %v1706 = vld [vmem:[#allocation3 + $0xd0] sm:$0xff]
  %v1707 = vld [vmem:[#allocation3 + $0xd8] sm:$0xff]
  %v1708 = vld [vmem:[#allocation3 + $0xe0] sm:$0xff]
  %v1709 = vld [vmem:[#allocation3 + $0xe8] sm:$0xff]
  %v1710 = vld [vmem:[#allocation3 + $0xf0] sm:$0xff]
  %v1711 = vld [vmem:[#allocation3 + $0xf8] sm:$0xff]
  %v1712 = vld [vmem:[#allocation3 + $0x100] sm:$0xff]
  %v1713 = vld [vmem:[#allocation3 + $0x108] sm:$0xff]
  %v1714 = vld [vmem:[#allocation3 + $0x110] sm:$0xff]
  %v1715 = vld [vmem:[#allocation3 + $0x118] sm:$0xff]
  %v1716 = vld [vmem:[#allocation3 + $0x120] sm:$0xff]
  %v1717 = vld [vmem:[#allocation3 + $0x128] sm:$0xff]
  %v1718 = vld [vmem:[#allocation3 + $0x130] sm:$0xff]
  %v1719 = vld [vmem:[#allocation3 + $0x138] sm:$0xff]
  %v1720 = vld [vmem:[#allocation3 + $0x140] sm:$0xff]
  %v1721 = vld [vmem:[#allocation3 + $0x148] sm:$0xff]
  %v1722 = vld [vmem:[#allocation3 + $0x150] sm:$0xff]
  %v1723 = vld [vmem:[#allocation3 + $0x158] sm:$0xff]
  %v1724 = vld [vmem:[#allocation3 + $0x160] sm:$0xff]
  %v1725 = vld [vmem:[#allocation3 + $0x168] sm:$0xff]
  %v1726 = vld [vmem:[#allocation3 + $0x170] sm:$0xff]
  %v1727 = vld [vmem:[#allocation3 + $0x178] sm:$0xff]
  %v1728 = vld [vmem:[%s3] sm:$0xff]
  %v1729 = vld [vmem:[%s3 + $0x8] sm:$0xff]
  %v1730 = vld [vmem:[%s3 + $0x10] sm:$0xff]
  %v1731 = vld [vmem:[%s3 + $0x18] sm:$0xff]
  %v1732 = vld [vmem:[%s3 + $0x20] sm:$0xff]
  %v1733 = vld [vmem:[%s3 + $0x28] sm:$0xff]
  %v1734 = vld [vmem:[%s3 + $0x30] sm:$0xff]
  %v1735 = vld [vmem:[%s3 + $0x38] sm:$0xff]
  %v1736 = vld [vmem:[%s4] sm:$0x1]
  %v1738 = vlaneseq
  %v1739 = vshrl.u32 %v1738, 7
  %v1740 = vsub.s32 0, %v1739
  %v1741 = vrot.slane %v1736, %v1740
  %vm1743 = vcmask 523264
  %v1745 = vsel %vm1743, %v1680, 0
  %v1748 = vsel %vm1743, %v1681, 0
  %v1751 = vsel %vm1743, %v1682, 0
  %v1754 = vsel %vm1743, %v1683, 0
  %v1757 = vsel %vm1743, %v1684, 0
  %v1760 = vsel %vm1743, %v1685, 0
  %v1763 = vsel %vm1743, %v1686, 0
  %v1766 = vsel %vm1743, %v1687, 0
  %v1769 = vsel %vm1743, %v1688, 0
  %v1772 = vsel %vm1743, %v1689, 0
  %v1775 = vsel %vm1743, %v1690, 0
  %v1778 = vsel %vm1743, %v1691, 0
  %v1781 = vsel %vm1743, %v1692, 0
  %v1784 = vsel %vm1743, %v1693, 0
  %v1787 = vsel %vm1743, %v1694, 0
  %v1790 = vsel %vm1743, %v1695, 0
  %v1793 = vsel %vm1743, %v1696, 0
  %v1796 = vsel %vm1743, %v1697, 0
  %v1799 = vsel %vm1743, %v1698, 0
  %v1802 = vsel %vm1743, %v1699, 0
  %v1805 = vsel %vm1743, %v1700, 0
  %v1808 = vsel %vm1743, %v1701, 0
  %v1811 = vsel %vm1743, %v1702, 0
  %v1814 = vsel %vm1743, %v1703, 0
  %v1817 = vsel %vm1743, %v1704, 0
  %v1820 = vsel %vm1743, %v1705, 0
  %v1823 = vsel %vm1743, %v1706, 0
  %v1826 = vsel %vm1743, %v1707, 0
  %v1829 = vsel %vm1743, %v1708, 0
  %v1832 = vsel %vm1743, %v1709, 0
  %v1835 = vsel %vm1743, %v1710, 0
  %v1838 = vsel %vm1743, %v1711, 0
  %v1841 = vsel %vm1743, %v1712, 0
  %v1844 = vsel %vm1743, %v1713, 0
  %v1847 = vsel %vm1743, %v1714, 0
  %v1850 = vsel %vm1743, %v1715, 0
  %v1853 = vsel %vm1743, %v1716, 0
  %v1856 = vsel %vm1743, %v1717, 0
  %v1859 = vsel %vm1743, %v1718, 0
  %v1862 = vsel %vm1743, %v1719, 0
  %v1865 = vsel %vm1743, %v1720, 0
  %v1868 = vsel %vm1743, %v1721, 0
  %v1871 = vsel %vm1743, %v1722, 0
  %v1874 = vsel %vm1743, %v1723, 0
  %v1877 = vsel %vm1743, %v1724, 0
  %v1880 = vsel %vm1743, %v1725, 0
  %v1883 = vsel %vm1743, %v1726, 0
  %v1886 = vsel %vm1743, %v1727, 0
  %1888 = vmatprep.subr.mxu0 0.0
  %1889 = vmatpush1.msra.mxu0 0.0
  %1890 = vmatprep.subr.mxu0 0.0
  %1891 = vmatpush1.msra.mxu0 0.0
  %1892 = vmatprep.subr.mxu0 0.0
  %1893 = vmatpush1.msra.mxu0 0.0
  %1894 = vmatprep.subr.mxu0 0.0
  %1895 = vmatpush1.msra.mxu0 0.0
  %1896 = vmatprep.subr.mxu0 0.0
  %1897 = vmatpush1.msra.mxu0 0.0
  %1898 = vmatprep.subr.mxu0 0.0
  %1899 = vmatpush1.msra.mxu0 0.0
  %1900 = vmatprep.subr.mxu0 0.0
  %1901 = vmatpush1.msra.mxu0 0.0
  %1902 = vmatprep.subr.mxu0 0.0
  %1903 = vmatpush1.msra.mxu0 0.0
  %1904 = vmatprep.subr.mxu0 0.0
  %1905 = vmatpush1.msra.mxu0 %v1735
  %1906 = vmatprep.subr.mxu0 0.0
  %1907 = vmatpush1.msra.mxu0 %v1734
  %1908 = vmatprep.subr.mxu0 0.0
  %1909 = vmatpush1.msra.mxu0 %v1733
  %1910 = vmatprep.subr.mxu0 0.0
  %1911 = vmatpush1.msra.mxu0 %v1732
  %1912 = vmatprep.subr.mxu0 0.0
  %1913 = vmatpush1.msra.mxu0 %v1731
  %1914 = vmatprep.subr.mxu0 0.0
  %1915 = vmatpush1.msra.mxu0 %v1730
  %1916 = vmatprep.subr.mxu0 0.0
  %1917 = vmatpush1.msra.mxu0 %v1729
  %1918 = vmatprep.subr.mxu0 0.0
  %1919 = vmatpush1.msra.mxu0 %v1728
  %1920 = vmatprep.subr.mxu0 0.0
  %1921 = vmatpush2.msra.mxu0 0.0
  %1922 = vmatprep.subr.mxu0 0.0
  %1923 = vmatpush2.msra.mxu0 0.0
  %1924 = vmatprep.subr.mxu0 0.0
  %1925 = vmatpush2.msra.mxu0 0.0
  %1926 = vmatprep.subr.mxu0 0.0
  %1927 = vmatpush2.msra.mxu0 0.0
  %1928 = vmatprep.subr.mxu0 0.0
  %1929 = vmatpush2.msra.mxu0 0.0
  %1930 = vmatprep.subr.mxu0 0.0
  %1931 = vmatpush2.msra.mxu0 0.0
  %1932 = vmatprep.subr.mxu0 0.0
  %1933 = vmatpush2.msra.mxu0 0.0
  %1934 = vmatprep.subr.mxu0 0.0
  %1935 = vmatpush2.msra.mxu0 0.0
  %1936 = vmatprep.subr.mxu0 0.0
  %1937 = vmatpush2.msra.mxu0 0.0
  %1938 = vmatprep.subr.mxu0 0.0
  %1939 = vmatpush2.msra.mxu0 0.0
  %1940 = vmatprep.subr.mxu0 0.0
  %1941 = vmatpush2.msra.mxu0 0.0
  %1942 = vmatprep.subr.mxu0 0.0
  %1943 = vmatpush2.msra.mxu0 0.0
  %1944 = vmatprep.subr.mxu0 0.0
  %1945 = vmatpush2.msra.mxu0 0.0
  %1946 = vmatprep.subr.mxu0 0.0
  %1947 = vmatpush2.msra.mxu0 0.0
  %1948 = vmatprep.subr.mxu0 0.0
  %1949 = vmatpush2.msra.mxu0 0.0
  %1950 = vmatprep.subr.mxu0 0.0
  %1951 = vmatpush2.msra.mxu0 0.0
  %1952 = vmatprep.mubr.f32.mxu0 0.0
  %1953 = vmatmul.mubr.f32.gmra.mxu0 %v1745
  %v1954 = vpop.f32.mrf.mxu0
  %v1955 = vadd.f32 %v1741, %v1954
  %v1956 = vpop.f32.mrf.mxu0
  %1957 = vmatprep.mubr.f32.mxu0 0.0
  %1958 = vmatmul.mubr.f32.gmra.mxu0 %v1748
  %v1959 = vpop.f32.mrf.mxu0
  %v1960 = vadd.f32 %v1741, %v1959
  %v1961 = vpop.f32.mrf.mxu0
  %1962 = vmatprep.mubr.f32.mxu0 0.0
  %1963 = vmatmul.mubr.f32.gmra.mxu0 %v1751
  %v1964 = vpop.f32.mrf.mxu0
  %v1965 = vadd.f32 %v1741, %v1964
  %v1966 = vpop.f32.mrf.mxu0
  %1967 = vmatprep.mubr.f32.mxu0 0.0
  %1968 = vmatmul.mubr.f32.gmra.mxu0 %v1754
  %v1969 = vpop.f32.mrf.mxu0
  %v1970 = vadd.f32 %v1741, %v1969
  %v1971 = vpop.f32.mrf.mxu0
  %1972 = vmatprep.mubr.f32.mxu0 0.0
  %1973 = vmatmul.mubr.f32.gmra.mxu0 %v1757
  %v1974 = vpop.f32.mrf.mxu0
  %v1975 = vadd.f32 %v1741, %v1974
  %v1976 = vpop.f32.mrf.mxu0
  %1977 = vmatprep.mubr.f32.mxu0 0.0
  %1978 = vmatmul.mubr.f32.gmra.mxu0 %v1760
  %v1979 = vpop.f32.mrf.mxu0
  %v1980 = vadd.f32 %v1741, %v1979
  %v1981 = vpop.f32.mrf.mxu0
  %1982 = vmatprep.mubr.f32.mxu0 0.0
  %1983 = vmatmul.mubr.f32.gmra.mxu0 %v1763
  %v1984 = vpop.f32.mrf.mxu0
  %v1985 = vadd.f32 %v1741, %v1984
  %v1986 = vpop.f32.mrf.mxu0
  %1987 = vmatprep.mubr.f32.mxu0 0.0
  %1988 = vmatmul.mubr.f32.gmra.mxu0 %v1766
  %v1989 = vpop.f32.mrf.mxu0
  %v1990 = vadd.f32 %v1741, %v1989
  %v1991 = vpop.f32.mrf.mxu0
  %1992 = vmatprep.mubr.f32.mxu0 0.0
  %1993 = vmatmul.mubr.f32.gmra.mxu0 %v1769
  %v1994 = vpop.f32.mrf.mxu0
  %v1995 = vadd.f32 %v1741, %v1994
  %v1996 = vpop.f32.mrf.mxu0
  %1997 = vmatprep.mubr.f32.mxu0 0.0
  %1998 = vmatmul.mubr.f32.gmra.mxu0 %v1772
  %v1999 = vpop.f32.mrf.mxu0
  %v2000 = vadd.f32 %v1741, %v1999
  %v2001 = vpop.f32.mrf.mxu0
  %2002 = vmatprep.mubr.f32.mxu0 0.0
  %2003 = vmatmul.mubr.f32.gmra.mxu0 %v1775
  %v2004 = vpop.f32.mrf.mxu0
  %v2005 = vadd.f32 %v1741, %v2004
  %v2006 = vpop.f32.mrf.mxu0
  %2007 = vmatprep.mubr.f32.mxu0 0.0
  %2008 = vmatmul.mubr.f32.gmra.mxu0 %v1778
  %v2009 = vpop.f32.mrf.mxu0
  %v2010 = vadd.f32 %v1741, %v2009
  %v2011 = vpop.f32.mrf.mxu0
  %2012 = vmatprep.mubr.f32.mxu0 0.0
  %2013 = vmatmul.mubr.f32.gmra.mxu0 %v1781
  %v2014 = vpop.f32.mrf.mxu0
  %v2015 = vadd.f32 %v1741, %v2014
  %v2016 = vpop.f32.mrf.mxu0
  %2017 = vmatprep.mubr.f32.mxu0 0.0
  %2018 = vmatmul.mubr.f32.gmra.mxu0 %v1784
  %v2019 = vpop.f32.mrf.mxu0
  %v2020 = vadd.f32 %v1741, %v2019
  %v2021 = vpop.f32.mrf.mxu0
  %2022 = vmatprep.mubr.f32.mxu0 0.0
  %2023 = vmatmul.mubr.f32.gmra.mxu0 %v1787
  %v2024 = vpop.f32.mrf.mxu0
  %v2025 = vadd.f32 %v1741, %v2024
  %v2026 = vpop.f32.mrf.mxu0
  %2027 = vmatprep.mubr.f32.mxu0 0.0
  %2028 = vmatmul.mubr.f32.gmra.mxu0 %v1790
  %v2029 = vpop.f32.mrf.mxu0
  %v2030 = vadd.f32 %v1741, %v2029
  %v2031 = vpop.f32.mrf.mxu0
  %2032 = vmatprep.mubr.f32.mxu0 0.0
  %2033 = vmatmul.mubr.f32.gmra.mxu0 %v1793
  %v2034 = vpop.f32.mrf.mxu0
  %v2035 = vadd.f32 %v1741, %v2034
  %v2036 = vpop.f32.mrf.mxu0
  %2037 = vmatprep.mubr.f32.mxu0 0.0
  %2038 = vmatmul.mubr.f32.gmra.mxu0 %v1796
  %v2039 = vpop.f32.mrf.mxu0
  %v2040 = vadd.f32 %v1741, %v2039
  %v2041 = vpop.f32.mrf.mxu0
  %2042 = vmatprep.mubr.f32.mxu0 0.0
  %2043 = vmatmul.mubr.f32.gmra.mxu0 %v1799
  %v2044 = vpop.f32.mrf.mxu0
  %v2045 = vadd.f32 %v1741, %v2044
  %v2046 = vpop.f32.mrf.mxu0
  %2047 = vmatprep.mubr.f32.mxu0 0.0
  %2048 = vmatmul.mubr.f32.gmra.mxu0 %v1802
  %v2049 = vpop.f32.mrf.mxu0
  %v2050 = vadd.f32 %v1741, %v2049
  %v2051 = vpop.f32.mrf.mxu0
  %2052 = vmatprep.mubr.f32.mxu0 0.0
  %2053 = vmatmul.mubr.f32.gmra.mxu0 %v1805
  %v2054 = vpop.f32.mrf.mxu0
  %v2055 = vadd.f32 %v1741, %v2054
  %v2056 = vpop.f32.mrf.mxu0
  %2057 = vmatprep.mubr.f32.mxu0 0.0
  %2058 = vmatmul.mubr.f32.gmra.mxu0 %v1808
  %v2059 = vpop.f32.mrf.mxu0
  %v2060 = vadd.f32 %v1741, %v2059
  %v2061 = vpop.f32.mrf.mxu0
  %2062 = vmatprep.mubr.f32.mxu0 0.0
  %2063 = vmatmul.mubr.f32.gmra.mxu0 %v1811
  %v2064 = vpop.f32.mrf.mxu0
  %v2065 = vadd.f32 %v1741, %v2064
  %v2066 = vpop.f32.mrf.mxu0
  %2067 = vmatprep.mubr.f32.mxu0 0.0
  %2068 = vmatmul.mubr.f32.gmra.mxu0 %v1814
  %v2069 = vpop.f32.mrf.mxu0
  %v2070 = vadd.f32 %v1741, %v2069
  %v2071 = vpop.f32.mrf.mxu0
  %2072 = vmatprep.mubr.f32.mxu0 0.0
  %2073 = vmatmul.mubr.f32.gmra.mxu0 %v1817
  %v2074 = vpop.f32.mrf.mxu0
  %v2075 = vadd.f32 %v1741, %v2074
  %v2076 = vpop.f32.mrf.mxu0
  %2077 = vmatprep.mubr.f32.mxu0 0.0
  %2078 = vmatmul.mubr.f32.gmra.mxu0 %v1820
  %v2079 = vpop.f32.mrf.mxu0
  %v2080 = vadd.f32 %v1741, %v2079
  %v2081 = vpop.f32.mrf.mxu0
  %2082 = vmatprep.mubr.f32.mxu0 0.0
  %2083 = vmatmul.mubr.f32.gmra.mxu0 %v1823
  %v2084 = vpop.f32.mrf.mxu0
  %v2085 = vadd.f32 %v1741, %v2084
  %v2086 = vpop.f32.mrf.mxu0
  %2087 = vmatprep.mubr.f32.mxu0 0.0
  %2088 = vmatmul.mubr.f32.gmra.mxu0 %v1826
  %v2089 = vpop.f32.mrf.mxu0
  %v2090 = vadd.f32 %v1741, %v2089
  %v2091 = vpop.f32.mrf.mxu0
  %2092 = vmatprep.mubr.f32.mxu0 0.0
  %2093 = vmatmul.mubr.f32.gmra.mxu0 %v1829
  %v2094 = vpop.f32.mrf.mxu0
  %v2095 = vadd.f32 %v1741, %v2094
  %v2096 = vpop.f32.mrf.mxu0
  %2097 = vmatprep.mubr.f32.mxu0 0.0
  %2098 = vmatmul.mubr.f32.gmra.mxu0 %v1832
  %v2099 = vpop.f32.mrf.mxu0
  %v2100 = vadd.f32 %v1741, %v2099
  %v2101 = vpop.f32.mrf.mxu0
  %2102 = vmatprep.mubr.f32.mxu0 0.0
  %2103 = vmatmul.mubr.f32.gmra.mxu0 %v1835
  %v2104 = vpop.f32.mrf.mxu0
  %v2105 = vadd.f32 %v1741, %v2104
  %v2106 = vpop.f32.mrf.mxu0
  %2107 = vmatprep.mubr.f32.mxu0 0.0
  %2108 = vmatmul.mubr.f32.gmra.mxu0 %v1838
  %v2109 = vpop.f32.mrf.mxu0
  %v2110 = vadd.f32 %v1741, %v2109
  %v2111 = vpop.f32.mrf.mxu0
  %2112 = vmatprep.mubr.f32.mxu0 0.0
  %2113 = vmatmul.mubr.f32.gmra.mxu0 %v1841
  %v2114 = vpop.f32.mrf.mxu0
  %v2115 = vadd.f32 %v1741, %v2114
  %v2116 = vpop.f32.mrf.mxu0
  %2117 = vmatprep.mubr.f32.mxu0 0.0
  %2118 = vmatmul.mubr.f32.gmra.mxu0 %v1844
  %v2119 = vpop.f32.mrf.mxu0
  %v2120 = vadd.f32 %v1741, %v2119
  %v2121 = vpop.f32.mrf.mxu0
  %2122 = vmatprep.mubr.f32.mxu0 0.0
  %2123 = vmatmul.mubr.f32.gmra.mxu0 %v1847
  %v2124 = vpop.f32.mrf.mxu0
  %v2125 = vadd.f32 %v1741, %v2124
  %v2126 = vpop.f32.mrf.mxu0
  %2127 = vmatprep.mubr.f32.mxu0 0.0
  %2128 = vmatmul.mubr.f32.gmra.mxu0 %v1850
  %v2129 = vpop.f32.mrf.mxu0
  %v2130 = vadd.f32 %v1741, %v2129
  %v2131 = vpop.f32.mrf.mxu0
  %2132 = vmatprep.mubr.f32.mxu0 0.0
  %2133 = vmatmul.mubr.f32.gmra.mxu0 %v1853
  %v2134 = vpop.f32.mrf.mxu0
  %v2135 = vadd.f32 %v1741, %v2134
  %v2136 = vpop.f32.mrf.mxu0
  %2137 = vmatprep.mubr.f32.mxu0 0.0
  %2138 = vmatmul.mubr.f32.gmra.mxu0 %v1856
  %v2139 = vpop.f32.mrf.mxu0
  %v2140 = vadd.f32 %v1741, %v2139
  %v2141 = vpop.f32.mrf.mxu0
  %2142 = vmatprep.mubr.f32.mxu0 0.0
  %2143 = vmatmul.mubr.f32.gmra.mxu0 %v1859
  %v2144 = vpop.f32.mrf.mxu0
  %v2145 = vadd.f32 %v1741, %v2144
  %v2146 = vpop.f32.mrf.mxu0
  %2147 = vmatprep.mubr.f32.mxu0 0.0
  %2148 = vmatmul.mubr.f32.gmra.mxu0 %v1862
  %v2149 = vpop.f32.mrf.mxu0
  %v2150 = vadd.f32 %v1741, %v2149
  %v2151 = vpop.f32.mrf.mxu0
  %2152 = vmatprep.mubr.f32.mxu0 0.0
  %2153 = vmatmul.mubr.f32.gmra.mxu0 %v1865
  %v2154 = vpop.f32.mrf.mxu0
  %v2155 = vadd.f32 %v1741, %v2154
  %v2156 = vpop.f32.mrf.mxu0
  %2157 = vmatprep.mubr.f32.mxu0 0.0
  %2158 = vmatmul.mubr.f32.gmra.mxu0 %v1868
  %v2159 = vpop.f32.mrf.mxu0
  %v2160 = vadd.f32 %v1741, %v2159
  %v2161 = vpop.f32.mrf.mxu0
  %2162 = vmatprep.mubr.f32.mxu0 0.0
  %2163 = vmatmul.mubr.f32.gmra.mxu0 %v1871
  %v2164 = vpop.f32.mrf.mxu0
  %v2165 = vadd.f32 %v1741, %v2164
  %v2166 = vpop.f32.mrf.mxu0
  %2167 = vmatprep.mubr.f32.mxu0 0.0
  %2168 = vmatmul.mubr.f32.gmra.mxu0 %v1874
  %v2169 = vpop.f32.mrf.mxu0
  %v2170 = vadd.f32 %v1741, %v2169
  %v2171 = vpop.f32.mrf.mxu0
  %2172 = vmatprep.mubr.f32.mxu0 0.0
  %2173 = vmatmul.mubr.f32.gmra.mxu0 %v1877
  %v2174 = vpop.f32.mrf.mxu0
  %v2175 = vadd.f32 %v1741, %v2174
  %v2176 = vpop.f32.mrf.mxu0
  %2177 = vmatprep.mubr.f32.mxu0 0.0
  %2178 = vmatmul.mubr.f32.gmra.mxu0 %v1880
  %v2179 = vpop.f32.mrf.mxu0
  %v2180 = vadd.f32 %v1741, %v2179
  %v2181 = vpop.f32.mrf.mxu0
  %2182 = vmatprep.mubr.f32.mxu0 0.0
  %2183 = vmatmul.mubr.f32.gmra.mxu0 %v1883
  %v2184 = vpop.f32.mrf.mxu0
  %v2185 = vadd.f32 %v1741, %v2184
  %v2186 = vpop.f32.mrf.mxu0
  %2187 = vmatprep.mubr.f32.mxu0 0.0
  %2188 = vmatmul.mubr.f32.gmra.mxu0 %v1886
  %v2189 = vpop.f32.mrf.mxu0
  %v2190 = vadd.f32 %v1741, %v2189
  %v2191 = vpop.f32.mrf.mxu0
  %2192 = vdwg.mxu0
  %v2193 = vmax.f32 %v1955, 0.0
  %v2194 = vmax.f32 %v1960, 0.0
  %v2195 = vmax.f32 %v1965, 0.0
  %v2196 = vmax.f32 %v1970, 0.0
  %v2197 = vmax.f32 %v1975, 0.0
  %v2198 = vmax.f32 %v1980, 0.0
  %v2199 = vmax.f32 %v1985, 0.0
  %v2200 = vmax.f32 %v1990, 0.0
  %v2201 = vmax.f32 %v1995, 0.0
  %v2202 = vmax.f32 %v2000, 0.0
  %v2203 = vmax.f32 %v2005, 0.0
  %v2204 = vmax.f32 %v2010, 0.0
  %v2205 = vmax.f32 %v2015, 0.0
  %v2206 = vmax.f32 %v2020, 0.0
  %v2207 = vmax.f32 %v2025, 0.0
  %v2208 = vmax.f32 %v2030, 0.0
  %v2209 = vmax.f32 %v2035, 0.0
  %v2210 = vmax.f32 %v2040, 0.0
  %v2211 = vmax.f32 %v2045, 0.0
  %v2212 = vmax.f32 %v2050, 0.0
  %v2213 = vmax.f32 %v2055, 0.0
  %v2214 = vmax.f32 %v2060, 0.0
  %v2215 = vmax.f32 %v2065, 0.0
  %v2216 = vmax.f32 %v2070, 0.0
  %v2217 = vmax.f32 %v2075, 0.0
  %v2218 = vmax.f32 %v2080, 0.0
  %v2219 = vmax.f32 %v2085, 0.0
  %v2220 = vmax.f32 %v2090, 0.0
  %v2221 = vmax.f32 %v2095, 0.0
  %v2222 = vmax.f32 %v2100, 0.0
  %v2223 = vmax.f32 %v2105, 0.0
  %v2224 = vmax.f32 %v2110, 0.0
  %v2225 = vmax.f32 %v2115, 0.0
  %v2226 = vmax.f32 %v2120, 0.0
  %v2227 = vmax.f32 %v2125, 0.0
  %v2228 = vmax.f32 %v2130, 0.0
  %v2229 = vmax.f32 %v2135, 0.0
  %v2230 = vmax.f32 %v2140, 0.0
  %v2231 = vmax.f32 %v2145, 0.0
  %v2232 = vmax.f32 %v2150, 0.0
  %v2233 = vmax.f32 %v2155, 0.0
  %v2234 = vmax.f32 %v2160, 0.0
  %v2235 = vmax.f32 %v2165, 0.0
  %v2236 = vmax.f32 %v2170, 0.0
  %v2237 = vmax.f32 %v2175, 0.0
  %v2238 = vmax.f32 %v2180, 0.0
  %v2239 = vmax.f32 %v2185, 0.0
  %v2240 = vmax.f32 %v2190, 0.0
  %vm2241 = vcmask 261120
  %2242 = vst.msk [vmem:[%s5] sm:$0xff] %vm2241, %v2193
  %2243 = vst.msk [vmem:[%s5 + $0x8] sm:$0xff] %vm2241, %v2194
  %2244 = vst.msk [vmem:[%s5 + $0x10] sm:$0xff] %vm2241, %v2195
  %2245 = vst.msk [vmem:[%s5 + $0x18] sm:$0xff] %vm2241, %v2196
  %2246 = vst.msk [vmem:[%s5 + $0x20] sm:$0xff] %vm2241, %v2197
  %2247 = vst.msk [vmem:[%s5 + $0x28] sm:$0xff] %vm2241, %v2198
  %2248 = vst.msk [vmem:[%s5 + $0x30] sm:$0xff] %vm2241, %v2199
  %2249 = vst.msk [vmem:[%s5 + $0x38] sm:$0xff] %vm2241, %v2200
  %2250 = vst.msk [vmem:[%s5 + $0x40] sm:$0xff] %vm2241, %v2201
  %2251 = vst.msk [vmem:[%s5 + $0x48] sm:$0xff] %vm2241, %v2202
  %2252 = vst.msk [vmem:[%s5 + $0x50] sm:$0xff] %vm2241, %v2203
  %2253 = vst.msk [vmem:[%s5 + $0x58] sm:$0xff] %vm2241, %v2204
  %2254 = vst.msk [vmem:[%s5 + $0x60] sm:$0xff] %vm2241, %v2205
  %2255 = vst.msk [vmem:[%s5 + $0x68] sm:$0xff] %vm2241, %v2206
  %2256 = vst.msk [vmem:[%s5 + $0x70] sm:$0xff] %vm2241, %v2207
  %2257 = vst.msk [vmem:[%s5 + $0x78] sm:$0xff] %vm2241, %v2208
  %2258 = vst.msk [vmem:[%s5 + $0x80] sm:$0xff] %vm2241, %v2209
  %2259 = vst.msk [vmem:[%s5 + $0x88] sm:$0xff] %vm2241, %v2210
  %2260 = vst.msk [vmem:[%s5 + $0x90] sm:$0xff] %vm2241, %v2211
  %2261 = vst.msk [vmem:[%s5 + $0x98] sm:$0xff] %vm2241, %v2212
  %2262 = vst.msk [vmem:[%s5 + $0xa0] sm:$0xff] %vm2241, %v2213
  %2263 = vst.msk [vmem:[%s5 + $0xa8] sm:$0xff] %vm2241, %v2214
  %2264 = vst.msk [vmem:[%s5 + $0xb0] sm:$0xff] %vm2241, %v2215
  %2265 = vst.msk [vmem:[%s5 + $0xb8] sm:$0xff] %vm2241, %v2216
  %2266 = vst.msk [vmem:[%s5 + $0xc0] sm:$0xff] %vm2241, %v2217
  %2267 = vst.msk [vmem:[%s5 + $0xc8] sm:$0xff] %vm2241, %v2218
  %2268 = vst.msk [vmem:[%s5 + $0xd0] sm:$0xff] %vm2241, %v2219
  %2269 = vst.msk [vmem:[%s5 + $0xd8] sm:$0xff] %vm2241, %v2220
  %2270 = vst.msk [vmem:[%s5 + $0xe0] sm:$0xff] %vm2241, %v2221
  %2271 = vst.msk [vmem:[%s5 + $0xe8] sm:$0xff] %vm2241, %v2222
  %2272 = vst.msk [vmem:[%s5 + $0xf0] sm:$0xff] %vm2241, %v2223
  %2273 = vst.msk [vmem:[%s5 + $0xf8] sm:$0xff] %vm2241, %v2224
  %2274 = vst.msk [vmem:[%s5 + $0x100] sm:$0xff] %vm2241, %v2225
  %2275 = vst.msk [vmem:[%s5 + $0x108] sm:$0xff] %vm2241, %v2226
  %2276 = vst.msk [vmem:[%s5 + $0x110] sm:$0xff] %vm2241, %v2227
  %2277 = vst.msk [vmem:[%s5 + $0x118] sm:$0xff] %vm2241, %v2228
  %2278 = vst.msk [vmem:[%s5 + $0x120] sm:$0xff] %vm2241, %v2229
  %2279 = vst.msk [vmem:[%s5 + $0x128] sm:$0xff] %vm2241, %v2230
  %2280 = vst.msk [vmem:[%s5 + $0x130] sm:$0xff] %vm2241, %v2231
  %2281 = vst.msk [vmem:[%s5 + $0x138] sm:$0xff] %vm2241, %v2232
  %2282 = vst.msk [vmem:[%s5 + $0x140] sm:$0xff] %vm2241, %v2233
  %2283 = vst.msk [vmem:[%s5 + $0x148] sm:$0xff] %vm2241, %v2234
  %2284 = vst.msk [vmem:[%s5 + $0x150] sm:$0xff] %vm2241, %v2235
  %2285 = vst.msk [vmem:[%s5 + $0x158] sm:$0xff] %vm2241, %v2236
  %2286 = vst.msk [vmem:[%s5 + $0x160] sm:$0xff] %vm2241, %v2237
  %2287 = vst.msk [vmem:[%s5 + $0x168] sm:$0xff] %vm2241, %v2238
  %2288 = vst.msk [vmem:[%s5 + $0x170] sm:$0xff] %vm2241, %v2239
  %2289 = vst.msk [vmem:[%s5 + $0x178] sm:$0xff] %vm2241, %v2240
  %2290 = vst.msk [vmem:[%s5 + $0x180] sm:$0xff] %vm2241, 0.0
  // Predicated region
  $region22: #{critic_net_forward.2} parent=0 // pred_check
    _
  $region23: #{critic_net_forward.2} parent=0 // pred_check_branch
    %2292 = sbr.rel (0) target = $region25
  $region24: #{critic_net_forward.2} parent=0 // pred_region
    _
  $region25: #{critic_net_forward.2} parent=0 // pred_fallthru
    _
  // Predicated region
  $region26: #{critic_net_forward.2} parent=0 // pred_check
    _
  $region27: #{critic_net_forward.2} parent=0 // pred_check_branch
    %2294 = sbr.rel (0) target = $region29
  $region28: #{critic_net_forward.2} parent=0 // pred_region
    _
  $region29: #{critic_net_forward.2} parent=0 // pred_fallthru
    _

</llo_original>
